<compile_context>
chip_gen: v5e
topology: v5e:2x2
jax: 0.10.0
libtpu: 0.0.40
codegen_flags: <defaults>
</compile_context>

<pallas_src>
import jax
import jax.numpy as jnp
from jax import lax
from jax.experimental import pallas as pl
from jax.experimental.pallas import tpu as pltpu


TEMPERATURE = 1.0
MASK_VALUE = -1e30          # finite "masked out" score (safer than -inf)
_VMEM_LIMIT = 64 * 1024 * 1024


def _cparams(*sem):
    return pltpu.CompilerParams(dimension_semantics=sem,
                                vmem_limit_bytes=_VMEM_LIMIT)


def _const_spec(shape, index_map):
    # Weight block: index map is constant -> single buffer (no double-buffer).
    return pl.BlockSpec(shape, index_map, pipeline_mode=pl.Buffered(1))


# ----------------------------------------------------------------------------
# Generic row-tiled linear kernel: y = x @ W + b  (bf16 operands, f32 accum).
# ----------------------------------------------------------------------------
def _linear_kernel(x_ref, w_ref, b_ref, y_ref):
    y_ref[...] = (jnp.dot(x_ref[...], w_ref[...],
                          preferred_element_type=jnp.float32)
                  + b_ref[...]).astype(y_ref.dtype)


def linear_rows(x, w_t, b_row, *, tile_rows=512, out_dtype=jnp.bfloat16):
    """x: (N, Din) bf16; w_t: (Din, Dout) bf16; b_row: (1, Dout) f32."""
    N, Din = x.shape
    Dout = w_t.shape[1]
    TN = N if N <= tile_rows else tile_rows
    return pl.pallas_call(
        _linear_kernel,
        out_shape=jax.ShapeDtypeStruct((N, Dout), out_dtype),
        grid=(pl.cdiv(N, TN),),
        in_specs=[pl.BlockSpec((TN, Din), lambda i: (i, 0)),
                  _const_spec((Din, Dout), lambda i: (0, 0)),
                  _const_spec((1, Dout), lambda i: (0, 0))],
        out_specs=pl.BlockSpec((TN, Dout), lambda i: (i, 0)),
        compiler_params=_cparams("parallel"),
    )(x, w_t, b_row)


# ----------------------------------------------------------------------------
# Fused multi-layer LSTM recurrence.  Layer-0 input projection (x @ W_ih + b)
# is precomputed outside; per step layer 0 runs only h @ W_hh and layers >= 1
# run one fused [x | h] @ [W_ih; W_hh] matmul.  (h, c) for all layers live in
# VMEM scratch; the time axis is a sequential ("arbitrary") grid axis, and an
# optional leading "parallel" batch-split axis lets v7x's 2 TCs share work.
# ----------------------------------------------------------------------------
def _lstm_cell(gates, c):
    # NOTE: at production H (multiple of 128) these lane slices are aligned;
    # at the tiny test H they cross lane boundaries (correct, just slower).
    H = c.shape[-1]
    i_g = jax.nn.sigmoid(gates[:, 0:H])
    f_g = jax.nn.sigmoid(gates[:, H:2 * H])
    g_g = jnp.tanh(gates[:, 2 * H:3 * H])
    o_g = jax.nn.sigmoid(gates[:, 3 * H:4 * H])
    c_new = f_g * c + i_g * g_g
    h_new = o_g * jnp.tanh(c_new)
    return h_new, c_new


def _make_lstm_stack_kernel(n_layers):
    n_in = 2 + 2 * (n_layers - 1)

    def kernel(*args):
        xg_ref = args[0]                  # (1, Bp, 4H) bf16 precomputed gates
        whh0_ref = args[1]                # (H, 4H) bf16
        rest = args[2:n_in]               # (w_cat, b) per extra layer
        y_ref = args[n_in]                # (1, Bp, H) output (last layer h)
        h_scr = args[n_in + 1]            # (L, Bp, H) f32
        c_scr = args[n_in + 2]            # (L, Bp, H) f32

        t = pl.program_id(1)

        @pl.when(t == 0)
        def _():
            h_scr[...] = jnp.zeros_like(h_scr)
            c_scr[...] = jnp.zeros_like(c_scr)

        # ---- layer 0: input projection already folded into xg ----
        h0 = h_scr[0]
        c0 = c_scr[0]
        gates0 = (xg_ref[0].astype(jnp.float32)
                  + jnp.dot(h0.astype(whh0_ref.dtype), whh0_ref[...],
                            preferred_element_type=jnp.float32))
        h_new, c_new = _lstm_cell(gates0, c0)
        h_scr[0] = h_new
        c_scr[0] = c_new
        x = h_new

        # ---- layers 1 .. L-1: one fused matmul per layer per step ----
        for l in range(1, n_layers):
            wcat_ref, b_ref = rest[2 * (l - 1):2 * l]
            h_l = h_scr[l]
            c_l = c_scr[l]
            xh = jnp.concatenate([x, h_l], axis=-1).astype(wcat_ref.dtype)
            gates = (jnp.dot(xh, wcat_ref[...],
                             preferred_element_type=jnp.float32) + b_ref[...])
            h_new, c_new = _lstm_cell(gates, c_l)
            h_scr[l] = h_new
            c_scr[l] = c_new
            x = h_new

        y_ref[0] = x.astype(y_ref.dtype)

    return kernel


def lstm_stack(xg0, whh0_t, extra_layers, *, batch_splits=1,
               out_dtype=jnp.bfloat16):
    """xg0: (T, B, 4H) bf16 precomputed layer-0 gate inputs (biases folded in).
    whh0_t: (H, 4H) bf16.  extra_layers: [(w_cat (2H,4H) bf16, b (1,4H) f32)].
    batch_splits > 1 gives a leading 'parallel' axis (megacore, v7x)."""
    T, B, G = xg0.shape
    H = G // 4
    n_layers = 1 + len(extra_layers)
    assert B % batch_splits == 0
    Bp = B // batch_splits

    extra_inputs, extra_specs = [], []
    for (w_cat, b_row) in extra_layers:
        extra_inputs += [w_cat, b_row]
        extra_specs += [_const_spec((2 * H, G), lambda p, t: (0, 0)),
                        _const_spec((1, G), lambda p, t: (0, 0))]

    return pl.pallas_call(
        _make_lstm_stack_kernel(n_layers),
        out_shape=jax.ShapeDtypeStruct((T, B, H), out_dtype),
        grid=(batch_splits, T),
        in_specs=[pl.BlockSpec((1, Bp, G), lambda p, t: (t, p, 0)),
                  _const_spec((H, G), lambda p, t: (0, 0))] + extra_specs,
        out_specs=pl.BlockSpec((1, Bp, H), lambda p, t: (t, p, 0)),
        scratch_shapes=[pltpu.VMEM((n_layers, Bp, H), jnp.float32),
                        pltpu.VMEM((n_layers, Bp, H), jnp.float32)],
        compiler_params=_cparams("parallel", "arbitrary"),  # time sequential
    )(xg0, whh0_t, *extra_inputs)


# ----------------------------------------------------------------------------
# Attention core: additive (tanh) attention + softmax + bmm.
# Q / K / V are pre-projected (hoisted); grid is (batch, query-tile).
# Keys are processed in static chunks so only one (TQ, KC, A) bf16 temporary
# is live at a time; the A-reduction runs on the MXU via an (A, 1) matvec.
# ----------------------------------------------------------------------------
def _make_attention_kernel(k_chunk):
    def kernel(q_ref, kv_ref, mask_ref, v_ref, ctx_ref, attn_ref):
        TQ, A = q_ref.shape[1], q_ref.shape[2]
        Tk = kv_ref.shape[1]

        q = q_ref[0]                     # (TQ, A)  bf16
        kv = kv_ref[0]                   # (Tk, 2A) bf16
        k = kv[:, :A]
        val = kv[:, A:]
        v_col = v_ref[...]               # (A, 1)   bf16

        kc = min(k_chunk, Tk)
        chunks = []
        for start in range(0, Tk, kc):       # static chunking (Tk is static)
            width = min(kc, Tk - start)
            k_c = k[start:start + width, :]
            # bf16 broadcast-add + tanh (fast on v6e/v7x, still correct on v5e)
            e = jnp.tanh(q[:, None, :] + k_c[None, :, :])      # (TQ, width, A)
            sc = jnp.dot(e.reshape(TQ * width, A), v_col,
                         preferred_element_type=jnp.float32)   # MXU A-reduce
            chunks.append(sc.reshape(TQ, width))
        scores = chunks[0] if len(chunks) == 1 else jnp.concatenate(chunks, -1)
        scores = scores * (1.0 / TEMPERATURE)

        # mask: (1, Tk), >0 => masked out (finite large negative, no NaNs).
        scores = jnp.where(mask_ref[0] > 0.0, MASK_VALUE, scores)

        m = jnp.max(scores, axis=-1, keepdims=True)
        p = jnp.exp(scores - m)
        attn = p * pl.reciprocal(jnp.sum(p, axis=-1, keepdims=True),
                                 approx=True)                   # (TQ, Tk) f32

        ctx = jnp.dot(attn.astype(jnp.bfloat16), val,
                      preferred_element_type=jnp.float32)       # (TQ, A)

        ctx_ref[0] = ctx.astype(ctx_ref.dtype)
        attn_ref[0] = attn

    return kernel


def attention_core(q_b, kv_b, mask, v_col, *, q_tile=32, k_chunk=128):
    """q_b: (B, Tq, A) bf16; kv_b: (B, Tk, 2A) bf16 ([K | V] packed);
    mask: (B, 1, Tk) f32 (>0 masked); v_col: (A, 1) bf16."""
    B, Tq, A = q_b.shape
    Tk = kv_b.shape[1]
    TQ = Tq if Tq <= q_tile else q_tile
    ctx, attn = pl.pallas_call(
        _make_attention_kernel(k_chunk),
        out_shape=(jax.ShapeDtypeStruct((B, Tq, A), jnp.bfloat16),
                   jax.ShapeDtypeStruct((B, Tq, Tk), jnp.float32)),
        grid=(B, pl.cdiv(Tq, TQ)),
        in_specs=[
            pl.BlockSpec((1, TQ, A), lambda b, qi: (b, qi, 0)),
            pl.BlockSpec((1, Tk, 2 * A), lambda b, qi: (b, 0, 0)),
            pl.BlockSpec((1, 1, Tk), lambda b, qi: (b, 0, 0)),
            _const_spec((A, 1), lambda b, qi: (0, 0)),
        ],
        out_specs=(pl.BlockSpec((1, TQ, A), lambda b, qi: (b, qi, 0)),
                   pl.BlockSpec((1, TQ, Tk), lambda b, qi: (b, qi, 0))),
        compiler_params=_cparams("parallel", "parallel"),
    )(q_b, kv_b, mask, v_col)
    return ctx, attn


# ----------------------------------------------------------------------------
# Decoder-input projection + fused gate head.
#   xg   = att_hidden @ W_ih0[:, :H] + ctx @ W_ih0[:, H:] + b0
#   gate = att_hidden @ Gw[:, :H]    + ctx @ Gw[:, H:]    + gb
# (identical to concatenating [att_hidden, ctx] first).
# ----------------------------------------------------------------------------
def _dec_proj_gate_kernel(h_ref, c_ref, wh_ref, wc_ref, b_ref,
                          gwh_ref, gwc_ref, gb_ref, xg_ref, gate_ref):
    h = h_ref[...]                                  # (TN, H) bf16
    c = c_ref[...]                                  # (TN, A) bf16
    xg = (jnp.dot(h, wh_ref[...], preferred_element_type=jnp.float32)
          + jnp.dot(c, wc_ref[...], preferred_element_type=jnp.float32)
          + b_ref[...])
    xg_ref[...] = xg.astype(xg_ref.dtype)
    # Single-column gate head: N=1 matmul / masked store, accepted minor cost.
    gate_ref[...] = (jnp.dot(h, gwh_ref[...], preferred_element_type=jnp.float32)
                     + jnp.dot(c, gwc_ref[...], preferred_element_type=jnp.float32)
                     + gb_ref[...])


def decoder_input_proj(h_flat, c_flat, wh_t, wc_t, b_row, gwh_t, gwc_t, gb_row,
                       *, tile_rows=512):
    N, H = h_flat.shape
    A = c_flat.shape[-1]
    G = wh_t.shape[1]
    TN = N if N <= tile_rows else tile_rows
    return pl.pallas_call(
        _dec_proj_gate_kernel,
        out_shape=(jax.ShapeDtypeStruct((N, G), jnp.bfloat16),
                   jax.ShapeDtypeStruct((N, 1), jnp.float32)),
        grid=(pl.cdiv(N, TN),),
        in_specs=[
            pl.BlockSpec((TN, H), lambda i: (i, 0)),
            pl.BlockSpec((TN, A), lambda i: (i, 0)),
            _const_spec((H, G), lambda i: (0, 0)),
            _const_spec((A, G), lambda i: (0, 0)),
            _const_spec((1, G), lambda i: (0, 0)),
            _const_spec((H, 1), lambda i: (0, 0)),
            _const_spec((A, 1), lambda i: (0, 0)),
            _const_spec((1, 1), lambda i: (0, 0)),
        ],
        out_specs=(pl.BlockSpec((TN, G), lambda i: (i, 0)),
                   pl.BlockSpec((TN, 1), lambda i: (i, 0))),
        compiler_params=_cparams("parallel"),
    )(h_flat, c_flat, wh_t, wc_t, b_row, gwh_t, gwc_t, gb_row)


# ----------------------------------------------------------------------------
# Dense(2x tanh-linear) + Conv1d(k=1) + affine coupling, row-tiled.
# Output packed as one slab [mel_out | log_s] -> wider, lane-denser store.
# ----------------------------------------------------------------------------
def _head_kernel(h_ref, mel_ref, w1_ref, b1_ref, w2_ref, b2_ref,
                 wc_ref, bc_ref, out_ref):
    n_mel = mel_ref.shape[-1]
    h = h_ref[...]                                   # (TN, H) bf16
    h1 = jnp.tanh(jnp.dot(h, w1_ref[...],
                          preferred_element_type=jnp.float32) + b1_ref[...])
    h2 = jnp.tanh(jnp.dot(h1.astype(w2_ref.dtype), w2_ref[...],
                          preferred_element_type=jnp.float32) + b2_ref[...])
    dec = jnp.dot(h2.astype(wc_ref.dtype), wc_ref[...],
                  preferred_element_type=jnp.float32) + bc_ref[...]
    log_s = dec[:, :n_mel]
    b = dec[:, n_mel:]
    mel_out = jnp.exp(log_s) * mel_ref[...] + b
    out_ref[...] = jnp.concatenate([mel_out, log_s], axis=-1)


def dense_conv_head(h_flat, mel_flat, w1_t, b1_r, w2_t, b2_r, wc_t, bc_r,
                    *, tile_rows=512):
    N, H = h_flat.shape
    n_mel = mel_flat.shape[-1]
    TN = N if N <= tile_rows else tile_rows
    return pl.pallas_call(
        _head_kernel,
        out_shape=jax.ShapeDtypeStruct((N, 2 * n_mel), jnp.float32),
        grid=(pl.cdiv(N, TN),),
        in_specs=[
            pl.BlockSpec((TN, H), lambda i: (i, 0)),
            pl.BlockSpec((TN, n_mel), lambda i: (i, 0)),
            _const_spec((H, H), lambda i: (0, 0)),
            _const_spec((1, H), lambda i: (0, 0)),
            _const_spec((H, H), lambda i: (0, 0)),
            _const_spec((1, H), lambda i: (0, 0)),
            _const_spec((H, 2 * n_mel), lambda i: (0, 0)),
            _const_spec((1, 2 * n_mel), lambda i: (0, 0)),
        ],
        out_specs=pl.BlockSpec((TN, 2 * n_mel), lambda i: (i, 0)),
        compiler_params=_cparams("parallel"),
    )(h_flat, mel_flat, w1_t, b1_r, w2_t, b2_r, wc_t, bc_r)


# ----------------------------------------------------------------------------
# Parameter initialization (PyTorch-shaped, deterministic) + one-time prep.
# ----------------------------------------------------------------------------
def init_params(key, n_mel, n_speaker_dim, n_text_channels, n_hidden,
                n_attn_channels, n_lstm_layers):
    D_text = n_text_channels + n_speaker_dim
    H, A = n_hidden, n_attn_channels
    keys = iter(jax.random.split(key, 64))

    def rnd(shape, scale=0.1):
        return scale * jax.random.normal(next(keys), shape, dtype=jnp.float32)

    params = {}
    # attention_lstm: LSTM(n_mel -> H), single layer
    params["att_lstm"] = (rnd((4 * H, n_mel)), rnd((4 * H, H)),
                          rnd((4 * H,)), rnd((4 * H,)))
    # Attention(n_hidden, n_speaker_dim, n_text_channels, n_attn_channels)
    params["attn"] = dict(wq=rnd((A, H)), wk=rnd((A, D_text)),
                          wv=rnd((A, D_text)), v=rnd((1, A)))
    # gate_layer: Linear(H + A -> 1)
    params["gate"] = (rnd((1, H + A)), rnd((1,)))
    # decoder LSTM: n_lstm_layers, layer 0 input H + A, rest H
    layers = []
    in_dim = H + A
    for _ in range(n_lstm_layers):
        layers.append((rnd((4 * H, in_dim)), rnd((4 * H, H)),
                       rnd((4 * H,)), rnd((4 * H,))))
        in_dim = H
    params["lstm"] = layers
    # DenseLayer(H, [H, H])
    params["dense"] = (rnd((H, H)), rnd((H,)), rnd((H, H)), rnd((H,)))
    # Conv1d(H, 2*n_mel, 1) with zeroed weight & bias (as in __init__)
    params["conv"] = (jnp.zeros((2 * n_mel, H), jnp.float32),
                      jnp.zeros((2 * n_mel,), jnp.float32))
    return params


def prepare_params(params):
    """One-time weight transpose / cast / fusion (hoisted out of the forward)."""
    prep = {}

    w_ih_a, w_hh_a, b_ih_a, b_hh_a = params["att_lstm"]
    H = w_hh_a.shape[1]
    prep["att_wih_t"] = jnp.transpose(w_ih_a).astype(jnp.bfloat16)   # (n_mel,4H)
    prep["att_b"] = (b_ih_a + b_hh_a).reshape(1, -1).astype(jnp.float32)
    prep["att_whh_t"] = jnp.transpose(w_hh_a).astype(jnp.bfloat16)   # (H, 4H)

    ap = params["attn"]
    A = ap["wq"].shape[0]
    prep["wq_t"] = jnp.transpose(ap["wq"]).astype(jnp.bfloat16)      # (H, A)
    prep["wkv_t"] = jnp.concatenate(
        [jnp.transpose(ap["wk"]), jnp.transpose(ap["wv"])],
        axis=1).astype(jnp.bfloat16)                                 # (D, 2A)
    prep["v_col"] = jnp.transpose(ap["v"]).astype(jnp.bfloat16)      # (A, 1)
    prep["zero_a"] = jnp.zeros((1, A), jnp.float32)
    prep["zero_2a"] = jnp.zeros((1, 2 * A), jnp.float32)

    # decoder LSTM layer 0 (its input projection is done in decoder_input_proj)
    w_ih0, w_hh0, b_ih0, b_hh0 = params["lstm"][0]
    prep["dec_wih_h_t"] = jnp.transpose(w_ih0[:, :H]).astype(jnp.bfloat16)
    prep["dec_wih_c_t"] = jnp.transpose(w_ih0[:, H:]).astype(jnp.bfloat16)
    prep["dec_b0"] = (b_ih0 + b_hh0).reshape(1, -1).astype(jnp.float32)
    prep["dec_whh0_t"] = jnp.transpose(w_hh0).astype(jnp.bfloat16)

    # layers >= 1: fuse [W_ih; W_hh] into one (2H, 4H) matrix (one matmul/step)
    extra = []
    for (w_ih, w_hh, b_ih, b_hh) in params["lstm"][1:]:
        w_cat = jnp.concatenate([jnp.transpose(w_ih), jnp.transpose(w_hh)],
                                axis=0).astype(jnp.bfloat16)
        extra.append((w_cat, (b_ih + b_hh).reshape(1, -1).astype(jnp.float32)))
    prep["dec_extra"] = extra

    gw, gb = params["gate"]
    prep["gate_wh_t"] = jnp.transpose(gw[:, :H]).astype(jnp.bfloat16)
    prep["gate_wc_t"] = jnp.transpose(gw[:, H:]).astype(jnp.bfloat16)
    prep["gate_b"] = gb.reshape(1, 1).astype(jnp.float32)

    w1, b1, w2, b2 = params["dense"]
    conv_w, conv_b = params["conv"]
    prep["w1_t"] = jnp.transpose(w1).astype(jnp.bfloat16)
    prep["b1"] = b1.reshape(1, -1).astype(jnp.float32)
    prep["w2_t"] = jnp.transpose(w2).astype(jnp.bfloat16)
    prep["b2"] = b2.reshape(1, -1).astype(jnp.float32)
    prep["wc_t"] = jnp.transpose(conv_w).astype(jnp.bfloat16)
    prep["bc"] = conv_b.reshape(1, -1).astype(jnp.float32)
    return prep


# ----------------------------------------------------------------------------
# Full AR_Step.forward (out_lens=None path), using prepared params.
# ----------------------------------------------------------------------------
def ar_step_forward(prep, mel, text, mask):
    T, B, n_mel = mel.shape
    Tk, _, D = text.shape
    H = prep["att_whh_t"].shape[0]
    A = prep["v_col"].shape[0]

    # mel0 = cat([zeros(1,B,n_mel), mel[:-1]], 0)
    mel0 = jnp.concatenate([jnp.zeros((1, B, n_mel), mel.dtype), mel[:-1]], 0)

    # ---- attention LSTM: hoisted input projection + recurrence ----
    xg_att = linear_rows(mel0.reshape(T * B, n_mel).astype(jnp.bfloat16),
                         prep["att_wih_t"], prep["att_b"])       # (T*B, 4H) bf16
    att_hidden = lstm_stack(xg_att.reshape(T, B, 4 * H),
                            prep["att_whh_t"], [])               # (T, B, H) bf16
    att_hidden_flat = att_hidden.reshape(T * B, H)

    # ---- attention: hoisted Q / packed K|V projections + core ----
    q_flat = linear_rows(att_hidden_flat, prep["wq_t"], prep["zero_a"])
    kv_flat = linear_rows(text.reshape(Tk * B, D).astype(jnp.bfloat16),
                          prep["wkv_t"], prep["zero_2a"])
    q_b = jnp.transpose(q_flat.reshape(T, B, A), (1, 0, 2))       # (B, T, A)
    kv_b = jnp.transpose(kv_flat.reshape(Tk, B, 2 * A), (1, 0, 2))  # (B, Tk, 2A)
    ctx_b, attn_w = attention_core(q_b, kv_b, mask, prep["v_col"])
    ctx_flat = jnp.transpose(ctx_b, (1, 0, 2)).reshape(T * B, A)  # bf16

    # ---- decoder-input projection (split W_ih, no concat) + fused gate ----
    xg_dec_flat, gates_flat = decoder_input_proj(
        att_hidden_flat, ctx_flat,
        prep["dec_wih_h_t"], prep["dec_wih_c_t"], prep["dec_b0"],
        prep["gate_wh_t"], prep["gate_wc_t"], prep["gate_b"])
    gates = gates_flat.reshape(T, B, 1)

    # ---- fused multi-layer decoder LSTM recurrence ----
    lstm_hidden = lstm_stack(xg_dec_flat.reshape(T, B, 4 * H),
                             prep["dec_whh0_t"], prep["dec_extra"])

    # ---- dense layers + conv1d(k=1) + affine coupling (packed output) ----
    packed = dense_conv_head(lstm_hidden.reshape(T * B, H),
                             mel.reshape(T * B, n_mel),
                             prep["w1_t"], prep["b1"], prep["w2_t"], prep["b2"],
                             prep["wc_t"], prep["bc"])            # (T*B, 2*n_mel)
    mel_out = packed[:, :n_mel].reshape(T, B, n_mel)
    log_s = packed[:, n_mel:].reshape(T, B, n_mel)
    return mel_out, log_s, gates, attn_w


# ----------------------------------------------------------------------------
# Pure-JAX f32 reference (mirrors the PyTorch forward) for validation.
# ----------------------------------------------------------------------------
def _lstm_ref(x, layers):
    T, B, _ = x.shape
    for (w_ih, w_hh, b_ih, b_hh) in layers:
        H = w_hh.shape[1]

        def step(carry, x_t):
            h, c = carry
            g = x_t @ w_ih.T + b_ih + h @ w_hh.T + b_hh
            i, f, gg, o = jnp.split(g, 4, axis=-1)
            c = jax.nn.sigmoid(f) * c + jax.nn.sigmoid(i) * jnp.tanh(gg)
            h = jax.nn.sigmoid(o) * jnp.tanh(c)
            return (h, c), h

        init = (jnp.zeros((B, H), jnp.float32), jnp.zeros((B, H), jnp.float32))
        _, x = lax.scan(step, init, x)
    return x


def ar_step_forward_ref(params, mel, text, mask):
    T, B, n_mel = mel.shape
    mel0 = jnp.concatenate([jnp.zeros((1, B, n_mel), mel.dtype), mel[:-1]], 0)
    att_hidden = _lstm_ref(mel0, [params["att_lstm"]])

    ap = params["attn"]
    q = jnp.einsum("tbh,ah->tba", att_hidden, ap["wq"])
    k = jnp.einsum("sbd,ad->sba", text, ap["wk"])
    v = jnp.einsum("sbd,ad->sba", text, ap["wv"])
    q_b, k_b, v_b = (jnp.transpose(t, (1, 0, 2)) for t in (q, k, v))
    e = jnp.tanh(q_b[:, :, None, :] + k_b[:, None, :, :])
    scores = jnp.einsum("btsa,a->bts", e, ap["v"][0]) / TEMPERATURE
    scores = jnp.where(mask > 0.0, MASK_VALUE, scores)
    attn = jax.nn.softmax(scores, axis=-1)
    ctx = jnp.transpose(jnp.einsum("bts,bsa->bta", attn, v_b), (1, 0, 2))

    dec_in = jnp.concatenate([att_hidden, ctx], axis=-1)
    gw, gb = params["gate"]
    gates = dec_in @ gw.T + gb
    lstm_hidden = _lstm_ref(dec_in, params["lstm"])

    w1, b1, w2, b2 = params["dense"]
    h1 = jnp.tanh(lstm_hidden @ w1.T + b1)
    h2 = jnp.tanh(h1 @ w2.T + b2)
    conv_w, conv_b = params["conv"]
    dec = h2 @ conv_w.T + conv_b
    log_s, b_ = dec[..., :n_mel], dec[..., n_mel:]
    mel_out = jnp.exp(log_s) * mel + b_
    return mel_out, log_s, gates, attn


if __name__ == "__main__":
    n_mel_channels = 8
    n_speaker_dim = 16
    n_text_channels = 48
    n_hidden = 32
    n_attn_channels = 16
    n_lstm_layers = 2
    T_mel, T_text, B = 8, 6, 2

    key = jax.random.PRNGKey(0)
    k_p, k_mel, k_text, k_conv = jax.random.split(key, 4)

    params = init_params(k_p, n_mel_channels, n_speaker_dim, n_text_channels,
                         n_hidden, n_attn_channels, n_lstm_layers)

    mel = jax.random.normal(k_mel, (T_mel, B, n_mel_channels), jnp.float32)
    text = jax.random.normal(
        k_text, (T_text, B, n_text_channels + n_speaker_dim), jnp.float32)
    # mask: (B, 1, T_text) float, >0 = masked out; here nothing is masked.
    mask = jnp.zeros((B, 1, T_text), jnp.float32)

    fwd = jax.jit(ar_step_forward)

    # --- 1) as-initialized module (conv zeroed): mel_out == mel, log_s == 0 --
    prep = prepare_params(params)
    mel_out, log_s, gates, attn_w = jax.block_until_ready(
        fwd(prep, mel, text, mask))
    assert mel_out.shape == (T_mel, B, n_mel_channels)
    assert log_s.shape == (T_mel, B, n_mel_channels)
    assert gates.shape == (T_mel, B, 1)
    assert attn_w.shape == (B, T_mel, T_text)
    assert jnp.allclose(mel_out, mel, atol=1e-5)
    assert jnp.allclose(log_s, 0.0, atol=1e-6)
    assert jnp.allclose(jnp.sum(attn_w, axis=-1), 1.0, atol=2e-2)

    # --- 2) non-degenerate head: random conv weights vs f32 reference -------
    params2 = dict(params)
    params2["conv"] = (
        0.05 * jax.random.normal(k_conv, (2 * n_mel_channels, n_hidden),
                                 jnp.float32),
        0.05 * jax.random.normal(jax.random.fold_in(k_conv, 1),
                                 (2 * n_mel_channels,), jnp.float32))
    prep2 = prepare_params(params2)
    out_k = jax.block_until_ready(fwd(prep2, mel, text, mask))
    out_r = jax.block_until_ready(ar_step_forward_ref(params2, mel, text, mask))
    for name, a, b in zip(("mel_out", "log_s", "gates", "attn"), out_k, out_r):
        err = float(jnp.max(jnp.abs(a.astype(jnp.float32) - b)))
        assert err < 5e-2, f"{name} max abs err {err}"

    print("KERNEL_OK")
</pallas_src>

<mosaic_0001>
module attributes {stable_mosaic.version = 11 : i64} {
  func.func @_linear_kernel(%arg0: i32, %arg1: memref<16x8xbf16, #tpu.memory_space<vmem>>, %arg2: memref<8x128xbf16, #tpu.memory_space<vmem>>, %arg3: memref<1x128xf32, #tpu.memory_space<vmem>>, %arg4: memref<16x128xbf16, #tpu.memory_space<vmem>>) attributes {dimension_semantics = [#tpu.dimension_semantics<parallel>], iteration_bounds = array<i64: 1>, scalar_prefetch = 0 : i64, scratch_operands = 0 : i64, tpu.core_type = #tpu.core_type<tc>, window_params = [{transform_indices = @transform_0, window_bounds = array<i64: 16, 8>}, {pipeline_mode = #tpu.pipeline_mode<synchronous>, transform_indices = @transform_1, window_bounds = array<i64: 8, 128>}, {pipeline_mode = #tpu.pipeline_mode<synchronous>, transform_indices = @transform_2, window_bounds = array<i64: 1, 128>}, {transform_indices = @transform_3, window_bounds = array<i64: 16, 128>}]} {
    %c0 = arith.constant 0 : index
    %c0_0 = arith.constant 0 : index
    %0 = vector.load %arg1[%c0, %c0_0] : memref<16x8xbf16, #tpu.memory_space<vmem>>, vector<16x8xbf16>
    %c0_1 = arith.constant 0 : index
    %c0_2 = arith.constant 0 : index
    %1 = vector.load %arg2[%c0_1, %c0_2] : memref<8x128xbf16, #tpu.memory_space<vmem>>, vector<8x128xbf16>
    %cst = arith.constant dense<0.000000e+00> : vector<16x128xf32>
    %2 = tpu.matmul %0, %1, %cst {dimension_numbers = #tpu.dot_dimension_numbers<[1], [0], [0], [1], [0, 0, 1, 1], [], []>} : vector<16x8xbf16>, vector<8x128xbf16>, vector<16x128xf32> -> vector<16x128xf32>
    %c0_3 = arith.constant 0 : index
    %c0_4 = arith.constant 0 : index
    %3 = vector.load %arg3[%c0_3, %c0_4] : memref<1x128xf32, #tpu.memory_space<vmem>>, vector<1x128xf32>
    %4 = vector.broadcast %3 : vector<1x128xf32> to vector<16x128xf32>
    %5 = arith.addf %2, %4 : vector<16x128xf32>
    %6 = arith.truncf %5 : vector<16x128xf32> to vector<16x128xbf16>
    %c0_5 = arith.constant 0 : index
    %c0_6 = arith.constant 0 : index
    %7 = vector.load %arg4[%c0_5, %c0_6] : memref<16x128xbf16, #tpu.memory_space<vmem>>, vector<16x128xbf16>
    tpu.vector_store %arg4[%c0_5, %c0_6], %6 {strides = array<i32>} : memref<16x128xbf16, #tpu.memory_space<vmem>>, vector<16x128xbf16>,
    return
  }
  func.func @transform_0(%arg0: i32) -> (i32, i32) {
    %c0_i32 = arith.constant 0 : i32
    %c0_i32_0 = arith.constant 0 : i32
    return %arg0, %c0_i32 : i32, i32
  }
  func.func @transform_1(%arg0: i32) -> (i32, i32) {
    %c0_i32 = arith.constant 0 : i32
    %c0_i32_0 = arith.constant 0 : i32
    %c0_i32_1 = arith.constant 0 : i32
    return %c0_i32, %c0_i32_0 : i32, i32
  }
  func.func @transform_2(%arg0: i32) -> (i32, i32) {
    %c0_i32 = arith.constant 0 : i32
    %c0_i32_0 = arith.constant 0 : i32
    %c0_i32_1 = arith.constant 0 : i32
    return %c0_i32, %c0_i32_0 : i32, i32
  }
  func.func @transform_3(%arg0: i32) -> (i32, i32) {
    %c0_i32 = arith.constant 0 : i32
    %c0_i32_0 = arith.constant 0 : i32
    return %arg0, %c0_i32 : i32, i32
  }
}

module attributes {stable_mosaic.version = 11 : i64} {
  func.func @kernel(%arg0: i32, %arg1: i32, %arg2: memref<1x2x128xbf16, #tpu.memory_space<vmem>>, %arg3: memref<32x128xbf16, #tpu.memory_space<vmem>>, %arg4: memref<1x2x32xbf16, #tpu.memory_space<vmem>>, %arg5: memref<1x2x32xf32, #tpu.memory_space<vmem>>, %arg6: memref<1x2x32xf32, #tpu.memory_space<vmem>>) attributes {dimension_semantics = [#tpu.dimension_semantics<parallel>, #tpu.dimension_semantics<arbitrary>], iteration_bounds = array<i64: 1, 8>, scalar_prefetch = 0 : i64, scratch_operands = 2 : i64, tpu.core_type = #tpu.core_type<tc>, window_params = [{transform_indices = @transform_0, window_bounds = array<i64: 1, 2, 128>}, {pipeline_mode = #tpu.pipeline_mode<synchronous>, transform_indices = @transform_1, window_bounds = array<i64: 32, 128>}, {transform_indices = @transform_2, window_bounds = array<i64: 1, 2, 32>}]} {
    %c0_i32 = arith.constant 0 : i32
    %0 = arith.cmpi eq, %arg1, %c0_i32 : i32
    %1 = arith.extui %0 : i1 to i32
    %c0_i32_0 = arith.constant 0 : i32
    %2 = arith.cmpi ne, %1, %c0_i32_0 : i32
    scf.if %2 {
      %cst_23 = arith.constant 0.000000e+00 : f32
      %49 = vector.broadcast %cst_23 : f32 to vector<1x2x32xf32>
      %c0_24 = arith.constant 0 : index
      %c0_25 = arith.constant 0 : index
      %c0_26 = arith.constant 0 : index
      %50 = vector.load %arg5[%c0_24, %c0_25, %c0_26] : memref<1x2x32xf32, #tpu.memory_space<vmem>>, vector<1x2x32xf32>
      tpu.vector_store %arg5[%c0_24, %c0_25, %c0_26], %49 {strides = array<i32>} : memref<1x2x32xf32, #tpu.memory_space<vmem>>, vector<1x2x32xf32>,
      %cst_27 = arith.constant 0.000000e+00 : f32
      %51 = vector.broadcast %cst_27 : f32 to vector<1x2x32xf32>
      %c0_28 = arith.constant 0 : index
      %c0_29 = arith.constant 0 : index
      %c0_30 = arith.constant 0 : index
      %52 = vector.load %arg6[%c0_28, %c0_29, %c0_30] : memref<1x2x32xf32, #tpu.memory_space<vmem>>, vector<1x2x32xf32>
      tpu.vector_store %arg6[%c0_28, %c0_29, %c0_30], %51 {strides = array<i32>} : memref<1x2x32xf32, #tpu.memory_space<vmem>>, vector<1x2x32xf32>,
    } else {
    }
    %c0 = arith.constant 0 : index
    %c0_1 = arith.constant 0 : index
    %c0_2 = arith.constant 0 : index
    %3 = vector.load %arg5[%c0, %c0_1, %c0_2] : memref<1x2x32xf32, #tpu.memory_space<vmem>>, vector<1x2x32xf32>
    %4 = vector.shape_cast %3 : vector<1x2x32xf32> to vector<2x32xf32>
    %c0_3 = arith.constant 0 : index
    %c0_4 = arith.constant 0 : index
    %c0_5 = arith.constant 0 : index
    %5 = vector.load %arg6[%c0_3, %c0_4, %c0_5] : memref<1x2x32xf32, #tpu.memory_space<vmem>>, vector<1x2x32xf32>
    %6 = vector.shape_cast %5 : vector<1x2x32xf32> to vector<2x32xf32>
    %c0_6 = arith.constant 0 : index
    %c0_7 = arith.constant 0 : index
    %c0_8 = arith.constant 0 : index
    %7 = vector.load %arg2[%c0_6, %c0_7, %c0_8] : memref<1x2x128xbf16, #tpu.memory_space<vmem>>, vector<1x2x128xbf16>
    %8 = vector.shape_cast %7 : vector<1x2x128xbf16> to vector<2x128xbf16>
    %9 = arith.extf %8 : vector<2x128xbf16> to vector<2x128xf32>
    %10 = arith.truncf %4 : vector<2x32xf32> to vector<2x32xbf16>
    %c0_9 = arith.constant 0 : index
    %c0_10 = arith.constant 0 : index
    %11 = vector.load %arg3[%c0_9, %c0_10] : memref<32x128xbf16, #tpu.memory_space<vmem>>, vector<32x128xbf16>
    %cst = arith.constant dense<0.000000e+00> : vector<2x128xf32>
    %12 = tpu.matmul %10, %11, %cst {dimension_numbers = #tpu.dot_dimension_numbers<[1], [0], [0], [1], [0, 0, 1, 1], [], []>} : vector<2x32xbf16>, vector<32x128xbf16>, vector<2x128xf32> -> vector<2x128xf32>
    %13 = arith.addf %9, %12 : vector<2x128xf32>
    %14 = vector.extract_strided_slice %13 {offsets = [0, 0], sizes = [2, 32], strides = [1, 1]} : vector<2x128xf32> to vector<2x32xf32>
    %15 = arith.negf %14 : vector<2x32xf32>
    %16 = math.exp %15 : vector<2x32xf32>
    %cst_11 = arith.constant 1.000000e+00 : f32
    %17 = vector.broadcast %cst_11 : f32 to vector<2x32xf32>
    %18 = arith.addf %17, %16 : vector<2x32xf32>
    %19 = arith.divf %17, %18 : vector<2x32xf32>
    %20 = vector.extract_strided_slice %13 {offsets = [0, 32], sizes = [2, 32], strides = [1, 1]} : vector<2x128xf32> to vector<2x32xf32>
    %21 = arith.negf %20 : vector<2x32xf32>
    %22 = math.exp %21 : vector<2x32xf32>
    %cst_12 = arith.constant 1.000000e+00 : f32
    %23 = vector.broadcast %cst_12 : f32 to vector<2x32xf32>
    %24 = arith.addf %23, %22 : vector<2x32xf32>
    %25 = arith.divf %23, %24 : vector<2x32xf32>
    %26 = vector.extract_strided_slice %13 {offsets = [0, 64], sizes = [2, 32], strides = [1, 1]} : vector<2x128xf32> to vector<2x32xf32>
    %27 = math.tanh %26 : vector<2x32xf32>
    %28 = vector.extract_strided_slice %13 {offsets = [0, 96], sizes = [2, 32], strides = [1, 1]} : vector<2x128xf32> to vector<2x32xf32>
    %29 = arith.negf %28 : vector<2x32xf32>
    %30 = math.exp %29 : vector<2x32xf32>
    %cst_13 = arith.constant 1.000000e+00 : f32
    %31 = vector.broadcast %cst_13 : f32 to vector<2x32xf32>
    %32 = arith.addf %31, %30 : vector<2x32xf32>
    %33 = arith.divf %31, %32 : vector<2x32xf32>
    %34 = arith.mulf %25, %6 : vector<2x32xf32>
    %35 = arith.mulf %19, %27 : vector<2x32xf32>
    %36 = arith.addf %34, %35 : vector<2x32xf32>
    %37 = math.tanh %36 : vector<2x32xf32>
    %38 = arith.mulf %33, %37 : vector<2x32xf32>
    %c0_14 = arith.constant 0 : index
    %c0_15 = arith.constant 0 : index
    %c0_16 = arith.constant 0 : index
    %39 = vector.load %arg5[%c0_14, %c0_15, %c0_16] : memref<1x2x32xf32, #tpu.memory_space<vmem>>, vector<1x2x32xf32>
    %40 = vector.shape_cast %39 : vector<1x2x32xf32> to vector<2x32xf32>
    %41 = vector.shape_cast %38 : vector<2x32xf32> to vector<1x2x32xf32>
    tpu.vector_store %arg5[%c0_14, %c0_15, %c0_16], %41 {strides = array<i32>} : memref<1x2x32xf32, #tpu.memory_space<vmem>>, vector<1x2x32xf32>,
    %c0_17 = arith.constant 0 : index
    %c0_18 = arith.constant 0 : index
    %c0_19 = arith.constant 0 : index
    %42 = vector.load %arg6[%c0_17, %c0_18, %c0_19] : memref<1x2x32xf32, #tpu.memory_space<vmem>>, vector<1x2x32xf32>
    %43 = vector.shape_cast %42 : vector<1x2x32xf32> to vector<2x32xf32>
    %44 = vector.shape_cast %36 : vector<2x32xf32> to vector<1x2x32xf32>
    tpu.vector_store %arg6[%c0_17, %c0_18, %c0_19], %44 {strides = array<i32>} : memref<1x2x32xf32, #tpu.memory_space<vmem>>, vector<1x2x32xf32>,
    %45 = arith.truncf %38 : vector<2x32xf32> to vector<2x32xbf16>
    %c0_20 = arith.constant 0 : index
    %c0_21 = arith.constant 0 : index
    %c0_22 = arith.constant 0 : index
    %46 = vector.load %arg4[%c0_20, %c0_21, %c0_22] : memref<1x2x32xbf16, #tpu.memory_space<vmem>>, vector<1x2x32xbf16>
    %47 = vector.shape_cast %46 : vector<1x2x32xbf16> to vector<2x32xbf16>
    %48 = vector.shape_cast %45 : vector<2x32xbf16> to vector<1x2x32xbf16>
    tpu.vector_store %arg4[%c0_20, %c0_21, %c0_22], %48 {strides = array<i32>} : memref<1x2x32xbf16, #tpu.memory_space<vmem>>, vector<1x2x32xbf16>,
    return
  }
  func.func @transform_0(%arg0: i32, %arg1: i32) -> (i32, i32, i32) {
    %c0_i32 = arith.constant 0 : i32
    %c0_i32_0 = arith.constant 0 : i32
    return %arg1, %arg0, %c0_i32 : i32, i32, i32
  }
  func.func @transform_1(%arg0: i32, %arg1: i32) -> (i32, i32) {
    %c0_i32 = arith.constant 0 : i32
    %c0_i32_0 = arith.constant 0 : i32
    %c0_i32_1 = arith.constant 0 : i32
    return %c0_i32, %c0_i32_0 : i32, i32
  }
  func.func @transform_2(%arg0: i32, %arg1: i32) -> (i32, i32, i32) {
    %c0_i32 = arith.constant 0 : i32
    %c0_i32_0 = arith.constant 0 : i32
    return %arg1, %arg0, %c0_i32 : i32, i32, i32
  }
}

module attributes {stable_mosaic.version = 11 : i64} {
  func.func @_linear_kernel(%arg0: i32, %arg1: memref<16x32xbf16, #tpu.memory_space<vmem>>, %arg2: memref<32x16xbf16, #tpu.memory_space<vmem>>, %arg3: memref<1x16xf32, #tpu.memory_space<vmem>>, %arg4: memref<16x16xbf16, #tpu.memory_space<vmem>>) attributes {dimension_semantics = [#tpu.dimension_semantics<parallel>], iteration_bounds = array<i64: 1>, scalar_prefetch = 0 : i64, scratch_operands = 0 : i64, tpu.core_type = #tpu.core_type<tc>, window_params = [{transform_indices = @transform_0, window_bounds = array<i64: 16, 32>}, {pipeline_mode = #tpu.pipeline_mode<synchronous>, transform_indices = @transform_1, window_bounds = array<i64: 32, 16>}, {pipeline_mode = #tpu.pipeline_mode<synchronous>, transform_indices = @transform_2, window_bounds = array<i64: 1, 16>}, {transform_indices = @transform_3, window_bounds = array<i64: 16, 16>}]} {
    %c0 = arith.constant 0 : index
    %c0_0 = arith.constant 0 : index
    %0 = vector.load %arg1[%c0, %c0_0] : memref<16x32xbf16, #tpu.memory_space<vmem>>, vector<16x32xbf16>
    %c0_1 = arith.constant 0 : index
    %c0_2 = arith.constant 0 : index
    %1 = vector.load %arg2[%c0_1, %c0_2] : memref<32x16xbf16, #tpu.memory_space<vmem>>, vector<32x16xbf16>
    %cst = arith.constant dense<0.000000e+00> : vector<16x16xf32>
    %2 = tpu.matmul %0, %1, %cst {dimension_numbers = #tpu.dot_dimension_numbers<[1], [0], [0], [1], [0, 0, 1, 1], [], []>} : vector<16x32xbf16>, vector<32x16xbf16>, vector<16x16xf32> -> vector<16x16xf32>
    %c0_3 = arith.constant 0 : index
    %c0_4 = arith.constant 0 : index
    %3 = vector.load %arg3[%c0_3, %c0_4] : memref<1x16xf32, #tpu.memory_space<vmem>>, vector<1x16xf32>
    %4 = vector.broadcast %3 : vector<1x16xf32> to vector<16x16xf32>
    %5 = arith.addf %2, %4 : vector<16x16xf32>
    %6 = arith.truncf %5 : vector<16x16xf32> to vector<16x16xbf16>
    %c0_5 = arith.constant 0 : index
    %c0_6 = arith.constant 0 : index
    %7 = vector.load %arg4[%c0_5, %c0_6] : memref<16x16xbf16, #tpu.memory_space<vmem>>, vector<16x16xbf16>
    tpu.vector_store %arg4[%c0_5, %c0_6], %6 {strides = array<i32>} : memref<16x16xbf16, #tpu.memory_space<vmem>>, vector<16x16xbf16>,
    return
  }
  func.func @transform_0(%arg0: i32) -> (i32, i32) {
    %c0_i32 = arith.constant 0 : i32
    %c0_i32_0 = arith.constant 0 : i32
    return %arg0, %c0_i32 : i32, i32
  }
  func.func @transform_1(%arg0: i32) -> (i32, i32) {
    %c0_i32 = arith.constant 0 : i32
    %c0_i32_0 = arith.constant 0 : i32
    %c0_i32_1 = arith.constant 0 : i32
    return %c0_i32, %c0_i32_0 : i32, i32
  }
  func.func @transform_2(%arg0: i32) -> (i32, i32) {
    %c0_i32 = arith.constant 0 : i32
    %c0_i32_0 = arith.constant 0 : i32
    %c0_i32_1 = arith.constant 0 : i32
    return %c0_i32, %c0_i32_0 : i32, i32
  }
  func.func @transform_3(%arg0: i32) -> (i32, i32) {
    %c0_i32 = arith.constant 0 : i32
    %c0_i32_0 = arith.constant 0 : i32
    return %arg0, %c0_i32 : i32, i32
  }
}

module attributes {stable_mosaic.version = 11 : i64} {
  func.func @_linear_kernel(%arg0: i32, %arg1: memref<12x64xbf16, #tpu.memory_space<vmem>>, %arg2: memref<64x32xbf16, #tpu.memory_space<vmem>>, %arg3: memref<1x32xf32, #tpu.memory_space<vmem>>, %arg4: memref<12x32xbf16, #tpu.memory_space<vmem>>) attributes {dimension_semantics = [#tpu.dimension_semantics<parallel>], iteration_bounds = array<i64: 1>, scalar_prefetch = 0 : i64, scratch_operands = 0 : i64, tpu.core_type = #tpu.core_type<tc>, window_params = [{transform_indices = @transform_0, window_bounds = array<i64: 12, 64>}, {pipeline_mode = #tpu.pipeline_mode<synchronous>, transform_indices = @transform_1, window_bounds = array<i64: 64, 32>}, {pipeline_mode = #tpu.pipeline_mode<synchronous>, transform_indices = @transform_2, window_bounds = array<i64: 1, 32>}, {transform_indices = @transform_3, window_bounds = array<i64: 12, 32>}]} {
    %c0 = arith.constant 0 : index
    %c0_0 = arith.constant 0 : index
    %0 = vector.load %arg1[%c0, %c0_0] : memref<12x64xbf16, #tpu.memory_space<vmem>>, vector<12x64xbf16>
    %c0_1 = arith.constant 0 : index
    %c0_2 = arith.constant 0 : index
    %1 = vector.load %arg2[%c0_1, %c0_2] : memref<64x32xbf16, #tpu.memory_space<vmem>>, vector<64x32xbf16>
    %cst = arith.constant dense<0.000000e+00> : vector<12x32xf32>
    %2 = tpu.matmul %0, %1, %cst {dimension_numbers = #tpu.dot_dimension_numbers<[1], [0], [0], [1], [0, 0, 1, 1], [], []>} : vector<12x64xbf16>, vector<64x32xbf16>, vector<12x32xf32> -> vector<12x32xf32>
    %c0_3 = arith.constant 0 : index
    %c0_4 = arith.constant 0 : index
    %3 = vector.load %arg3[%c0_3, %c0_4] : memref<1x32xf32, #tpu.memory_space<vmem>>, vector<1x32xf32>
    %4 = vector.broadcast %3 : vector<1x32xf32> to vector<12x32xf32>
    %5 = arith.addf %2, %4 : vector<12x32xf32>
    %6 = arith.truncf %5 : vector<12x32xf32> to vector<12x32xbf16>
    %c0_5 = arith.constant 0 : index
    %c0_6 = arith.constant 0 : index
    %7 = vector.load %arg4[%c0_5, %c0_6] : memref<12x32xbf16, #tpu.memory_space<vmem>>, vector<12x32xbf16>
    tpu.vector_store %arg4[%c0_5, %c0_6], %6 {strides = array<i32>} : memref<12x32xbf16, #tpu.memory_space<vmem>>, vector<12x32xbf16>,
    return
  }
  func.func @transform_0(%arg0: i32) -> (i32, i32) {
    %c0_i32 = arith.constant 0 : i32
    %c0_i32_0 = arith.constant 0 : i32
    return %arg0, %c0_i32 : i32, i32
  }
  func.func @transform_1(%arg0: i32) -> (i32, i32) {
    %c0_i32 = arith.constant 0 : i32
    %c0_i32_0 = arith.constant 0 : i32
    %c0_i32_1 = arith.constant 0 : i32
    return %c0_i32, %c0_i32_0 : i32, i32
  }
  func.func @transform_2(%arg0: i32) -> (i32, i32) {
    %c0_i32 = arith.constant 0 : i32
    %c0_i32_0 = arith.constant 0 : i32
    %c0_i32_1 = arith.constant 0 : i32
    return %c0_i32, %c0_i32_0 : i32, i32
  }
  func.func @transform_3(%arg0: i32) -> (i32, i32) {
    %c0_i32 = arith.constant 0 : i32
    %c0_i32_0 = arith.constant 0 : i32
    return %arg0, %c0_i32 : i32, i32
  }
}

module attributes {stable_mosaic.version = 11 : i64} {
  func.func @_dec_proj_gate_kernel(%arg0: i32, %arg1: memref<16x32xbf16, #tpu.memory_space<vmem>>, %arg2: memref<16x16xbf16, #tpu.memory_space<vmem>>, %arg3: memref<32x128xbf16, #tpu.memory_space<vmem>>, %arg4: memref<16x128xbf16, #tpu.memory_space<vmem>>, %arg5: memref<1x128xf32, #tpu.memory_space<vmem>>, %arg6: memref<32x1xbf16, #tpu.memory_space<vmem>>, %arg7: memref<16x1xbf16, #tpu.memory_space<vmem>>, %arg8: memref<1x1xf32, #tpu.memory_space<vmem>>, %arg9: memref<16x128xbf16, #tpu.memory_space<vmem>>, %arg10: memref<16x1xf32, #tpu.memory_space<vmem>>) attributes {dimension_semantics = [#tpu.dimension_semantics<parallel>], iteration_bounds = array<i64: 1>, scalar_prefetch = 0 : i64, scratch_operands = 0 : i64, tpu.core_type = #tpu.core_type<tc>, window_params = [{transform_indices = @transform_0, window_bounds = array<i64: 16, 32>}, {transform_indices = @transform_1, window_bounds = array<i64: 16, 16>}, {pipeline_mode = #tpu.pipeline_mode<synchronous>, transform_indices = @transform_2, window_bounds = array<i64: 32, 128>}, {pipeline_mode = #tpu.pipeline_mode<synchronous>, transform_indices = @transform_3, window_bounds = array<i64: 16, 128>}, {pipeline_mode = #tpu.pipeline_mode<synchronous>, transform_indices = @transform_4, window_bounds = array<i64: 1, 128>}, {pipeline_mode = #tpu.pipeline_mode<synchronous>, transform_indices = @transform_5, window_bounds = array<i64: 32, 1>}, {pipeline_mode = #tpu.pipeline_mode<synchronous>, transform_indices = @transform_6, window_bounds = array<i64: 16, 1>}, {pipeline_mode = #tpu.pipeline_mode<synchronous>, transform_indices = @transform_7, window_bounds = array<i64: 1, 1>}, {transform_indices = @transform_8, window_bounds = array<i64: 16, 128>}, {transform_indices = @transform_9, window_bounds = array<i64: 16, 1>}]} {
    %c0 = arith.constant 0 : index
    %c0_0 = arith.constant 0 : index
    %0 = vector.load %arg1[%c0, %c0_0] : memref<16x32xbf16, #tpu.memory_space<vmem>>, vector<16x32xbf16>
    %c0_1 = arith.constant 0 : index
    %c0_2 = arith.constant 0 : index
    %1 = vector.load %arg2[%c0_1, %c0_2] : memref<16x16xbf16, #tpu.memory_space<vmem>>, vector<16x16xbf16>
    %c0_3 = arith.constant 0 : index
    %c0_4 = arith.constant 0 : index
    %2 = vector.load %arg3[%c0_3, %c0_4] : memref<32x128xbf16, #tpu.memory_space<vmem>>, vector<32x128xbf16>
    %cst = arith.constant dense<0.000000e+00> : vector<16x128xf32>
    %3 = tpu.matmul %0, %2, %cst {dimension_numbers = #tpu.dot_dimension_numbers<[1], [0], [0], [1], [0, 0, 1, 1], [], []>} : vector<16x32xbf16>, vector<32x128xbf16>, vector<16x128xf32> -> vector<16x128xf32>
    %c0_5 = arith.constant 0 : index
    %c0_6 = arith.constant 0 : index
    %4 = vector.load %arg4[%c0_5, %c0_6] : memref<16x128xbf16, #tpu.memory_space<vmem>>, vector<16x128xbf16>
    %cst_7 = arith.constant dense<0.000000e+00> : vector<16x128xf32>
    %5 = tpu.matmul %1, %4, %cst_7 {dimension_numbers = #tpu.dot_dimension_numbers<[1], [0], [0], [1], [0, 0, 1, 1], [], []>} : vector<16x16xbf16>, vector<16x128xbf16>, vector<16x128xf32> -> vector<16x128xf32>
    %6 = arith.addf %3, %5 : vector<16x128xf32>
    %c0_8 = arith.constant 0 : index
    %c0_9 = arith.constant 0 : index
    %7 = vector.load %arg5[%c0_8, %c0_9] : memref<1x128xf32, #tpu.memory_space<vmem>>, vector<1x128xf32>
    %8 = vector.broadcast %7 : vector<1x128xf32> to vector<16x128xf32>
    %9 = arith.addf %6, %8 : vector<16x128xf32>
    %10 = arith.truncf %9 : vector<16x128xf32> to vector<16x128xbf16>
    %c0_10 = arith.constant 0 : index
    %c0_11 = arith.constant 0 : index
    %11 = vector.load %arg9[%c0_10, %c0_11] : memref<16x128xbf16, #tpu.memory_space<vmem>>, vector<16x128xbf16>
    tpu.vector_store %arg9[%c0_10, %c0_11], %10 {strides = array<i32>} : memref<16x128xbf16, #tpu.memory_space<vmem>>, vector<16x128xbf16>,
    %c0_12 = arith.constant 0 : index
    %c0_13 = arith.constant 0 : index
    %12 = vector.load %arg6[%c0_12, %c0_13] : memref<32x1xbf16, #tpu.memory_space<vmem>>, vector<32x1xbf16>
    %cst_14 = arith.constant dense<0.000000e+00> : vector<16x1xf32>
    %13 = tpu.matmul %0, %12, %cst_14 {dimension_numbers = #tpu.dot_dimension_numbers<[1], [0], [0], [1], [0, 0, 1, 1], [], []>} : vector<16x32xbf16>, vector<32x1xbf16>, vector<16x1xf32> -> vector<16x1xf32>
    %c0_15 = arith.constant 0 : index
    %c0_16 = arith.constant 0 : index
    %14 = vector.load %arg7[%c0_15, %c0_16] : memref<16x1xbf16, #tpu.memory_space<vmem>>, vector<16x1xbf16>
    %cst_17 = arith.constant dense<0.000000e+00> : vector<16x1xf32>
    %15 = tpu.matmul %1, %14, %cst_17 {dimension_numbers = #tpu.dot_dimension_numbers<[1], [0], [0], [1], [0, 0, 1, 1], [], []>} : vector<16x16xbf16>, vector<16x1xbf16>, vector<16x1xf32> -> vector<16x1xf32>
    %16 = arith.addf %13, %15 : vector<16x1xf32>
    %c0_18 = arith.constant 0 : index
    %c0_19 = arith.constant 0 : index
    %17 = vector.load %arg8[%c0_18, %c0_19] : memref<1x1xf32, #tpu.memory_space<vmem>>, vector<1x1xf32>
    %18 = vector.broadcast %17 : vector<1x1xf32> to vector<16x1xf32>
    %19 = arith.addf %16, %18 : vector<16x1xf32>
    %c0_20 = arith.constant 0 : index
    %c0_21 = arith.constant 0 : index
    %20 = vector.load %arg10[%c0_20, %c0_21] : memref<16x1xf32, #tpu.memory_space<vmem>>, vector<16x1xf32>
    tpu.vector_store %arg10[%c0_20, %c0_21], %19 {strides = array<i32>} : memref<16x1xf32, #tpu.memory_space<vmem>>, vector<16x1xf32>,
    return
  }
  func.func @transform_0(%arg0: i32) -> (i32, i32) {
    %c0_i32 = arith.constant 0 : i32
    %c0_i32_0 = arith.constant 0 : i32
    return %arg0, %c0_i32 : i32, i32
  }
  func.func @transform_1(%arg0: i32) -> (i32, i32) {
    %c0_i32 = arith.constant 0 : i32
    %c0_i32_0 = arith.constant 0 : i32
    return %arg0, %c0_i32 : i32, i32
  }
  func.func @transform_2(%arg0: i32) -> (i32, i32) {
    %c0_i32 = arith.constant 0 : i32
    %c0_i32_0 = arith.constant 0 : i32
    %c0_i32_1 = arith.constant 0 : i32
    return %c0_i32, %c0_i32_0 : i32, i32
  }
  func.func @transform_3(%arg0: i32) -> (i32, i32) {
    %c0_i32 = arith.constant 0 : i32
    %c0_i32_0 = arith.constant 0 : i32
    %c0_i32_1 = arith.constant 0 : i32
    return %c0_i32, %c0_i32_0 : i32, i32
  }
  func.func @transform_4(%arg0: i32) -> (i32, i32) {
    %c0_i32 = arith.constant 0 : i32
    %c0_i32_0 = arith.constant 0 : i32
    %c0_i32_1 = arith.constant 0 : i32
    return %c0_i32, %c0_i32_0 : i32, i32
  }
  func.func @transform_5(%arg0: i32) -> (i32, i32) {
    %c0_i32 = arith.constant 0 : i32
    %c0_i32_0 = arith.constant 0 : i32
    %c0_i32_1 = arith.constant 0 : i32
    return %c0_i32, %c0_i32_0 : i32, i32
  }
  func.func @transform_6(%arg0: i32) -> (i32, i32) {
    %c0_i32 = arith.constant 0 : i32
    %c0_i32_0 = arith.constant 0 : i32
    %c0_i32_1 = arith.constant 0 : i32
    return %c0_i32, %c0_i32_0 : i32, i32
  }
  func.func @transform_7(%arg0: i32) -> (i32, i32) {
    %c0_i32 = arith.constant 0 : i32
    %c0_i32_0 = arith.constant 0 : i32
    %c0_i32_1 = arith.constant 0 : i32
    return %c0_i32, %c0_i32_0 : i32, i32
  }
  func.func @transform_8(%arg0: i32) -> (i32, i32) {
    %c0_i32 = arith.constant 0 : i32
    %c0_i32_0 = arith.constant 0 : i32
    return %arg0, %c0_i32 : i32, i32
  }
  func.func @transform_9(%arg0: i32) -> (i32, i32) {
    %c0_i32 = arith.constant 0 : i32
    %c0_i32_0 = arith.constant 0 : i32
    return %arg0, %c0_i32 : i32, i32
  }
}

module attributes {stable_mosaic.version = 11 : i64} {
  func.func @kernel(%arg0: i32, %arg1: i32, %arg2: memref<1x8x16xbf16, #tpu.memory_space<vmem>>, %arg3: memref<1x6x32xbf16, #tpu.memory_space<vmem>>, %arg4: memref<1x1x6xf32, #tpu.memory_space<vmem>>, %arg5: memref<16x1xbf16, #tpu.memory_space<vmem>>, %arg6: memref<1x8x16xbf16, #tpu.memory_space<vmem>>, %arg7: memref<1x8x6xf32, #tpu.memory_space<vmem>>) attributes {dimension_semantics = [#tpu.dimension_semantics<parallel>, #tpu.dimension_semantics<parallel>], iteration_bounds = array<i64: 2, 1>, scalar_prefetch = 0 : i64, scratch_operands = 0 : i64, tpu.core_type = #tpu.core_type<tc>, window_params = [{transform_indices = @transform_0, window_bounds = array<i64: 1, 8, 16>}, {transform_indices = @transform_1, window_bounds = array<i64: 1, 6, 32>}, {transform_indices = @transform_2, window_bounds = array<i64: 1, 1, 6>}, {pipeline_mode = #tpu.pipeline_mode<synchronous>, transform_indices = @transform_3, window_bounds = array<i64: 16, 1>}, {transform_indices = @transform_4, window_bounds = array<i64: 1, 8, 16>}, {transform_indices = @transform_5, window_bounds = array<i64: 1, 8, 6>}]} {
    %c0 = arith.constant 0 : index
    %c0_0 = arith.constant 0 : index
    %c0_1 = arith.constant 0 : index
    %0 = vector.load %arg2[%c0, %c0_0, %c0_1] : memref<1x8x16xbf16, #tpu.memory_space<vmem>>, vector<1x8x16xbf16>
    %1 = vector.shape_cast %0 : vector<1x8x16xbf16> to vector<8x16xbf16>
    %c0_2 = arith.constant 0 : index
    %c0_3 = arith.constant 0 : index
    %c0_4 = arith.constant 0 : index
    %2 = vector.load %arg3[%c0_2, %c0_3, %c0_4] : memref<1x6x32xbf16, #tpu.memory_space<vmem>>, vector<1x6x32xbf16>
    %3 = vector.shape_cast %2 : vector<1x6x32xbf16> to vector<6x32xbf16>
    %4 = vector.extract_strided_slice %3 {offsets = [0, 0], sizes = [6, 16], strides = [1, 1]} : vector<6x32xbf16> to vector<6x16xbf16>
    %5 = vector.extract_strided_slice %3 {offsets = [0, 16], sizes = [6, 16], strides = [1, 1]} : vector<6x32xbf16> to vector<6x16xbf16>
    %c0_5 = arith.constant 0 : index
    %c0_6 = arith.constant 0 : index
    %6 = vector.load %arg5[%c0_5, %c0_6] : memref<16x1xbf16, #tpu.memory_space<vmem>>, vector<16x1xbf16>
    %7 = vector.shape_cast %1 : vector<8x16xbf16> to vector<8x1x16xbf16>
    %8 = vector.shape_cast %4 : vector<6x16xbf16> to vector<1x6x16xbf16>
    %9 = vector.broadcast %7 : vector<8x1x16xbf16> to vector<8x6x16xbf16>
    %10 = vector.broadcast %8 : vector<1x6x16xbf16> to vector<8x6x16xbf16>
    %11 = arith.addf %9, %10 : vector<8x6x16xbf16>
    %12 = math.tanh %11 : vector<8x6x16xbf16>
    %13 = vector.shape_cast %12 : vector<8x6x16xbf16> to vector<48x16xbf16>
    %cst = arith.constant dense<0.000000e+00> : vector<48x1xf32>
    %14 = tpu.matmul %13, %6, %cst {dimension_numbers = #tpu.dot_dimension_numbers<[1], [0], [0], [1], [0, 0, 1, 1], [], []>} : vector<48x16xbf16>, vector<16x1xbf16>, vector<48x1xf32> -> vector<48x1xf32>
    %15 = vector.shape_cast %14 : vector<48x1xf32> to vector<8x6xf32>
    %cst_7 = arith.constant 1.000000e+00 : f32
    %16 = vector.broadcast %cst_7 : f32 to vector<8x6xf32>
    %17 = arith.mulf %15, %16 : vector<8x6xf32>
    %c0_8 = arith.constant 0 : index
    %c0_9 = arith.constant 0 : index
    %c0_10 = arith.constant 0 : index
    %18 = vector.load %arg4[%c0_8, %c0_9, %c0_10] : memref<1x1x6xf32, #tpu.memory_space<vmem>>, vector<1x1x6xf32>
    %19 = vector.shape_cast %18 : vector<1x1x6xf32> to vector<1x6xf32>
    %cst_11 = arith.constant 0.000000e+00 : f32
    %20 = vector.broadcast %cst_11 : f32 to vector<1x6xf32>
    %21 = arith.cmpf ogt, %19, %20 : vector<1x6xf32>
    %cst_12 = arith.constant -1.000000e+30 : f32
    %22 = vector.shape_cast %21 : vector<1x6xi1> to vector<1x6xi1>
    %23 = vector.broadcast %22 : vector<1x6xi1> to vector<8x6xi1>
    %24 = vector.broadcast %cst_12 : f32 to vector<8x6xf32>
    %25 = arith.select %23, %24, %17 : vector<8x6xi1>, vector<8x6xf32>
    %cst_13 = arith.constant dense<0xFF800000> : vector<8xf32>
    %26 = vector.multi_reduction <maximumf>, %25, %cst_13 [1] : vector<8x6xf32> to vector<8xf32>
    %27 = vector.shape_cast %26 : vector<8xf32> to vector<8x1xf32>
    %28 = vector.broadcast %27 : vector<8x1xf32> to vector<8x6xf32>
    %29 = arith.subf %25, %28 : vector<8x6xf32>
    %30 = math.exp %29 : vector<8x6xf32>
    %cst_14 = arith.constant dense<0.000000e+00> : vector<8xf32>
    %31 = vector.multi_reduction <add>, %30, %cst_14 [1] : vector<8x6xf32> to vector<8xf32>
    %32 = vector.shape_cast %31 : vector<8xf32> to vector<8x1xf32>
    %33 = tpu.reciprocal %32 {approx = true} : vector<8x1xf32> -> vector<8x1xf32>
    %34 = vector.broadcast %33 : vector<8x1xf32> to vector<8x6xf32>
    %35 = arith.mulf %30, %34 : vector<8x6xf32>
    %36 = arith.truncf %35 : vector<8x6xf32> to vector<8x6xbf16>
    %cst_15 = arith.constant dense<0.000000e+00> : vector<8x16xf32>
    %37 = tpu.matmul %36, %5, %cst_15 {dimension_numbers = #tpu.dot_dimension_numbers<[1], [0], [0], [1], [0, 0, 1, 1], [], []>} : vector<8x6xbf16>, vector<6x16xbf16>, vector<8x16xf32> -> vector<8x16xf32>
    %38 = arith.truncf %37 : vector<8x16xf32> to vector<8x16xbf16>
    %c0_16 = arith.constant 0 : index
    %c0_17 = arith.constant 0 : index
    %c0_18 = arith.constant 0 : index
    %39 = vector.load %arg6[%c0_16, %c0_17, %c0_18] : memref<1x8x16xbf16, #tpu.memory_space<vmem>>, vector<1x8x16xbf16>
    %40 = vector.shape_cast %39 : vector<1x8x16xbf16> to vector<8x16xbf16>
    %41 = vector.shape_cast %38 : vector<8x16xbf16> to vector<1x8x16xbf16>
    tpu.vector_store %arg6[%c0_16, %c0_17, %c0_18], %41 {strides = array<i32>} : memref<1x8x16xbf16, #tpu.memory_space<vmem>>, vector<1x8x16xbf16>,
    %c0_19 = arith.constant 0 : index
    %c0_20 = arith.constant 0 : index
    %c0_21 = arith.constant 0 : index
    %42 = vector.load %arg7[%c0_19, %c0_20, %c0_21] : memref<1x8x6xf32, #tpu.memory_space<vmem>>, vector<1x8x6xf32>
    %43 = vector.shape_cast %42 : vector<1x8x6xf32> to vector<8x6xf32>
    %44 = vector.shape_cast %35 : vector<8x6xf32> to vector<1x8x6xf32>
    tpu.vector_store %arg7[%c0_19, %c0_20, %c0_21], %44 {strides = array<i32>} : memref<1x8x6xf32, #tpu.memory_space<vmem>>, vector<1x8x6xf32>,
    return
  }
  func.func @transform_0(%arg0: i32, %arg1: i32) -> (i32, i32, i32) {
    %c0_i32 = arith.constant 0 : i32
    %c0_i32_0 = arith.constant 0 : i32
    return %arg0, %arg1, %c0_i32 : i32, i32, i32
  }
  func.func @transform_1(%arg0: i32, %arg1: i32) -> (i32, i32, i32) {
    %c0_i32 = arith.constant 0 : i32
    %c0_i32_0 = arith.constant 0 : i32
    %c0_i32_1 = arith.constant 0 : i32
    return %arg0, %c0_i32, %c0_i32_0 : i32, i32, i32
  }
  func.func @transform_2(%arg0: i32, %arg1: i32) -> (i32, i32, i32) {
    %c0_i32 = arith.constant 0 : i32
    %c0_i32_0 = arith.constant 0 : i32
    %c0_i32_1 = arith.constant 0 : i32
    return %arg0, %c0_i32, %c0_i32_0 : i32, i32, i32
  }
  func.func @transform_3(%arg0: i32, %arg1: i32) -> (i32, i32) {
    %c0_i32 = arith.constant 0 : i32
    %c0_i32_0 = arith.constant 0 : i32
    %c0_i32_1 = arith.constant 0 : i32
    return %c0_i32, %c0_i32_0 : i32, i32
  }
  func.func @transform_4(%arg0: i32, %arg1: i32) -> (i32, i32, i32) {
    %c0_i32 = arith.constant 0 : i32
    %c0_i32_0 = arith.constant 0 : i32
    return %arg0, %arg1, %c0_i32 : i32, i32, i32
  }
  func.func @transform_5(%arg0: i32, %arg1: i32) -> (i32, i32, i32) {
    %c0_i32 = arith.constant 0 : i32
    %c0_i32_0 = arith.constant 0 : i32
    return %arg0, %arg1, %c0_i32 : i32, i32, i32
  }
}

module attributes {stable_mosaic.version = 11 : i64} {
  func.func @kernel(%arg0: i32, %arg1: i32, %arg2: memref<1x2x128xbf16, #tpu.memory_space<vmem>>, %arg3: memref<32x128xbf16, #tpu.memory_space<vmem>>, %arg4: memref<64x128xbf16, #tpu.memory_space<vmem>>, %arg5: memref<1x128xf32, #tpu.memory_space<vmem>>, %arg6: memref<1x2x32xbf16, #tpu.memory_space<vmem>>, %arg7: memref<2x2x32xf32, #tpu.memory_space<vmem>>, %arg8: memref<2x2x32xf32, #tpu.memory_space<vmem>>) attributes {dimension_semantics = [#tpu.dimension_semantics<parallel>, #tpu.dimension_semantics<arbitrary>], iteration_bounds = array<i64: 1, 8>, scalar_prefetch = 0 : i64, scratch_operands = 2 : i64, tpu.core_type = #tpu.core_type<tc>, window_params = [{transform_indices = @transform_0, window_bounds = array<i64: 1, 2, 128>}, {pipeline_mode = #tpu.pipeline_mode<synchronous>, transform_indices = @transform_1, window_bounds = array<i64: 32, 128>}, {pipeline_mode = #tpu.pipeline_mode<synchronous>, transform_indices = @transform_2, window_bounds = array<i64: 64, 128>}, {pipeline_mode = #tpu.pipeline_mode<synchronous>, transform_indices = @transform_3, window_bounds = array<i64: 1, 128>}, {transform_indices = @transform_4, window_bounds = array<i64: 1, 2, 32>}]} {
    %c0_i32 = arith.constant 0 : i32
    %0 = arith.cmpi eq, %arg1, %c0_i32 : i32
    %1 = arith.extui %0 : i1 to i32
    %c0_i32_0 = arith.constant 0 : i32
    %2 = arith.cmpi ne, %1, %c0_i32_0 : i32
    scf.if %2 {
      %cst_42 = arith.constant 0.000000e+00 : f32
      %91 = vector.broadcast %cst_42 : f32 to vector<2x2x32xf32>
      %c0_43 = arith.constant 0 : index
      %c0_44 = arith.constant 0 : index
      %c0_45 = arith.constant 0 : index
      %92 = vector.load %arg7[%c0_43, %c0_44, %c0_45] : memref<2x2x32xf32, #tpu.memory_space<vmem>>, vector<2x2x32xf32>
      tpu.vector_store %arg7[%c0_43, %c0_44, %c0_45], %91 {strides = array<i32>} : memref<2x2x32xf32, #tpu.memory_space<vmem>>, vector<2x2x32xf32>,
      %cst_46 = arith.constant 0.000000e+00 : f32
      %93 = vector.broadcast %cst_46 : f32 to vector<2x2x32xf32>
      %c0_47 = arith.constant 0 : index
      %c0_48 = arith.constant 0 : index
      %c0_49 = arith.constant 0 : index
      %94 = vector.load %arg8[%c0_47, %c0_48, %c0_49] : memref<2x2x32xf32, #tpu.memory_space<vmem>>, vector<2x2x32xf32>
      tpu.vector_store %arg8[%c0_47, %c0_48, %c0_49], %93 {strides = array<i32>} : memref<2x2x32xf32, #tpu.memory_space<vmem>>, vector<2x2x32xf32>,
    } else {
    }
    %c0 = arith.constant 0 : index
    %c0_1 = arith.constant 0 : index
    %c0_2 = arith.constant 0 : index
    %3 = vector.load %arg7[%c0, %c0_1, %c0_2] : memref<2x2x32xf32, #tpu.memory_space<vmem>>, vector<1x2x32xf32>
    %4 = vector.shape_cast %3 : vector<1x2x32xf32> to vector<2x32xf32>
    %c0_3 = arith.constant 0 : index
    %c0_4 = arith.constant 0 : index
    %c0_5 = arith.constant 0 : index
    %5 = vector.load %arg8[%c0_3, %c0_4, %c0_5] : memref<2x2x32xf32, #tpu.memory_space<vmem>>, vector<1x2x32xf32>
    %6 = vector.shape_cast %5 : vector<1x2x32xf32> to vector<2x32xf32>
    %c0_6 = arith.constant 0 : index
    %c0_7 = arith.constant 0 : index
    %c0_8 = arith.constant 0 : index
    %7 = vector.load %arg2[%c0_6, %c0_7, %c0_8] : memref<1x2x128xbf16, #tpu.memory_space<vmem>>, vector<1x2x128xbf16>
    %8 = vector.shape_cast %7 : vector<1x2x128xbf16> to vector<2x128xbf16>
    %9 = arith.extf %8 : vector<2x128xbf16> to vector<2x128xf32>
    %10 = arith.truncf %4 : vector<2x32xf32> to vector<2x32xbf16>
    %c0_9 = arith.constant 0 : index
    %c0_10 = arith.constant 0 : index
    %11 = vector.load %arg3[%c0_9, %c0_10] : memref<32x128xbf16, #tpu.memory_space<vmem>>, vector<32x128xbf16>
    %cst = arith.constant dense<0.000000e+00> : vector<2x128xf32>
    %12 = tpu.matmul %10, %11, %cst {dimension_numbers = #tpu.dot_dimension_numbers<[1], [0], [0], [1], [0, 0, 1, 1], [], []>} : vector<2x32xbf16>, vector<32x128xbf16>, vector<2x128xf32> -> vector<2x128xf32>
    %13 = arith.addf %9, %12 : vector<2x128xf32>
    %14 = vector.extract_strided_slice %13 {offsets = [0, 0], sizes = [2, 32], strides = [1, 1]} : vector<2x128xf32> to vector<2x32xf32>
    %15 = arith.negf %14 : vector<2x32xf32>
    %16 = math.exp %15 : vector<2x32xf32>
    %cst_11 = arith.constant 1.000000e+00 : f32
    %17 = vector.broadcast %cst_11 : f32 to vector<2x32xf32>
    %18 = arith.addf %17, %16 : vector<2x32xf32>
    %19 = arith.divf %17, %18 : vector<2x32xf32>
    %20 = vector.extract_strided_slice %13 {offsets = [0, 32], sizes = [2, 32], strides = [1, 1]} : vector<2x128xf32> to vector<2x32xf32>
    %21 = arith.negf %20 : vector<2x32xf32>
    %22 = math.exp %21 : vector<2x32xf32>
    %cst_12 = arith.constant 1.000000e+00 : f32
    %23 = vector.broadcast %cst_12 : f32 to vector<2x32xf32>
    %24 = arith.addf %23, %22 : vector<2x32xf32>
    %25 = arith.divf %23, %24 : vector<2x32xf32>
    %26 = vector.extract_strided_slice %13 {offsets = [0, 64], sizes = [2, 32], strides = [1, 1]} : vector<2x128xf32> to vector<2x32xf32>
    %27 = math.tanh %26 : vector<2x32xf32>
    %28 = vector.extract_strided_slice %13 {offsets = [0, 96], sizes = [2, 32], strides = [1, 1]} : vector<2x128xf32> to vector<2x32xf32>
    %29 = arith.negf %28 : vector<2x32xf32>
    %30 = math.exp %29 : vector<2x32xf32>
    %cst_13 = arith.constant 1.000000e+00 : f32
    %31 = vector.broadcast %cst_13 : f32 to vector<2x32xf32>
    %32 = arith.addf %31, %30 : vector<2x32xf32>
    %33 = arith.divf %31, %32 : vector<2x32xf32>
    %34 = arith.mulf %25, %6 : vector<2x32xf32>
    %35 = arith.mulf %19, %27 : vector<2x32xf32>
    %36 = arith.addf %34, %35 : vector<2x32xf32>
    %37 = math.tanh %36 : vector<2x32xf32>
    %38 = arith.mulf %33, %37 : vector<2x32xf32>
    %c0_14 = arith.constant 0 : index
    %c0_15 = arith.constant 0 : index
    %c0_16 = arith.constant 0 : index
    %39 = vector.load %arg7[%c0_14, %c0_15, %c0_16] : memref<2x2x32xf32, #tpu.memory_space<vmem>>, vector<1x2x32xf32>
    %40 = vector.shape_cast %39 : vector<1x2x32xf32> to vector<2x32xf32>
    %41 = vector.shape_cast %38 : vector<2x32xf32> to vector<1x2x32xf32>
    tpu.vector_store %arg7[%c0_14, %c0_15, %c0_16], %41 {strides = array<i32>} : memref<2x2x32xf32, #tpu.memory_space<vmem>>, vector<1x2x32xf32>,
    %c0_17 = arith.constant 0 : index
    %c0_18 = arith.constant 0 : index
    %c0_19 = arith.constant 0 : index
    %42 = vector.load %arg8[%c0_17, %c0_18, %c0_19] : memref<2x2x32xf32, #tpu.memory_space<vmem>>, vector<1x2x32xf32>
    %43 = vector.shape_cast %42 : vector<1x2x32xf32> to vector<2x32xf32>
    %44 = vector.shape_cast %36 : vector<2x32xf32> to vector<1x2x32xf32>
    tpu.vector_store %arg8[%c0_17, %c0_18, %c0_19], %44 {strides = array<i32>} : memref<2x2x32xf32, #tpu.memory_space<vmem>>, vector<1x2x32xf32>,
    %c1 = arith.constant 1 : index
    %c0_20 = arith.constant 0 : index
    %c0_21 = arith.constant 0 : index
    %45 = vector.load %arg7[%c1, %c0_20, %c0_21] : memref<2x2x32xf32, #tpu.memory_space<vmem>>, vector<1x2x32xf32>
    %46 = vector.shape_cast %45 : vector<1x2x32xf32> to vector<2x32xf32>
    %c1_22 = arith.constant 1 : index
    %c0_23 = arith.constant 0 : index
    %c0_24 = arith.constant 0 : index
    %47 = vector.load %arg8[%c1_22, %c0_23, %c0_24] : memref<2x2x32xf32, #tpu.memory_space<vmem>>, vector<1x2x32xf32>
    %48 = vector.shape_cast %47 : vector<1x2x32xf32> to vector<2x32xf32>
    %49 = tpu.concatenate %38, %46 in 1 : vector<2x32xf32>, vector<2x32xf32> -> vector<2x64xf32>
    %50 = arith.truncf %49 : vector<2x64xf32> to vector<2x64xbf16>
    %c0_25 = arith.constant 0 : index
    %c0_26 = arith.constant 0 : index
    %51 = vector.load %arg4[%c0_25, %c0_26] : memref<64x128xbf16, #tpu.memory_space<vmem>>, vector<64x128xbf16>
    %cst_27 = arith.constant dense<0.000000e+00> : vector<2x128xf32>
    %52 = tpu.matmul %50, %51, %cst_27 {dimension_numbers = #tpu.dot_dimension_numbers<[1], [0], [0], [1], [0, 0, 1, 1], [], []>} : vector<2x64xbf16>, vector<64x128xbf16>, vector<2x128xf32> -> vector<2x128xf32>
    %c0_28 = arith.constant 0 : index
    %c0_29 = arith.constant 0 : index
    %53 = vector.load %arg5[%c0_28, %c0_29] : memref<1x128xf32, #tpu.memory_space<vmem>>, vector<1x128xf32>
    %54 = vector.broadcast %53 : vector<1x128xf32> to vector<2x128xf32>
    %55 = arith.addf %52, %54 : vector<2x128xf32>
    %56 = vector.extract_strided_slice %55 {offsets = [0, 0], sizes = [2, 32], strides = [1, 1]} : vector<2x128xf32> to vector<2x32xf32>
    %57 = arith.negf %56 : vector<2x32xf32>
    %58 = math.exp %57 : vector<2x32xf32>
    %cst_30 = arith.constant 1.000000e+00 : f32
    %59 = vector.broadcast %cst_30 : f32 to vector<2x32xf32>
    %60 = arith.addf %59, %58 : vector<2x32xf32>
    %61 = arith.divf %59, %60 : vector<2x32xf32>
    %62 = vector.extract_strided_slice %55 {offsets = [0, 32], sizes = [2, 32], strides = [1, 1]} : vector<2x128xf32> to vector<2x32xf32>
    %63 = arith.negf %62 : vector<2x32xf32>
    %64 = math.exp %63 : vector<2x32xf32>
    %cst_31 = arith.constant 1.000000e+00 : f32
    %65 = vector.broadcast %cst_31 : f32 to vector<2x32xf32>
    %66 = arith.addf %65, %64 : vector<2x32xf32>
    %67 = arith.divf %65, %66 : vector<2x32xf32>
    %68 = vector.extract_strided_slice %55 {offsets = [0, 64], sizes = [2, 32], strides = [1, 1]} : vector<2x128xf32> to vector<2x32xf32>
    %69 = math.tanh %68 : vector<2x32xf32>
    %70 = vector.extract_strided_slice %55 {offsets = [0, 96], sizes = [2, 32], strides = [1, 1]} : vector<2x128xf32> to vector<2x32xf32>
    %71 = arith.negf %70 : vector<2x32xf32>
    %72 = math.exp %71 : vector<2x32xf32>
    %cst_32 = arith.constant 1.000000e+00 : f32
    %73 = vector.broadcast %cst_32 : f32 to vector<2x32xf32>
    %74 = arith.addf %73, %72 : vector<2x32xf32>
    %75 = arith.divf %73, %74 : vector<2x32xf32>
    %76 = arith.mulf %67, %48 : vector<2x32xf32>
    %77 = arith.mulf %61, %69 : vector<2x32xf32>
    %78 = arith.addf %76, %77 : vector<2x32xf32>
    %79 = math.tanh %78 : vector<2x32xf32>
    %80 = arith.mulf %75, %79 : vector<2x32xf32>
    %c1_33 = arith.constant 1 : index
    %c0_34 = arith.constant 0 : index
    %c0_35 = arith.constant 0 : index
    %81 = vector.load %arg7[%c1_33, %c0_34, %c0_35] : memref<2x2x32xf32, #tpu.memory_space<vmem>>, vector<1x2x32xf32>
    %82 = vector.shape_cast %81 : vector<1x2x32xf32> to vector<2x32xf32>
    %83 = vector.shape_cast %80 : vector<2x32xf32> to vector<1x2x32xf32>
    tpu.vector_store %arg7[%c1_33, %c0_34, %c0_35], %83 {strides = array<i32>} : memref<2x2x32xf32, #tpu.memory_space<vmem>>, vector<1x2x32xf32>,
    %c1_36 = arith.constant 1 : index
    %c0_37 = arith.constant 0 : index
    %c0_38 = arith.constant 0 : index
    %84 = vector.load %arg8[%c1_36, %c0_37, %c0_38] : memref<2x2x32xf32, #tpu.memory_space<vmem>>, vector<1x2x32xf32>
    %85 = vector.shape_cast %84 : vector<1x2x32xf32> to vector<2x32xf32>
    %86 = vector.shape_cast %78 : vector<2x32xf32> to vector<1x2x32xf32>
    tpu.vector_store %arg8[%c1_36, %c0_37, %c0_38], %86 {strides = array<i32>} : memref<2x2x32xf32, #tpu.memory_space<vmem>>, vector<1x2x32xf32>,
    %87 = arith.truncf %80 : vector<2x32xf32> to vector<2x32xbf16>
    %c0_39 = arith.constant 0 : index
    %c0_40 = arith.constant 0 : index
    %c0_41 = arith.constant 0 : index
    %88 = vector.load %arg6[%c0_39, %c0_40, %c0_41] : memref<1x2x32xbf16, #tpu.memory_space<vmem>>, vector<1x2x32xbf16>
    %89 = vector.shape_cast %88 : vector<1x2x32xbf16> to vector<2x32xbf16>
    %90 = vector.shape_cast %87 : vector<2x32xbf16> to vector<1x2x32xbf16>
    tpu.vector_store %arg6[%c0_39, %c0_40, %c0_41], %90 {strides = array<i32>} : memref<1x2x32xbf16, #tpu.memory_space<vmem>>, vector<1x2x32xbf16>,
    return
  }
  func.func @transform_0(%arg0: i32, %arg1: i32) -> (i32, i32, i32) {
    %c0_i32 = arith.constant 0 : i32
    %c0_i32_0 = arith.constant 0 : i32
    return %arg1, %arg0, %c0_i32 : i32, i32, i32
  }
  func.func @transform_1(%arg0: i32, %arg1: i32) -> (i32, i32) {
    %c0_i32 = arith.constant 0 : i32
    %c0_i32_0 = arith.constant 0 : i32
    %c0_i32_1 = arith.constant 0 : i32
    return %c0_i32, %c0_i32_0 : i32, i32
  }
  func.func @transform_2(%arg0: i32, %arg1: i32) -> (i32, i32) {
    %c0_i32 = arith.constant 0 : i32
    %c0_i32_0 = arith.constant 0 : i32
    %c0_i32_1 = arith.constant 0 : i32
    return %c0_i32, %c0_i32_0 : i32, i32
  }
  func.func @transform_3(%arg0: i32, %arg1: i32) -> (i32, i32) {
    %c0_i32 = arith.constant 0 : i32
    %c0_i32_0 = arith.constant 0 : i32
    %c0_i32_1 = arith.constant 0 : i32
    return %c0_i32, %c0_i32_0 : i32, i32
  }
  func.func @transform_4(%arg0: i32, %arg1: i32) -> (i32, i32, i32) {
    %c0_i32 = arith.constant 0 : i32
    %c0_i32_0 = arith.constant 0 : i32
    return %arg1, %arg0, %c0_i32 : i32, i32, i32
  }
}

module attributes {stable_mosaic.version = 11 : i64} {
  func.func @_head_kernel(%arg0: i32, %arg1: memref<16x32xbf16, #tpu.memory_space<vmem>>, %arg2: memref<16x8xf32, #tpu.memory_space<vmem>>, %arg3: memref<32x32xbf16, #tpu.memory_space<vmem>>, %arg4: memref<1x32xf32, #tpu.memory_space<vmem>>, %arg5: memref<32x32xbf16, #tpu.memory_space<vmem>>, %arg6: memref<1x32xf32, #tpu.memory_space<vmem>>, %arg7: memref<32x16xbf16, #tpu.memory_space<vmem>>, %arg8: memref<1x16xf32, #tpu.memory_space<vmem>>, %arg9: memref<16x16xf32, #tpu.memory_space<vmem>>) attributes {dimension_semantics = [#tpu.dimension_semantics<parallel>], iteration_bounds = array<i64: 1>, scalar_prefetch = 0 : i64, scratch_operands = 0 : i64, tpu.core_type = #tpu.core_type<tc>, window_params = [{transform_indices = @transform_0, window_bounds = array<i64: 16, 32>}, {transform_indices = @transform_1, window_bounds = array<i64: 16, 8>}, {pipeline_mode = #tpu.pipeline_mode<synchronous>, transform_indices = @transform_2, window_bounds = array<i64: 32, 32>}, {pipeline_mode = #tpu.pipeline_mode<synchronous>, transform_indices = @transform_3, window_bounds = array<i64: 1, 32>}, {pipeline_mode = #tpu.pipeline_mode<synchronous>, transform_indices = @transform_4, window_bounds = array<i64: 32, 32>}, {pipeline_mode = #tpu.pipeline_mode<synchronous>, transform_indices = @transform_5, window_bounds = array<i64: 1, 32>}, {pipeline_mode = #tpu.pipeline_mode<synchronous>, transform_indices = @transform_6, window_bounds = array<i64: 32, 16>}, {pipeline_mode = #tpu.pipeline_mode<synchronous>, transform_indices = @transform_7, window_bounds = array<i64: 1, 16>}, {transform_indices = @transform_8, window_bounds = array<i64: 16, 16>}]} {
    %c0 = arith.constant 0 : index
    %c0_0 = arith.constant 0 : index
    %0 = vector.load %arg1[%c0, %c0_0] : memref<16x32xbf16, #tpu.memory_space<vmem>>, vector<16x32xbf16>
    %c0_1 = arith.constant 0 : index
    %c0_2 = arith.constant 0 : index
    %1 = vector.load %arg3[%c0_1, %c0_2] : memref<32x32xbf16, #tpu.memory_space<vmem>>, vector<32x32xbf16>
    %cst = arith.constant dense<0.000000e+00> : vector<16x32xf32>
    %2 = tpu.matmul %0, %1, %cst {dimension_numbers = #tpu.dot_dimension_numbers<[1], [0], [0], [1], [0, 0, 1, 1], [], []>} : vector<16x32xbf16>, vector<32x32xbf16>, vector<16x32xf32> -> vector<16x32xf32>
    %c0_3 = arith.constant 0 : index
    %c0_4 = arith.constant 0 : index
    %3 = vector.load %arg4[%c0_3, %c0_4] : memref<1x32xf32, #tpu.memory_space<vmem>>, vector<1x32xf32>
    %4 = vector.broadcast %3 : vector<1x32xf32> to vector<16x32xf32>
    %5 = arith.addf %2, %4 : vector<16x32xf32>
    %6 = math.tanh %5 : vector<16x32xf32>
    %7 = arith.truncf %6 : vector<16x32xf32> to vector<16x32xbf16>
    %c0_5 = arith.constant 0 : index
    %c0_6 = arith.constant 0 : index
    %8 = vector.load %arg5[%c0_5, %c0_6] : memref<32x32xbf16, #tpu.memory_space<vmem>>, vector<32x32xbf16>
    %cst_7 = arith.constant dense<0.000000e+00> : vector<16x32xf32>
    %9 = tpu.matmul %7, %8, %cst_7 {dimension_numbers = #tpu.dot_dimension_numbers<[1], [0], [0], [1], [0, 0, 1, 1], [], []>} : vector<16x32xbf16>, vector<32x32xbf16>, vector<16x32xf32> -> vector<16x32xf32>
    %c0_8 = arith.constant 0 : index
    %c0_9 = arith.constant 0 : index
    %10 = vector.load %arg6[%c0_8, %c0_9] : memref<1x32xf32, #tpu.memory_space<vmem>>, vector<1x32xf32>
    %11 = vector.broadcast %10 : vector<1x32xf32> to vector<16x32xf32>
    %12 = arith.addf %9, %11 : vector<16x32xf32>
    %13 = math.tanh %12 : vector<16x32xf32>
    %14 = arith.truncf %13 : vector<16x32xf32> to vector<16x32xbf16>
    %c0_10 = arith.constant 0 : index
    %c0_11 = arith.constant 0 : index
    %15 = vector.load %arg7[%c0_10, %c0_11] : memref<32x16xbf16, #tpu.memory_space<vmem>>, vector<32x16xbf16>
    %cst_12 = arith.constant dense<0.000000e+00> : vector<16x16xf32>
    %16 = tpu.matmul %14, %15, %cst_12 {dimension_numbers = #tpu.dot_dimension_numbers<[1], [0], [0], [1], [0, 0, 1, 1], [], []>} : vector<16x32xbf16>, vector<32x16xbf16>, vector<16x16xf32> -> vector<16x16xf32>
    %c0_13 = arith.constant 0 : index
    %c0_14 = arith.constant 0 : index
    %17 = vector.load %arg8[%c0_13, %c0_14] : memref<1x16xf32, #tpu.memory_space<vmem>>, vector<1x16xf32>
    %18 = vector.broadcast %17 : vector<1x16xf32> to vector<16x16xf32>
    %19 = arith.addf %16, %18 : vector<16x16xf32>
    %20 = vector.extract_strided_slice %19 {offsets = [0, 0], sizes = [16, 8], strides = [1, 1]} : vector<16x16xf32> to vector<16x8xf32>
    %21 = vector.extract_strided_slice %19 {offsets = [0, 8], sizes = [16, 8], strides = [1, 1]} : vector<16x16xf32> to vector<16x8xf32>
    %22 = math.exp %20 : vector<16x8xf32>
    %c0_15 = arith.constant 0 : index
    %c0_16 = arith.constant 0 : index
    %23 = vector.load %arg2[%c0_15, %c0_16] : memref<16x8xf32, #tpu.memory_space<vmem>>, vector<16x8xf32>
    %24 = arith.mulf %22, %23 : vector<16x8xf32>
    %25 = arith.addf %24, %21 : vector<16x8xf32>
    %26 = tpu.concatenate %25, %20 in 1 : vector<16x8xf32>, vector<16x8xf32> -> vector<16x16xf32>
    %c0_17 = arith.constant 0 : index
    %c0_18 = arith.constant 0 : index
    %27 = vector.load %arg9[%c0_17, %c0_18] : memref<16x16xf32, #tpu.memory_space<vmem>>, vector<16x16xf32>
    tpu.vector_store %arg9[%c0_17, %c0_18], %26 {strides = array<i32>} : memref<16x16xf32, #tpu.memory_space<vmem>>, vector<16x16xf32>,
    return
  }
  func.func @transform_0(%arg0: i32) -> (i32, i32) {
    %c0_i32 = arith.constant 0 : i32
    %c0_i32_0 = arith.constant 0 : i32
    return %arg0, %c0_i32 : i32, i32
  }
  func.func @transform_1(%arg0: i32) -> (i32, i32) {
    %c0_i32 = arith.constant 0 : i32
    %c0_i32_0 = arith.constant 0 : i32
    return %arg0, %c0_i32 : i32, i32
  }
  func.func @transform_2(%arg0: i32) -> (i32, i32) {
    %c0_i32 = arith.constant 0 : i32
    %c0_i32_0 = arith.constant 0 : i32
    %c0_i32_1 = arith.constant 0 : i32
    return %c0_i32, %c0_i32_0 : i32, i32
  }
  func.func @transform_3(%arg0: i32) -> (i32, i32) {
    %c0_i32 = arith.constant 0 : i32
    %c0_i32_0 = arith.constant 0 : i32
    %c0_i32_1 = arith.constant 0 : i32
    return %c0_i32, %c0_i32_0 : i32, i32
  }
  func.func @transform_4(%arg0: i32) -> (i32, i32) {
    %c0_i32 = arith.constant 0 : i32
    %c0_i32_0 = arith.constant 0 : i32
    %c0_i32_1 = arith.constant 0 : i32
    return %c0_i32, %c0_i32_0 : i32, i32
  }
  func.func @transform_5(%arg0: i32) -> (i32, i32) {
    %c0_i32 = arith.constant 0 : i32
    %c0_i32_0 = arith.constant 0 : i32
    %c0_i32_1 = arith.constant 0 : i32
    return %c0_i32, %c0_i32_0 : i32, i32
  }
  func.func @transform_6(%arg0: i32) -> (i32, i32) {
    %c0_i32 = arith.constant 0 : i32
    %c0_i32_0 = arith.constant 0 : i32
    %c0_i32_1 = arith.constant 0 : i32
    return %c0_i32, %c0_i32_0 : i32, i32
  }
  func.func @transform_7(%arg0: i32) -> (i32, i32) {
    %c0_i32 = arith.constant 0 : i32
    %c0_i32_0 = arith.constant 0 : i32
    %c0_i32_1 = arith.constant 0 : i32
    return %c0_i32, %c0_i32_0 : i32, i32
  }
  func.func @transform_8(%arg0: i32) -> (i32, i32) {
    %c0_i32 = arith.constant 0 : i32
    %c0_i32_0 = arith.constant 0 : i32
    return %arg0, %c0_i32 : i32, i32
  }
}

</mosaic_0001>

<llo_original>
// kernel: ar_step_forward.9
$region0: #{ar_step_forward.9}
  #allocation0 [shape = 'u32[]', space=smem, size = 0x4, offset = 0x4, fixed_abs, tag = 'smem constant byte address 0x4 - core index']
  #allocation1 [shape = 'u32[72,128]{1,0:T(1,128)}', space=vmem, size = 0x9000, scoped, tag = 'internal scratch']
  #allocation2 [shape = 'f32[1,2,32]{2,1,0:T(2,128)}', space=vmem, size = 0x400, scoped, tag = 'scratch operand']
  #allocation3 [shape = 'f32[1,2,32]{2,1,0:T(2,128)}', space=vmem, size = 0x400, scoped, tag = 'scratch operand']
  %s0 = inlined_call_operand.vmem [shape: bf16[8,2,128], index: 0, kind: input, shape index: {}]
  %s1 = inlined_call_operand.vmem [shape: bf16[32,128], index: 1, kind: input, shape index: {}]
  %s2 = inlined_call_operand.vmem [shape: bf16[8,2,32], index: 2, kind: output, shape index: {}]
  %s3 = sld [smem:[#allocation0]]
  $region45: #{ar_step_forward.9} parent=0
    _
  %s5 = ssub.s32 1, %s3
  %s6 = scalar_select 0, %s5, %s3
  loop: start=0, step=1, limit=10
  $region2: #{ar_step_forward.9} parent=0 // loop_pre_header
    _
  $region3: #{ar_step_forward.9} parent=0 // loop_header
    %s8 = sphi 0, %s12
    %p9 = scmp.ge.s32.totalorder %s8, 10
    %s15 = sphi 0, %s27
    %s16 = sphi 0, %s23
    %s17 = sphi 0, %s15
    %s18 = sphi 0, %s16
    %s19 = sphi 0, %s17
    %s20 = sphi 0, %s18
    %s32 = sphi 0, %s34
    %s35 = sphi 0, %s32
    %s36 = sphi 0, %s35
    %s52 = sphi 0, %s36
    %s56 = sphi 0, %s56
    %s58 = sphi 0, %s56
    %s59 = sphi 0, %s58
    %s73 = sphi 0, %s59
    %s81 = sphi 0, %s83
    %s84 = sphi 0, %s81
    %s85 = sphi 0, %s84
    %s101 = sphi 0, %s85
  $region4: #{ar_step_forward.9} parent=0 // loop_header_branch
    %11 = sbr.rel (%p9) target = $region8
  $region5: #{ar_step_forward.9} parent=0 // loop_body
    %s13 = ssub.s32 %s8, 1
    %s14 = ssub.s32 %s8, 2
    %s21 = sadd.s32 1, %s16
    %p22 = scmp.ge.s32.totalorder %s21, 8
    %s23 = scalar_select %p22, 0, %s21
    %s24 = sadd.s32 1, %s15
    %s25 = scalar_select %p22, %s24, %s15
    %p26 = scmp.ge.s32.totalorder %s25, 1
    %s27 = scalar_select %p26, 0, %s25
    %s28 = ssub.s32 %s16, %s23
    %s29 = ssub.s32 %s15, %s27
    %s30 = sor.u32 %s28, %s29
    %p31 = scmp.eq.s32.totalorder %s30, 0
    %s33 = sadd.s32 %s32, 1
    %s34 = scalar_select %p31, %s32, %s33
    %p37 = pneg %p31
    %p38 = scmp.eq.s32.totalorder %s8, 7
    %p39 = por %p37, %p38
    %p40 = scmp.ne.s32.totalorder %s32, %s35
    %p41 = scmp.eq.s32.totalorder %s8, 0
    %p42 = por %p40, %p41
    %p43 = scmp.ne.s32.totalorder %s32, %s35
    %p44 = scmp.eq.s32.totalorder %s13, 7
    %p45 = por %p43, %p44
    %p46 = scmp.ne.s32.totalorder %s35, %s36
    %p47 = scmp.eq.s32.totalorder %s13, 0
    %p48 = por %p46, %p47
    %p49 = scmp.ne.s32.totalorder %s35, %s36
    %p50 = scmp.eq.s32.totalorder %s14, 7
    %p51 = por %p49, %p50
    %p53 = scmp.ne.s32.totalorder %s36, %s52
    %p54 = scmp.eq.s32.totalorder %s14, 0
    %p55 = por %p53, %p54
    %s57 = sadd.s32 %s56, 1
    %p60 = scmp.eq.s32.totalorder %s8, 7
    %p61 = scmp.ne.s32.totalorder %s56, %s58
    %p62 = scmp.eq.s32.totalorder %s8, 0
    %p63 = por %p61, %p62
    %p64 = scmp.ne.s32.totalorder %s56, %s58
    %p65 = scmp.eq.s32.totalorder %s13, 7
    %p66 = por %p64, %p65
    %p67 = scmp.ne.s32.totalorder %s58, %s59
    %p68 = scmp.eq.s32.totalorder %s13, 0
    %p69 = por %p67, %p68
    %p70 = scmp.ne.s32.totalorder %s58, %s59
    %p71 = scmp.eq.s32.totalorder %s14, 7
    %p72 = por %p70, %p71
    %p74 = scmp.ne.s32.totalorder %s59, %s73
    %p75 = scmp.eq.s32.totalorder %s14, 0
    %p76 = por %p74, %p75
    %s77 = ssub.s32 %s16, %s23
    %s78 = ssub.s32 %s15, %s27
    %s79 = sor.u32 %s77, %s78
    %p80 = scmp.eq.s32.totalorder %s79, 0
    %s82 = sadd.s32 %s81, 1
    %s83 = scalar_select %p80, %s81, %s82
    %p86 = pneg %p80
    %p87 = scmp.eq.s32.totalorder %s8, 7
    %p88 = por %p86, %p87
    %p89 = scmp.ne.s32.totalorder %s81, %s84
    %p90 = scmp.eq.s32.totalorder %s8, 0
    %p91 = por %p89, %p90
    %p92 = scmp.ne.s32.totalorder %s81, %s84
    %p93 = scmp.eq.s32.totalorder %s13, 7
    %p94 = por %p92, %p93
    %p95 = scmp.ne.s32.totalorder %s84, %s85
    %p96 = scmp.eq.s32.totalorder %s13, 0
    %p97 = por %p95, %p96
    %p98 = scmp.ne.s32.totalorder %s84, %s85
    %p99 = scmp.eq.s32.totalorder %s14, 7
    %p100 = por %p98, %p99
    %p102 = scmp.ne.s32.totalorder %s85, %s101
    %p103 = scmp.eq.s32.totalorder %s14, 0
    %p104 = por %p102, %p103
    %p105 = scmp.le.s32.totalorder 1, %s8
    %p106 = scmp.lt.s32.totalorder %s8, 9
    %p107 = pnand %p105, %p106
    %p108 = pneg %p107
    // Predicated region
    $region9: #{ar_step_forward.9} parent=5 // pred_check
      _
    $region10: #{ar_step_forward.9} parent=5 // pred_check_branch
      %110 = sbr.rel (%p107) target = $region12
    $region11: #{ar_step_forward.9} parent=5 // pred_region
      %s111 = ssub.s32 %s8, 1
      // Predicated region
      $region13: #{ar_step_forward.9} parent=11 // pred_check
        %p112 = pneg %p69
      $region14: #{ar_step_forward.9} parent=11 // pred_check_branch
        %114 = sbr.rel (%p112) target = $region16
      $region15: #{ar_step_forward.9} parent=11 // pred_region
        _
      $region16: #{ar_step_forward.9} parent=11 // pred_fallthru
        _
    $region12: #{ar_step_forward.9} parent=5 // pred_fallthru
      _
    %p115 = scmp.lt.s32.totalorder %s8, 8
    // Predicated region
    $region17: #{ar_step_forward.9} parent=5 // pred_check
      %p116 = pneg %p115
    $region18: #{ar_step_forward.9} parent=5 // pred_check_branch
      %118 = sbr.rel (%p116) target = $region20
    $region19: #{ar_step_forward.9} parent=5 // pred_region
      // Predicated region
      $region21: #{ar_step_forward.9} parent=19 // pred_check
        %p119 = pneg %p42
      $region22: #{ar_step_forward.9} parent=19 // pred_check_branch
        %121 = sbr.rel (%p119) target = $region24
      $region23: #{ar_step_forward.9} parent=19 // pred_region
        %p122 = scmp.lt.s32.totalorder %s16, 7
        %s123 = scalar_select %p122, %s16, 7
        %p124 = scmp.lt.s32.totalorder %s15, 0
        %s125 = scalar_select %p124, %s15, 0
        %s126 = sadd.s32 %s125, %s123
        %s127 = scalar_lea.vmem %s0, %s126
      $region24: #{ar_step_forward.9} parent=19 // pred_fallthru
        _
    $region20: #{ar_step_forward.9} parent=5 // pred_fallthru
      _
    %p128 = scmp.le.s32.totalorder 1, %s8
    %p129 = scmp.lt.s32.totalorder %s8, 9
    %p130 = pnand %p128, %p129
    %p131 = pneg %p130
    // Predicated region
    $region25: #{ar_step_forward.9} parent=5 // pred_check
      _
    $region26: #{ar_step_forward.9} parent=5 // pred_check_branch
      %133 = sbr.rel (%p130) target = $region28
    $region27: #{ar_step_forward.9} parent=5 // pred_region
      %s134 = ssub.s32 %s8, 1
      %p135 = scmp.lt.s32.totalorder %s18, 7
      %s136 = scalar_select %p135, %s18, 7
      %p137 = scmp.lt.s32.totalorder %s17, 0
      %s138 = scalar_select %p137, %s17, 0
      %s139 = sadd.s32 %s138, %s136
      %s140 = scalar_lea.vmem %s0, %s139
      %p141 = pneg %p48
      %p142 = pneg %p45
      %p143 = pneg %p69
      %p144 = pneg %p66
      %p145 = pneg %p97
      %p146 = pneg %p94
      %p147 = scmp.lt.s32.totalorder %s18, 7
      %s148 = scalar_select %p147, %s18, 7
      %p149 = scmp.lt.s32.totalorder %s17, 0
      %s150 = scalar_select %p149, %s17, 0
      %s151 = sadd.s32 %s150, %s148
      %s152 = scalar_lea.vmem %s2, %s151
      %p153 = scmp.lt.s32.totalorder %s18, 7
      %s154 = scalar_select %p153, %s18, 7
      %p155 = scmp.lt.s32.totalorder %s17, 0
      %s156 = scalar_select %p155, %s17, 0
      %s157 = sadd.s32 %s156, %s154
      %s158 = scalar_lea.vmem %s0, %s157
      %p159 = scmp.lt.s32.totalorder %s18, 7
      %s160 = scalar_select %p159, %s18, 7
      %p161 = scmp.lt.s32.totalorder %s17, 0
      %s162 = scalar_select %p161, %s17, 0
      %s163 = sadd.s32 %s162, %s160
      %s164 = scalar_lea.vmem %s2, %s163
      %p166 = scmp.eq.s32.totalorder %s18, 0
      // Predicated region
      $region29: #{ar_step_forward.9} parent=27 // pred_check
        %p167 = pneg %p166
      $region30: #{ar_step_forward.9} parent=27 // pred_check_branch
        %169 = sbr.rel (%p167) target = $region32
      $region31: #{ar_step_forward.9} parent=27 // pred_region
        %vm170 = vcmask 254976
        %171 = vst.msk [vmem:[#allocation2] sm:$0x3] %vm170, 0.0
        %172 = vst.msk [vmem:[#allocation3] sm:$0x3] %vm170, 0.0
      $region32: #{ar_step_forward.9} parent=27 // pred_fallthru
        _
      %v173 = vld [vmem:[#allocation2] sm:$0x3]
      %v174 = vld [vmem:[#allocation3] sm:$0x3]
      %v175 = vld [vmem:[%s158] sm:$0x1]
      %v176 = vunpack.c.l.bf16 %v175
      %v177 = vpack.c.bf16 %v173, %v173
      %v178 = vld [vmem:[%s1] sm:$0xf]
      %v179 = vld [vmem:[%s1 + $0x4] sm:$0xf]
      %v180 = vld [vmem:[%s1 + $0x8] sm:$0xf]
      %v181 = vld [vmem:[%s1 + $0xc] sm:$0xf]
      %v186 = vunpack.c.l.b16 %v178
      %v187 = vunpack.c.l.b16 %v179
      %v188 = vunpack.c.l.b16 %v180
      %v189 = vunpack.c.l.b16 %v181
      %v190 = vpack.c.b16 %v187, %v186
      %v191 = vpack.c.b16 %v189, %v188
      %vm194 = vcmask 261120
      %v196 = vsel %vm194, %v177, 0
      %198 = vmatpush.bf16.msra.mxu0 0
      %199 = vmatpush.bf16.msra.mxu0 0
      %200 = vmatpush.bf16.msra.mxu0 0
      %201 = vmatpush.bf16.msra.mxu0 0
      %202 = vmatpush.bf16.msra.mxu0 0
      %203 = vmatpush.bf16.msra.mxu0 0
      %204 = vmatpush.bf16.msra.mxu0 %v191
      %205 = vmatpush.bf16.msra.mxu0 %v190
      %206 = vmatmul.bf16.gmra.mxu0 %v196
      %v207 = vpop.f32.mrf.mxu0
      %v208 = vadd.f32 0.0, %v207
      %v209 = vpop.f32.mrf.mxu0
      %210 = vdwg.mxu0
      %v211 = vadd.f32 %v176, %v208
      %v212 = vxor.u32 %v211, 2147483648
      %v213 = vmul.f32 %v212, 1.442695
      %v214 = vpow.pop %v213
      %v215 = vadd.f32 %v214, 1.0
      %v216 = vrcp.pop %v215
      %v217 = vmul.f32 %v215, %v216
      %v218 = vsub.f32 1.0, %v217
      %v219 = vmul.f32 %v216, %v218
      %v220 = vadd.f32 %v216, %v219
      %vm221 = vweird.f32 %v215
      %vm222 = vweird.f32 %v216
      %vm223 = vmor %vm221, %vm222
      %v224 = vsel %vm223, %v216, %v220
      %v225 = vand.u32 2147483647, %v215
      %vm226 = vcmp.eq.f32.partialorder %v225, 8.507059e+37
      %v227 = vand.u32 %v215, 2147483648
      %v228 = vor.u32 1.1754944e-38, %v227
      %v229 = vsel %vm226, %v228, %v224
      %v230 = vmul.f32 1.0, %v229
      %v231 = vtanh.pop %v211
      %233 = vrot.lane.b32.xlu0 %v174, 32
      %v234 = vpop.permute.xlu0 %233
      %v236 = vmul.f32 %v230, %v234
      %238 = vrot.lane.b32.xlu0 %v231, 64
      %v239 = vpop.permute.xlu0 %238
      %v241 = vmul.f32 %v230, %v239
      %243 = vrot.lane.b32.xlu0 %v241, 32
      %v244 = vpop.permute.xlu0 %243
      %v246 = vadd.f32 %v236, %v244
      %v247 = vtanh.pop %v246
      %249 = vrot.lane.b32.xlu0 %v247, 64
      %v250 = vpop.permute.xlu0 %249
      %v252 = vmul.f32 %v230, %v250
      %254 = vst [vmem:[#allocation1] ss:$4 sm:$0xff] %v252
      %v255 = vld.sshfl [vmem:[#allocation1] sm:$0xff pattern:$0x73625140]
      %256 = vrot.lane.b32.xlu0 %v255, 32
      %v257 = vpop.permute.xlu0 %256
      %vm259 = vcmask 254976
      %260 = vst.msk [vmem:[#allocation2] sm:$0x3] %vm259, %v257
      %262 = vst [vmem:[#allocation1] ss:$4 sm:$0xff] %v246
      %v263 = vld.sshfl [vmem:[#allocation1] sm:$0xff pattern:$0x73625140]
      %264 = vrot.lane.b32.xlu0 %v263, 96
      %v265 = vpop.permute.xlu0 %264
      %267 = vst.msk [vmem:[#allocation3] sm:$0x3] %vm259, %v265
      %v268 = vpack.c.bf16 %v252, %v252
      %v270 = vrot.slane %v268, 3
      %vm271 = vcmask 1040384
      %v274 = vsel %vm271, %v268, %v270
      %276 = vrot.lane.b32.xlu0 %v274, 32
      %v277 = vpop.permute.xlu0 %276
      %vm279 = vcmask 253952
      %280 = vst.msk [vmem:[%s164] sm:$0x1] %vm279, %v277
      %p281 = scmp.lt.s32.totalorder %s18, 7
      %s282 = scalar_select %p281, %s18, 7
      %p283 = scmp.lt.s32.totalorder %s17, 0
      %s284 = scalar_select %p283, %s17, 0
      %s285 = sadd.s32 %s284, %s282
      %s286 = scalar_lea.vmem %s2, %s285
      // Predicated region
      $region33: #{ar_step_forward.9} parent=27 // pred_check
        %p287 = pneg %p94
      $region34: #{ar_step_forward.9} parent=27 // pred_check_branch
        %289 = sbr.rel (%p287) target = $region36
      $region35: #{ar_step_forward.9} parent=27 // pred_region
        _
      $region36: #{ar_step_forward.9} parent=27 // pred_fallthru
        _
    $region28: #{ar_step_forward.9} parent=5 // pred_fallthru
      _
    %p290 = scmp.le.s32.totalorder 2, %s8
    // Predicated region
    $region37: #{ar_step_forward.9} parent=5 // pred_check
      %p291 = pneg %p290
    $region38: #{ar_step_forward.9} parent=5 // pred_check_branch
      %293 = sbr.rel (%p291) target = $region40
    $region39: #{ar_step_forward.9} parent=5 // pred_region
      %s294 = ssub.s32 %s8, 2
      // Predicated region
      $region41: #{ar_step_forward.9} parent=39 // pred_check
        %p295 = pneg %p100
      $region42: #{ar_step_forward.9} parent=39 // pred_check_branch
        %297 = sbr.rel (%p295) target = $region44
      $region43: #{ar_step_forward.9} parent=39 // pred_region
        %p298 = scmp.lt.s32.totalorder %s20, 7
        %s299 = scalar_select %p298, %s20, 7
        %p300 = scmp.lt.s32.totalorder %s19, 0
        %s301 = scalar_select %p300, %s19, 0
        %s302 = sadd.s32 %s301, %s299
        %s303 = scalar_lea.vmem %s2, %s302
      $region44: #{ar_step_forward.9} parent=39 // pred_fallthru
        _
    $region40: #{ar_step_forward.9} parent=5 // pred_fallthru
      _
  $region6: #{ar_step_forward.9} parent=0 // loop_footer
    %s12 = sadd.s32 1, %s8
  $region7: #{ar_step_forward.9} parent=0 // loop_footer_branch
    %7 = sbr.rel target = $region3
  $region8: #{ar_step_forward.9} parent=0 // loop_exit
    _

// kernel: ar_step_forward.8
$region0: #{ar_step_forward.8}
  #allocation0 [shape = 'u32[]', space=smem, size = 0x4, offset = 0x4, fixed_abs, tag = 'smem constant byte address 0x4 - core index']
  #allocation1 [shape = 'u32[72,128]{1,0:T(1,128)}', space=vmem, size = 0x9000, scoped, tag = 'internal scratch']
  %s0 = inlined_call_operand.vmem [shape: bf16[16,8], index: 0, kind: input, shape index: {}]
  %s1 = inlined_call_operand.vmem [shape: bf16[8,128], index: 1, kind: input, shape index: {}]
  %s2 = inlined_call_operand.vmem [shape: f32[1,128], index: 2, kind: input, shape index: {}]
  %s3 = inlined_call_operand.vmem [shape: bf16[16,128], index: 3, kind: output, shape index: {}]
  %s4 = sld [smem:[#allocation0]]
  $region22: #{ar_step_forward.8} parent=0
    _
  %s6 = ssub.s32 1, %s4
  %s7 = scalar_select 0, %s6, %s4
  // Predicated region
  $region2: #{ar_step_forward.8} parent=0 // pred_check
    _
  $region3: #{ar_step_forward.8} parent=0 // pred_check_branch
    %9 = sbr.rel (0) target = $region5
  $region4: #{ar_step_forward.8} parent=0 // pred_region
    _
  $region5: #{ar_step_forward.8} parent=0 // pred_fallthru
    _
  // Predicated region
  $region6: #{ar_step_forward.8} parent=0 // pred_check
    _
  $region7: #{ar_step_forward.8} parent=0 // pred_check_branch
    %11 = sbr.rel (0) target = $region9
  $region8: #{ar_step_forward.8} parent=0 // pred_region
    _
  $region9: #{ar_step_forward.8} parent=0 // pred_fallthru
    _
  // Predicated region
  $region10: #{ar_step_forward.8} parent=0 // pred_check
    _
  $region11: #{ar_step_forward.8} parent=0 // pred_check_branch
    %13 = sbr.rel (0) target = $region13
  $region12: #{ar_step_forward.8} parent=0 // pred_region
    _
  $region13: #{ar_step_forward.8} parent=0 // pred_fallthru
    _
  %v15 = vld [vmem:[%s0] sm:$0xf]
  %v16 = vld [vmem:[%s0 + $0x4] sm:$0xf]
  %v17 = vld [vmem:[%s1] sm:$0xf]
  %v18 = vld [vmem:[%s2] sm:$0x1]
  %v20 = vperm.slane %v18, 0
  %v24 = vunpack.c.l.b16 %v15
  %v25 = vunpack.c.l.b16 %v16
  %v26 = vpack.c.b16 %v25, %v24
  %vm27 = vcmask 64512
  %v29 = vsel %vm27, %v26, 0
  %vm31 = vcmask 1043456
  %v33 = vsel %vm31, %v17, 0
  %35 = vmatpush.bf16.msra.mxu0 0
  %36 = vmatpush.bf16.msra.mxu0 0
  %37 = vmatpush.bf16.msra.mxu0 0
  %38 = vmatpush.bf16.msra.mxu0 0
  %39 = vmatpush.bf16.msra.mxu0 0
  %40 = vmatpush.bf16.msra.mxu0 0
  %41 = vmatpush.bf16.msra.mxu0 0
  %42 = vmatpush.bf16.msra.mxu0 %v33
  %43 = vmatmul.bf16.gmra.mxu0 %v29
  %v44 = vpop.f32.mrf.mxu0
  %v45 = vadd.f32 %v20, %v44
  %v46 = vpop.f32.mrf.mxu0
  %v47 = vadd.f32 %v20, %v46
  %48 = vdwg.mxu0
  %v49 = vpack.c.bf16 %v45, %v45
  %v50 = vpack.c.bf16 %v47, %v47
  %51 = vst [vmem:[%s3] sm:$0xf] %v49
  %52 = vst [vmem:[%s3 + $0x4] sm:$0xf] %v50
  // Predicated region
  $region14: #{ar_step_forward.8} parent=0 // pred_check
    _
  $region15: #{ar_step_forward.8} parent=0 // pred_check_branch
    %54 = sbr.rel (0) target = $region17
  $region16: #{ar_step_forward.8} parent=0 // pred_region
    _
  $region17: #{ar_step_forward.8} parent=0 // pred_fallthru
    _
  // Predicated region
  $region18: #{ar_step_forward.8} parent=0 // pred_check
    _
  $region19: #{ar_step_forward.8} parent=0 // pred_check_branch
    %56 = sbr.rel (0) target = $region21
  $region20: #{ar_step_forward.8} parent=0 // pred_region
    _
  $region21: #{ar_step_forward.8} parent=0 // pred_fallthru
    _

// kernel: ar_step_forward.10
$region0: #{ar_step_forward.10}
  #allocation0 [shape = 'u32[]', space=smem, size = 0x4, offset = 0x4, fixed_abs, tag = 'smem constant byte address 0x4 - core index']
  #allocation1 [shape = 'u32[72,128]{1,0:T(1,128)}', space=vmem, size = 0x9000, scoped, tag = 'internal scratch']
  %s0 = inlined_call_operand.vmem [shape: bf16[16,32], index: 0, kind: input, shape index: {}]
  %s1 = inlined_call_operand.vmem [shape: bf16[32,16], index: 1, kind: input, shape index: {}]
  %s2 = inlined_call_operand.vmem [shape: f32[1,16], index: 2, kind: input, shape index: {}]
  %s3 = inlined_call_operand.vmem [shape: bf16[16,16], index: 3, kind: output, shape index: {}]
  %s4 = sld [smem:[#allocation0]]
  $region22: #{ar_step_forward.10} parent=0
    _
  %s6 = ssub.s32 1, %s4
  %s7 = scalar_select 0, %s6, %s4
  // Predicated region
  $region2: #{ar_step_forward.10} parent=0 // pred_check
    _
  $region3: #{ar_step_forward.10} parent=0 // pred_check_branch
    %9 = sbr.rel (0) target = $region5
  $region4: #{ar_step_forward.10} parent=0 // pred_region
    _
  $region5: #{ar_step_forward.10} parent=0 // pred_fallthru
    _
  // Predicated region
  $region6: #{ar_step_forward.10} parent=0 // pred_check
    _
  $region7: #{ar_step_forward.10} parent=0 // pred_check_branch
    %11 = sbr.rel (0) target = $region9
  $region8: #{ar_step_forward.10} parent=0 // pred_region
    _
  $region9: #{ar_step_forward.10} parent=0 // pred_fallthru
    _
  // Predicated region
  $region10: #{ar_step_forward.10} parent=0 // pred_check
    _
  $region11: #{ar_step_forward.10} parent=0 // pred_check_branch
    %13 = sbr.rel (0) target = $region13
  $region12: #{ar_step_forward.10} parent=0 // pred_region
    _
  $region13: #{ar_step_forward.10} parent=0 // pred_fallthru
    _
  %v15 = vld [vmem:[%s0] sm:$0xf]
  %v16 = vld [vmem:[%s0 + $0x4] sm:$0xf]
  %v17 = vld [vmem:[%s1] sm:$0xf]
  %v18 = vld [vmem:[%s1 + $0x4] sm:$0xf]
  %v19 = vld [vmem:[%s1 + $0x8] sm:$0xf]
  %v20 = vld [vmem:[%s1 + $0xc] sm:$0xf]
  %v21 = vld [vmem:[%s2] sm:$0x1]
  %v23 = vperm.slane %v21, 0
  %v27 = vunpack.c.l.b16 %v15
  %v28 = vunpack.c.l.b16 %v16
  %v29 = vpack.c.b16 %v28, %v27
  %v34 = vunpack.c.l.b16 %v17
  %v35 = vunpack.c.l.b16 %v18
  %v36 = vunpack.c.l.b16 %v19
  %v37 = vunpack.c.l.b16 %v20
  %v38 = vpack.c.b16 %v35, %v34
  %v39 = vpack.c.b16 %v37, %v36
  %vm42 = vcmask 261120
  %v44 = vsel %vm42, %v29, 0
  %46 = vmatpush.bf16.msra.mxu0 0
  %47 = vmatpush.bf16.msra.mxu0 0
  %48 = vmatpush.bf16.msra.mxu0 0
  %49 = vmatpush.bf16.msra.mxu0 0
  %50 = vmatpush.bf16.msra.mxu0 0
  %51 = vmatpush.bf16.msra.mxu0 0
  %52 = vmatpush.bf16.msra.mxu0 %v39
  %53 = vmatpush.bf16.msra.mxu0 %v38
  %54 = vmatmul.bf16.gmra.mxu0 %v44
  %v55 = vpop.f32.mrf.mxu0
  %v56 = vadd.f32 %v23, %v55
  %v57 = vpop.f32.mrf.mxu0
  %v58 = vadd.f32 %v23, %v57
  %59 = vdwg.mxu0
  %v60 = vpack.c.bf16 %v56, %v56
  %v61 = vpack.c.bf16 %v58, %v58
  %vm62 = vcmask 125952
  %63 = vst.msk [vmem:[%s3] sm:$0xf] %vm62, %v60
  %64 = vst.msk [vmem:[%s3 + $0x4] sm:$0xf] %vm62, %v61
  // Predicated region
  $region14: #{ar_step_forward.10} parent=0 // pred_check
    _
  $region15: #{ar_step_forward.10} parent=0 // pred_check_branch
    %66 = sbr.rel (0) target = $region17
  $region16: #{ar_step_forward.10} parent=0 // pred_region
    _
  $region17: #{ar_step_forward.10} parent=0 // pred_fallthru
    _
  // Predicated region
  $region18: #{ar_step_forward.10} parent=0 // pred_check
    _
  $region19: #{ar_step_forward.10} parent=0 // pred_check_branch
    %68 = sbr.rel (0) target = $region21
  $region20: #{ar_step_forward.10} parent=0 // pred_region
    _
  $region21: #{ar_step_forward.10} parent=0 // pred_fallthru
    _

// kernel: ar_step_forward.11
$region0: #{ar_step_forward.11}
  #allocation0 [shape = 'u32[]', space=smem, size = 0x4, offset = 0x4, fixed_abs, tag = 'smem constant byte address 0x4 - core index']
  #allocation1 [shape = 'u32[72,128]{1,0:T(1,128)}', space=vmem, size = 0x9000, scoped, tag = 'internal scratch']
  %s0 = inlined_call_operand.vmem [shape: bf16[12,64], index: 0, kind: input, shape index: {}]
  %s1 = inlined_call_operand.vmem [shape: bf16[64,32], index: 1, kind: input, shape index: {}]
  %s2 = inlined_call_operand.vmem [shape: f32[1,32], index: 2, kind: input, shape index: {}]
  %s3 = inlined_call_operand.vmem [shape: bf16[12,32], index: 3, kind: output, shape index: {}]
  %s4 = sld [smem:[#allocation0]]
  $region22: #{ar_step_forward.11} parent=0
    _
  %s6 = ssub.s32 1, %s4
  %s7 = scalar_select 0, %s6, %s4
  // Predicated region
  $region2: #{ar_step_forward.11} parent=0 // pred_check
    _
  $region3: #{ar_step_forward.11} parent=0 // pred_check_branch
    %9 = sbr.rel (0) target = $region5
  $region4: #{ar_step_forward.11} parent=0 // pred_region
    _
  $region5: #{ar_step_forward.11} parent=0 // pred_fallthru
    _
  // Predicated region
  $region6: #{ar_step_forward.11} parent=0 // pred_check
    _
  $region7: #{ar_step_forward.11} parent=0 // pred_check_branch
    %11 = sbr.rel (0) target = $region9
  $region8: #{ar_step_forward.11} parent=0 // pred_region
    _
  $region9: #{ar_step_forward.11} parent=0 // pred_fallthru
    _
  // Predicated region
  $region10: #{ar_step_forward.11} parent=0 // pred_check
    _
  $region11: #{ar_step_forward.11} parent=0 // pred_check_branch
    %13 = sbr.rel (0) target = $region13
  $region12: #{ar_step_forward.11} parent=0 // pred_region
    _
  $region13: #{ar_step_forward.11} parent=0 // pred_fallthru
    _
  %v15 = vld [vmem:[%s0] sm:$0xf]
  %v16 = vld [vmem:[%s0 + $0x4] sm:$0x3]
  %v17 = vld [vmem:[%s1] sm:$0xf]
  %v18 = vld [vmem:[%s1 + $0x4] sm:$0xf]
  %v19 = vld [vmem:[%s1 + $0x8] sm:$0xf]
  %v20 = vld [vmem:[%s1 + $0xc] sm:$0xf]
  %v21 = vld [vmem:[%s1 + $0x10] sm:$0xf]
  %v22 = vld [vmem:[%s1 + $0x14] sm:$0xf]
  %v23 = vld [vmem:[%s1 + $0x18] sm:$0xf]
  %v24 = vld [vmem:[%s1 + $0x1c] sm:$0xf]
  %v25 = vld [vmem:[%s2] sm:$0x1]
  %v27 = vperm.slane %v25, 0
  %v31 = vunpack.c.l.b16 %v15
  %v32 = vunpack.c.l.b16 %v16
  %v33 = vpack.c.b16 %v32, %v31
  %v42 = vunpack.c.l.b16 %v17
  %v43 = vunpack.c.l.b16 %v18
  %v44 = vunpack.c.l.b16 %v19
  %v45 = vunpack.c.l.b16 %v20
  %v46 = vunpack.c.l.b16 %v21
  %v47 = vunpack.c.l.b16 %v22
  %v48 = vunpack.c.l.b16 %v23
  %v49 = vunpack.c.l.b16 %v24
  %v50 = vpack.c.b16 %v43, %v42
  %v51 = vpack.c.b16 %v45, %v44
  %v52 = vpack.c.b16 %v47, %v46
  %v53 = vpack.c.b16 %v49, %v48
  %vm58 = vcmask 523264
  %v60 = vsel %vm58, %v33, 0
  %62 = vmatpush.bf16.msra.mxu0 0
  %63 = vmatpush.bf16.msra.mxu0 0
  %64 = vmatpush.bf16.msra.mxu0 0
  %65 = vmatpush.bf16.msra.mxu0 0
  %66 = vmatpush.bf16.msra.mxu0 %v53
  %67 = vmatpush.bf16.msra.mxu0 %v52
  %68 = vmatpush.bf16.msra.mxu0 %v51
  %69 = vmatpush.bf16.msra.mxu0 %v50
  %70 = vmatmul.bf16.gmra.mxu0 %v60
  %v71 = vpop.f32.mrf.mxu0
  %v72 = vadd.f32 %v27, %v71
  %v73 = vpop.f32.mrf.mxu0
  %v74 = vadd.f32 %v27, %v73
  %75 = vdwg.mxu0
  %v76 = vpack.c.bf16 %v72, %v72
  %v77 = vpack.c.bf16 %v74, %v74
  %vm78 = vcmask 257024
  %79 = vst.msk [vmem:[%s3] sm:$0xf] %vm78, %v76
  %vm80 = vcmask 254976
  %81 = vst.msk [vmem:[%s3 + $0x4] sm:$0x3] %vm80, %v77
  // Predicated region
  $region14: #{ar_step_forward.11} parent=0 // pred_check
    _
  $region15: #{ar_step_forward.11} parent=0 // pred_check_branch
    %83 = sbr.rel (0) target = $region17
  $region16: #{ar_step_forward.11} parent=0 // pred_region
    _
  $region17: #{ar_step_forward.11} parent=0 // pred_fallthru
    _
  // Predicated region
  $region18: #{ar_step_forward.11} parent=0 // pred_check
    _
  $region19: #{ar_step_forward.11} parent=0 // pred_check_branch
    %85 = sbr.rel (0) target = $region21
  $region20: #{ar_step_forward.11} parent=0 // pred_region
    _
  $region21: #{ar_step_forward.11} parent=0 // pred_fallthru
    _

// kernel: ar_step_forward.13
$region0: #{ar_step_forward.13}
  #allocation0 [shape = 'u32[]', space=smem, size = 0x4, offset = 0x4, fixed_abs, tag = 'smem constant byte address 0x4 - core index']
  #allocation1 [shape = 'u32[72,128]{1,0:T(1,128)}', space=vmem, size = 0x9000, scoped, tag = 'internal scratch']
  #allocation2 [shape = 'f32[1,1]{1,0:T(1,128)S(1)}', space=vmem, size = 0x200, scoped, tag = 'scoped memory for ar_step_forward.13']
  %s0 = inlined_call_operand.vmem [shape: bf16[16,32], index: 0, kind: input, shape index: {}]
  %s1 = inlined_call_operand.vmem [shape: bf16[16,16], index: 1, kind: input, shape index: {}]
  %s2 = inlined_call_operand.vmem [shape: bf16[32,128], index: 2, kind: input, shape index: {}]
  %s3 = inlined_call_operand.vmem [shape: bf16[16,128], index: 3, kind: input, shape index: {}]
  %s4 = inlined_call_operand.vmem [shape: f32[1,128], index: 4, kind: input, shape index: {}]
  %s5 = inlined_call_operand.vmem [shape: bf16[32,1], index: 5, kind: input, shape index: {}]
  %s6 = inlined_call_operand.vmem [shape: bf16[16,1], index: 6, kind: input, shape index: {}]
  %s7 = inlined_call_operand.<no memory space> [shape: f32[1,1], index: 7, kind: input, shape index: {}]
  %s8 = inlined_call_operand.vmem [shape: bf16[16,128], index: 8, kind: output, shape index: {0}]
  %s9 = inlined_call_operand.vmem [shape: f32[16,1], index: 9, kind: output, shape index: {1}]
  %10 = xla_tuple %s8, %s9
  %s11 = sld [smem:[#allocation0]]
  $region50: #{ar_step_forward.13} parent=0
    _
  %s13 = ssub.s32 1, %s11
  %s14 = scalar_select 0, %s13, %s11
  %v15 = vstv %s7
  %16 = vst [vmem:[#allocation2] sm:$0x1] %v15
  // Predicated region
  $region2: #{ar_step_forward.13} parent=0 // pred_check
    _
  $region3: #{ar_step_forward.13} parent=0 // pred_check_branch
    %18 = sbr.rel (0) target = $region5
  $region4: #{ar_step_forward.13} parent=0 // pred_region
    _
  $region5: #{ar_step_forward.13} parent=0 // pred_fallthru
    _
  // Predicated region
  $region6: #{ar_step_forward.13} parent=0 // pred_check
    _
  $region7: #{ar_step_forward.13} parent=0 // pred_check_branch
    %20 = sbr.rel (0) target = $region9
  $region8: #{ar_step_forward.13} parent=0 // pred_region
    _
  $region9: #{ar_step_forward.13} parent=0 // pred_fallthru
    _
  // Predicated region
  $region10: #{ar_step_forward.13} parent=0 // pred_check
    _
  $region11: #{ar_step_forward.13} parent=0 // pred_check_branch
    %22 = sbr.rel (0) target = $region13
  $region12: #{ar_step_forward.13} parent=0 // pred_region
    _
  $region13: #{ar_step_forward.13} parent=0 // pred_fallthru
    _
  // Predicated region
  $region14: #{ar_step_forward.13} parent=0 // pred_check
    _
  $region15: #{ar_step_forward.13} parent=0 // pred_check_branch
    %24 = sbr.rel (0) target = $region17
  $region16: #{ar_step_forward.13} parent=0 // pred_region
    _
  $region17: #{ar_step_forward.13} parent=0 // pred_fallthru
    _
  // Predicated region
  $region18: #{ar_step_forward.13} parent=0 // pred_check
    _
  $region19: #{ar_step_forward.13} parent=0 // pred_check_branch
    %26 = sbr.rel (0) target = $region21
  $region20: #{ar_step_forward.13} parent=0 // pred_region
    _
  $region21: #{ar_step_forward.13} parent=0 // pred_fallthru
    _
  // Predicated region
  $region22: #{ar_step_forward.13} parent=0 // pred_check
    _
  $region23: #{ar_step_forward.13} parent=0 // pred_check_branch
    %28 = sbr.rel (0) target = $region25
  $region24: #{ar_step_forward.13} parent=0 // pred_region
    _
  $region25: #{ar_step_forward.13} parent=0 // pred_fallthru
    _
  // Predicated region
  $region26: #{ar_step_forward.13} parent=0 // pred_check
    _
  $region27: #{ar_step_forward.13} parent=0 // pred_check_branch
    %30 = sbr.rel (0) target = $region29
  $region28: #{ar_step_forward.13} parent=0 // pred_region
    _
  $region29: #{ar_step_forward.13} parent=0 // pred_fallthru
    _
  // Predicated region
  $region30: #{ar_step_forward.13} parent=0 // pred_check
    _
  $region31: #{ar_step_forward.13} parent=0 // pred_check_branch
    %32 = sbr.rel (0) target = $region33
  $region32: #{ar_step_forward.13} parent=0 // pred_region
    _
  $region33: #{ar_step_forward.13} parent=0 // pred_fallthru
    _
  %v34 = vld [vmem:[%s0] sm:$0xf]
  %v35 = vld [vmem:[%s0 + $0x4] sm:$0xf]
  %v36 = vld [vmem:[%s1] sm:$0xf]
  %v37 = vld [vmem:[%s1 + $0x4] sm:$0xf]
  %v38 = vld [vmem:[%s2] sm:$0xf]
  %v39 = vld [vmem:[%s2 + $0x4] sm:$0xf]
  %v40 = vld [vmem:[%s2 + $0x8] sm:$0xf]
  %v41 = vld [vmem:[%s2 + $0xc] sm:$0xf]
  %v42 = vld [vmem:[%s3] sm:$0xf]
  %v43 = vld [vmem:[%s3 + $0x4] sm:$0xf]
  %v46 = vunpack.c.l.b16 %v36
  %v47 = vunpack.c.l.b16 %v37
  %v48 = vpack.c.b16 %v47, %v46
  %v51 = vunpack.c.l.b16 %v42
  %v52 = vunpack.c.l.b16 %v43
  %v53 = vpack.c.b16 %v52, %v51
  %vm55 = vcmask 130048
  %v57 = vsel %vm55, %v48, 0
  %59 = vmatpush.bf16.msra.mxu0 0
  %60 = vmatpush.bf16.msra.mxu0 0
  %61 = vmatpush.bf16.msra.mxu0 0
  %62 = vmatpush.bf16.msra.mxu0 0
  %63 = vmatpush.bf16.msra.mxu0 0
  %64 = vmatpush.bf16.msra.mxu0 0
  %65 = vmatpush.bf16.msra.mxu0 0
  %66 = vmatpush.bf16.msra.mxu0 %v53
  %67 = vmatmul.bf16.gmra.mxu0 %v57
  %v68 = vpop.f32.mrf.mxu0
  %v69 = vadd.f32 0.0, %v68
  %v70 = vpop.f32.mrf.mxu0
  %v71 = vadd.f32 0.0, %v70
  %72 = vdwg.mxu0
  %v75 = vunpack.c.l.b16 %v34
  %v76 = vunpack.c.l.b16 %v35
  %v77 = vpack.c.b16 %v76, %v75
  %v82 = vunpack.c.l.b16 %v38
  %v83 = vunpack.c.l.b16 %v39
  %v84 = vunpack.c.l.b16 %v40
  %v85 = vunpack.c.l.b16 %v41
  %v86 = vpack.c.b16 %v83, %v82
  %v87 = vpack.c.b16 %v85, %v84
  %vm90 = vcmask 261120
  %v92 = vsel %vm90, %v77, 0
  %94 = vmatpush.bf16.msra.mxu0 0
  %95 = vmatpush.bf16.msra.mxu0 0
  %96 = vmatpush.bf16.msra.mxu0 0
  %97 = vmatpush.bf16.msra.mxu0 0
  %98 = vmatpush.bf16.msra.mxu0 0
  %99 = vmatpush.bf16.msra.mxu0 0
  %100 = vmatpush.bf16.msra.mxu0 %v87
  %101 = vmatpush.bf16.msra.mxu0 %v86
  %102 = vmatmul.bf16.gmra.mxu0 %v92
  %v103 = vpop.f32.mrf.mxu0
  %v104 = vadd.f32 %v69, %v103
  %v105 = vpop.f32.mrf.mxu0
  %v106 = vadd.f32 %v71, %v105
  %107 = vdwg.mxu0
  %v108 = vld [vmem:[%s4] sm:$0x1]
  %v110 = vperm.slane %v108, 0
  %v112 = vadd.f32 %v104, %v110
  %v113 = vadd.f32 %v106, %v110
  %v114 = vpack.c.bf16 %v112, %v112
  %v115 = vpack.c.bf16 %v113, %v113
  %116 = vst [vmem:[%s8] sm:$0xf] %v114
  %117 = vst [vmem:[%s8 + $0x4] sm:$0xf] %v115
  %v118 = vld [vmem:[%s5] sm:$0xf]
  %v119 = vld [vmem:[%s5 + $0x4] sm:$0xf]
  %v120 = vld [vmem:[%s5 + $0x8] sm:$0xf]
  %v121 = vld [vmem:[%s5 + $0xc] sm:$0xf]
  %v122 = vld [vmem:[%s6] sm:$0xf]
  %v123 = vld [vmem:[%s6 + $0x4] sm:$0xf]
  %v126 = vunpack.c.l.b16 %v122
  %v127 = vunpack.c.l.b16 %v123
  %v128 = vpack.c.b16 %v127, %v126
  %130 = vmatpush.bf16.msra.mxu0 0
  %131 = vmatpush.bf16.msra.mxu0 0
  %132 = vmatpush.bf16.msra.mxu0 0
  %133 = vmatpush.bf16.msra.mxu0 0
  %134 = vmatpush.bf16.msra.mxu0 0
  %135 = vmatpush.bf16.msra.mxu0 0
  %136 = vmatpush.bf16.msra.mxu0 0
  %137 = vmatpush.bf16.msra.mxu0 %v128
  %138 = vmatmul.bf16.gmra.mxu0 %v57
  %v139 = vpop.f32.mrf.mxu0
  %v140 = vadd.f32 0.0, %v139
  %v141 = vpop.f32.mrf.mxu0
  %v142 = vadd.f32 0.0, %v141
  %143 = vdwg.mxu0
  %v148 = vunpack.c.l.b16 %v118
  %v149 = vunpack.c.l.b16 %v119
  %v150 = vunpack.c.l.b16 %v120
  %v151 = vunpack.c.l.b16 %v121
  %v152 = vpack.c.b16 %v149, %v148
  %v153 = vpack.c.b16 %v151, %v150
  %156 = vmatpush.bf16.msra.mxu0 0
  %157 = vmatpush.bf16.msra.mxu0 0
  %158 = vmatpush.bf16.msra.mxu0 0
  %159 = vmatpush.bf16.msra.mxu0 0
  %160 = vmatpush.bf16.msra.mxu0 0
  %161 = vmatpush.bf16.msra.mxu0 0
  %162 = vmatpush.bf16.msra.mxu0 %v153
  %163 = vmatpush.bf16.msra.mxu0 %v152
  %164 = vmatmul.bf16.gmra.mxu0 %v92
  %v165 = vpop.f32.mrf.mxu0
  %v166 = vadd.f32 %v140, %v165
  %v167 = vpop.f32.mrf.mxu0
  %v168 = vadd.f32 %v142, %v167
  %169 = vdwg.mxu0
  %v170 = vld [vmem:[#allocation2] sm:$0x1]
  %v172 = vperm.slane %v170, 0
  %v174 = vadd.f32 %v166, %v172
  %v175 = vadd.f32 %v168, %v172
  %vm176 = vcmask 7168
  %177 = vst.msk [vmem:[%s9] sm:$0xff] %vm176, %v174
  %178 = vst.msk [vmem:[%s9 + $0x8] sm:$0xff] %vm176, %v175
  // Predicated region
  $region34: #{ar_step_forward.13} parent=0 // pred_check
    _
  $region35: #{ar_step_forward.13} parent=0 // pred_check_branch
    %180 = sbr.rel (0) target = $region37
  $region36: #{ar_step_forward.13} parent=0 // pred_region
    _
  $region37: #{ar_step_forward.13} parent=0 // pred_fallthru
    _
  // Predicated region
  $region38: #{ar_step_forward.13} parent=0 // pred_check
    _
  $region39: #{ar_step_forward.13} parent=0 // pred_check_branch
    %182 = sbr.rel (0) target = $region41
  $region40: #{ar_step_forward.13} parent=0 // pred_region
    _
  $region41: #{ar_step_forward.13} parent=0 // pred_fallthru
    _
  // Predicated region
  $region42: #{ar_step_forward.13} parent=0 // pred_check
    _
  $region43: #{ar_step_forward.13} parent=0 // pred_check_branch
    %184 = sbr.rel (0) target = $region45
  $region44: #{ar_step_forward.13} parent=0 // pred_region
    _
  $region45: #{ar_step_forward.13} parent=0 // pred_fallthru
    _
  // Predicated region
  $region46: #{ar_step_forward.13} parent=0 // pred_check
    _
  $region47: #{ar_step_forward.13} parent=0 // pred_check_branch
    %186 = sbr.rel (0) target = $region49
  $region48: #{ar_step_forward.13} parent=0 // pred_region
    _
  $region49: #{ar_step_forward.13} parent=0 // pred_fallthru
    _

// kernel: ar_step_forward.14
$region0: #{ar_step_forward.14}
  #allocation0 [shape = 'u32[]', space=smem, size = 0x4, offset = 0x4, fixed_abs, tag = 'smem constant byte address 0x4 - core index']
  #allocation1 [shape = 'u32[72,128]{1,0:T(1,128)}', space=vmem, size = 0x9000, scoped, tag = 'internal scratch']
  #allocation2 [shape = 'f32[2,2,32]{2,1,0:T(2,128)}', space=vmem, size = 0x800, scoped, tag = 'scratch operand']
  #allocation3 [shape = 'f32[2,2,32]{2,1,0:T(2,128)}', space=vmem, size = 0x800, scoped, tag = 'scratch operand']
  %s0 = inlined_call_operand.vmem [shape: bf16[8,2,128], index: 0, kind: input, shape index: {}]
  %s1 = inlined_call_operand.vmem [shape: bf16[32,128], index: 1, kind: input, shape index: {}]
  %s2 = inlined_call_operand.vmem [shape: bf16[64,128], index: 2, kind: input, shape index: {}]
  %s3 = inlined_call_operand.vmem [shape: f32[1,128], index: 3, kind: input, shape index: {}]
  %s4 = inlined_call_operand.vmem [shape: bf16[8,2,32], index: 4, kind: output, shape index: {}]
  %s5 = sld [smem:[#allocation0]]
  $region53: #{ar_step_forward.14} parent=0
    _
  %s7 = ssub.s32 1, %s5
  %s8 = scalar_select 0, %s7, %s5
  loop: start=0, step=1, limit=10
  $region2: #{ar_step_forward.14} parent=0 // loop_pre_header
    _
  $region3: #{ar_step_forward.14} parent=0 // loop_header
    %s10 = sphi 0, %s14
    %p11 = scmp.ge.s32.totalorder %s10, 10
    %s17 = sphi 0, %s29
    %s18 = sphi 0, %s25
    %s19 = sphi 0, %s17
    %s20 = sphi 0, %s18
    %s21 = sphi 0, %s19
    %s22 = sphi 0, %s20
    %s34 = sphi 0, %s36
    %s37 = sphi 0, %s34
    %s38 = sphi 0, %s37
    %s54 = sphi 0, %s38
    %s58 = sphi 0, %s58
    %s60 = sphi 0, %s58
    %s61 = sphi 0, %s60
    %s75 = sphi 0, %s61
    %s79 = sphi 0, %s79
    %s81 = sphi 0, %s79
    %s82 = sphi 0, %s81
    %s96 = sphi 0, %s82
    %s100 = sphi 0, %s100
    %s102 = sphi 0, %s100
    %s103 = sphi 0, %s102
    %s117 = sphi 0, %s103
    %s125 = sphi 0, %s127
    %s128 = sphi 0, %s125
    %s129 = sphi 0, %s128
    %s145 = sphi 0, %s129
  $region4: #{ar_step_forward.14} parent=0 // loop_header_branch
    %13 = sbr.rel (%p11) target = $region8
  $region5: #{ar_step_forward.14} parent=0 // loop_body
    %s15 = ssub.s32 %s10, 1
    %s16 = ssub.s32 %s10, 2
    %s23 = sadd.s32 1, %s18
    %p24 = scmp.ge.s32.totalorder %s23, 8
    %s25 = scalar_select %p24, 0, %s23
    %s26 = sadd.s32 1, %s17
    %s27 = scalar_select %p24, %s26, %s17
    %p28 = scmp.ge.s32.totalorder %s27, 1
    %s29 = scalar_select %p28, 0, %s27
    %s30 = ssub.s32 %s18, %s25
    %s31 = ssub.s32 %s17, %s29
    %s32 = sor.u32 %s30, %s31
    %p33 = scmp.eq.s32.totalorder %s32, 0
    %s35 = sadd.s32 %s34, 1
    %s36 = scalar_select %p33, %s34, %s35
    %p39 = pneg %p33
    %p40 = scmp.eq.s32.totalorder %s10, 7
    %p41 = por %p39, %p40
    %p42 = scmp.ne.s32.totalorder %s34, %s37
    %p43 = scmp.eq.s32.totalorder %s10, 0
    %p44 = por %p42, %p43
    %p45 = scmp.ne.s32.totalorder %s34, %s37
    %p46 = scmp.eq.s32.totalorder %s15, 7
    %p47 = por %p45, %p46
    %p48 = scmp.ne.s32.totalorder %s37, %s38
    %p49 = scmp.eq.s32.totalorder %s15, 0
    %p50 = por %p48, %p49
    %p51 = scmp.ne.s32.totalorder %s37, %s38
    %p52 = scmp.eq.s32.totalorder %s16, 7
    %p53 = por %p51, %p52
    %p55 = scmp.ne.s32.totalorder %s38, %s54
    %p56 = scmp.eq.s32.totalorder %s16, 0
    %p57 = por %p55, %p56
    %s59 = sadd.s32 %s58, 1
    %p62 = scmp.eq.s32.totalorder %s10, 7
    %p63 = scmp.ne.s32.totalorder %s58, %s60
    %p64 = scmp.eq.s32.totalorder %s10, 0
    %p65 = por %p63, %p64
    %p66 = scmp.ne.s32.totalorder %s58, %s60
    %p67 = scmp.eq.s32.totalorder %s15, 7
    %p68 = por %p66, %p67
    %p69 = scmp.ne.s32.totalorder %s60, %s61
    %p70 = scmp.eq.s32.totalorder %s15, 0
    %p71 = por %p69, %p70
    %p72 = scmp.ne.s32.totalorder %s60, %s61
    %p73 = scmp.eq.s32.totalorder %s16, 7
    %p74 = por %p72, %p73
    %p76 = scmp.ne.s32.totalorder %s61, %s75
    %p77 = scmp.eq.s32.totalorder %s16, 0
    %p78 = por %p76, %p77
    %s80 = sadd.s32 %s79, 1
    %p83 = scmp.eq.s32.totalorder %s10, 7
    %p84 = scmp.ne.s32.totalorder %s79, %s81
    %p85 = scmp.eq.s32.totalorder %s10, 0
    %p86 = por %p84, %p85
    %p87 = scmp.ne.s32.totalorder %s79, %s81
    %p88 = scmp.eq.s32.totalorder %s15, 7
    %p89 = por %p87, %p88
    %p90 = scmp.ne.s32.totalorder %s81, %s82
    %p91 = scmp.eq.s32.totalorder %s15, 0
    %p92 = por %p90, %p91
    %p93 = scmp.ne.s32.totalorder %s81, %s82
    %p94 = scmp.eq.s32.totalorder %s16, 7
    %p95 = por %p93, %p94
    %p97 = scmp.ne.s32.totalorder %s82, %s96
    %p98 = scmp.eq.s32.totalorder %s16, 0
    %p99 = por %p97, %p98
    %s101 = sadd.s32 %s100, 1
    %p104 = scmp.eq.s32.totalorder %s10, 7
    %p105 = scmp.ne.s32.totalorder %s100, %s102
    %p106 = scmp.eq.s32.totalorder %s10, 0
    %p107 = por %p105, %p106
    %p108 = scmp.ne.s32.totalorder %s100, %s102
    %p109 = scmp.eq.s32.totalorder %s15, 7
    %p110 = por %p108, %p109
    %p111 = scmp.ne.s32.totalorder %s102, %s103
    %p112 = scmp.eq.s32.totalorder %s15, 0
    %p113 = por %p111, %p112
    %p114 = scmp.ne.s32.totalorder %s102, %s103
    %p115 = scmp.eq.s32.totalorder %s16, 7
    %p116 = por %p114, %p115
    %p118 = scmp.ne.s32.totalorder %s103, %s117
    %p119 = scmp.eq.s32.totalorder %s16, 0
    %p120 = por %p118, %p119
    %s121 = ssub.s32 %s18, %s25
    %s122 = ssub.s32 %s17, %s29
    %s123 = sor.u32 %s121, %s122
    %p124 = scmp.eq.s32.totalorder %s123, 0
    %s126 = sadd.s32 %s125, 1
    %s127 = scalar_select %p124, %s125, %s126
    %p130 = pneg %p124
    %p131 = scmp.eq.s32.totalorder %s10, 7
    %p132 = por %p130, %p131
    %p133 = scmp.ne.s32.totalorder %s125, %s128
    %p134 = scmp.eq.s32.totalorder %s10, 0
    %p135 = por %p133, %p134
    %p136 = scmp.ne.s32.totalorder %s125, %s128
    %p137 = scmp.eq.s32.totalorder %s15, 7
    %p138 = por %p136, %p137
    %p139 = scmp.ne.s32.totalorder %s128, %s129
    %p140 = scmp.eq.s32.totalorder %s15, 0
    %p141 = por %p139, %p140
    %p142 = scmp.ne.s32.totalorder %s128, %s129
    %p143 = scmp.eq.s32.totalorder %s16, 7
    %p144 = por %p142, %p143
    %p146 = scmp.ne.s32.totalorder %s129, %s145
    %p147 = scmp.eq.s32.totalorder %s16, 0
    %p148 = por %p146, %p147
    %p149 = scmp.le.s32.totalorder 1, %s10
    %p150 = scmp.lt.s32.totalorder %s10, 9
    %p151 = pnand %p149, %p150
    %p152 = pneg %p151
    // Predicated region
    $region9: #{ar_step_forward.14} parent=5 // pred_check
      _
    $region10: #{ar_step_forward.14} parent=5 // pred_check_branch
      %154 = sbr.rel (%p151) target = $region12
    $region11: #{ar_step_forward.14} parent=5 // pred_region
      %s155 = ssub.s32 %s10, 1
      // Predicated region
      $region13: #{ar_step_forward.14} parent=11 // pred_check
        %p156 = pneg %p71
      $region14: #{ar_step_forward.14} parent=11 // pred_check_branch
        %158 = sbr.rel (%p156) target = $region16
      $region15: #{ar_step_forward.14} parent=11 // pred_region
        _
      $region16: #{ar_step_forward.14} parent=11 // pred_fallthru
        _
      // Predicated region
      $region17: #{ar_step_forward.14} parent=11 // pred_check
        %p159 = pneg %p92
      $region18: #{ar_step_forward.14} parent=11 // pred_check_branch
        %161 = sbr.rel (%p159) target = $region20
      $region19: #{ar_step_forward.14} parent=11 // pred_region
        _
      $region20: #{ar_step_forward.14} parent=11 // pred_fallthru
        _
      // Predicated region
      $region21: #{ar_step_forward.14} parent=11 // pred_check
        %p162 = pneg %p113
      $region22: #{ar_step_forward.14} parent=11 // pred_check_branch
        %164 = sbr.rel (%p162) target = $region24
      $region23: #{ar_step_forward.14} parent=11 // pred_region
        _
      $region24: #{ar_step_forward.14} parent=11 // pred_fallthru
        _
    $region12: #{ar_step_forward.14} parent=5 // pred_fallthru
      _
    %p165 = scmp.lt.s32.totalorder %s10, 8
    // Predicated region
    $region25: #{ar_step_forward.14} parent=5 // pred_check
      %p166 = pneg %p165
    $region26: #{ar_step_forward.14} parent=5 // pred_check_branch
      %168 = sbr.rel (%p166) target = $region28
    $region27: #{ar_step_forward.14} parent=5 // pred_region
      // Predicated region
      $region29: #{ar_step_forward.14} parent=27 // pred_check
        %p169 = pneg %p44
      $region30: #{ar_step_forward.14} parent=27 // pred_check_branch
        %171 = sbr.rel (%p169) target = $region32
      $region31: #{ar_step_forward.14} parent=27 // pred_region
        %p172 = scmp.lt.s32.totalorder %s18, 7
        %s173 = scalar_select %p172, %s18, 7
        %p174 = scmp.lt.s32.totalorder %s17, 0
        %s175 = scalar_select %p174, %s17, 0
        %s176 = sadd.s32 %s175, %s173
        %s177 = scalar_lea.vmem %s0, %s176
      $region32: #{ar_step_forward.14} parent=27 // pred_fallthru
        _
    $region28: #{ar_step_forward.14} parent=5 // pred_fallthru
      _
    %p178 = scmp.le.s32.totalorder 1, %s10
    %p179 = scmp.lt.s32.totalorder %s10, 9
    %p180 = pnand %p178, %p179
    %p181 = pneg %p180
    // Predicated region
    $region33: #{ar_step_forward.14} parent=5 // pred_check
      _
    $region34: #{ar_step_forward.14} parent=5 // pred_check_branch
      %183 = sbr.rel (%p180) target = $region36
    $region35: #{ar_step_forward.14} parent=5 // pred_region
      %s184 = ssub.s32 %s10, 1
      %p185 = scmp.lt.s32.totalorder %s20, 7
      %s186 = scalar_select %p185, %s20, 7
      %p187 = scmp.lt.s32.totalorder %s19, 0
      %s188 = scalar_select %p187, %s19, 0
      %s189 = sadd.s32 %s188, %s186
      %s190 = scalar_lea.vmem %s0, %s189
      %p191 = pneg %p50
      %p192 = pneg %p47
      %p193 = pneg %p71
      %p194 = pneg %p68
      %p195 = pneg %p92
      %p196 = pneg %p89
      %p197 = pneg %p113
      %p198 = pneg %p110
      %p199 = pneg %p141
      %p200 = pneg %p138
      %p201 = scmp.lt.s32.totalorder %s20, 7
      %s202 = scalar_select %p201, %s20, 7
      %p203 = scmp.lt.s32.totalorder %s19, 0
      %s204 = scalar_select %p203, %s19, 0
      %s205 = sadd.s32 %s204, %s202
      %s206 = scalar_lea.vmem %s4, %s205
      %p207 = scmp.lt.s32.totalorder %s20, 7
      %s208 = scalar_select %p207, %s20, 7
      %p209 = scmp.lt.s32.totalorder %s19, 0
      %s210 = scalar_select %p209, %s19, 0
      %s211 = sadd.s32 %s210, %s208
      %s212 = scalar_lea.vmem %s0, %s211
      %p213 = scmp.lt.s32.totalorder %s20, 7
      %s214 = scalar_select %p213, %s20, 7
      %p215 = scmp.lt.s32.totalorder %s19, 0
      %s216 = scalar_select %p215, %s19, 0
      %s217 = sadd.s32 %s216, %s214
      %s218 = scalar_lea.vmem %s4, %s217
      %p220 = scmp.eq.s32.totalorder %s20, 0
      // Predicated region
      $region37: #{ar_step_forward.14} parent=35 // pred_check
        %p221 = pneg %p220
      $region38: #{ar_step_forward.14} parent=35 // pred_check_branch
        %223 = sbr.rel (%p221) target = $region40
      $region39: #{ar_step_forward.14} parent=35 // pred_region
        %vm224 = vcmask 254976
        %225 = vst.msk [vmem:[#allocation2] sm:$0x3] %vm224, 0.0
        %226 = vst.msk [vmem:[#allocation2 + $0x2] sm:$0x3] %vm224, 0.0
        %227 = vst.msk [vmem:[#allocation3] sm:$0x3] %vm224, 0.0
        %228 = vst.msk [vmem:[#allocation3 + $0x2] sm:$0x3] %vm224, 0.0
      $region40: #{ar_step_forward.14} parent=35 // pred_fallthru
        _
      %v229 = vld [vmem:[#allocation2] sm:$0x3]
      %v230 = vld [vmem:[#allocation3] sm:$0x3]
      %v231 = vld [vmem:[%s212] sm:$0x1]
      %v232 = vunpack.c.l.bf16 %v231
      %v233 = vpack.c.bf16 %v229, %v229
      %v234 = vld [vmem:[%s1] sm:$0xf]
      %v235 = vld [vmem:[%s1 + $0x4] sm:$0xf]
      %v236 = vld [vmem:[%s1 + $0x8] sm:$0xf]
      %v237 = vld [vmem:[%s1 + $0xc] sm:$0xf]
      %v242 = vunpack.c.l.b16 %v234
      %v243 = vunpack.c.l.b16 %v235
      %v244 = vunpack.c.l.b16 %v236
      %v245 = vunpack.c.l.b16 %v237
      %v246 = vpack.c.b16 %v243, %v242
      %v247 = vpack.c.b16 %v245, %v244
      %vm250 = vcmask 261120
      %v252 = vsel %vm250, %v233, 0
      %254 = vmatpush.bf16.msra.mxu0 0
      %255 = vmatpush.bf16.msra.mxu0 0
      %256 = vmatpush.bf16.msra.mxu0 0
      %257 = vmatpush.bf16.msra.mxu0 0
      %258 = vmatpush.bf16.msra.mxu0 0
      %259 = vmatpush.bf16.msra.mxu0 0
      %260 = vmatpush.bf16.msra.mxu0 %v247
      %261 = vmatpush.bf16.msra.mxu0 %v246
      %262 = vmatmul.bf16.gmra.mxu0 %v252
      %v263 = vpop.f32.mrf.mxu0
      %v264 = vadd.f32 0.0, %v263
      %v265 = vpop.f32.mrf.mxu0
      %266 = vdwg.mxu0
      %v267 = vadd.f32 %v232, %v264
      %v268 = vxor.u32 %v267, 2147483648
      %v269 = vmul.f32 %v268, 1.442695
      %v270 = vpow.pop %v269
      %v271 = vadd.f32 %v270, 1.0
      %v272 = vrcp.pop %v271
      %v273 = vmul.f32 %v271, %v272
      %v274 = vsub.f32 1.0, %v273
      %v275 = vmul.f32 %v272, %v274
      %v276 = vadd.f32 %v272, %v275
      %vm277 = vweird.f32 %v271
      %vm278 = vweird.f32 %v272
      %vm279 = vmor %vm277, %vm278
      %v280 = vsel %vm279, %v272, %v276
      %v281 = vand.u32 2147483647, %v271
      %vm282 = vcmp.eq.f32.partialorder %v281, 8.507059e+37
      %v283 = vand.u32 %v271, 2147483648
      %v284 = vor.u32 1.1754944e-38, %v283
      %v285 = vsel %vm282, %v284, %v280
      %v286 = vmul.f32 1.0, %v285
      %v287 = vtanh.pop %v267
      %289 = vrot.lane.b32.xlu0 %v230, 32
      %v290 = vpop.permute.xlu0 %289
      %v292 = vmul.f32 %v286, %v290
      %294 = vrot.lane.b32.xlu0 %v287, 64
      %v295 = vpop.permute.xlu0 %294
      %v297 = vmul.f32 %v286, %v295
      %299 = vrot.lane.b32.xlu0 %v297, 32
      %v300 = vpop.permute.xlu0 %299
      %v302 = vadd.f32 %v292, %v300
      %v303 = vtanh.pop %v302
      %305 = vrot.lane.b32.xlu0 %v303, 64
      %v306 = vpop.permute.xlu0 %305
      %v308 = vmul.f32 %v286, %v306
      %310 = vst [vmem:[#allocation1] ss:$4 sm:$0xff] %v308
      %v311 = vld.sshfl [vmem:[#allocation1] sm:$0xff pattern:$0x73625140]
      %312 = vrot.lane.b32.xlu0 %v311, 32
      %v313 = vpop.permute.xlu0 %312
      %vm315 = vcmask 254976
      %316 = vst.msk [vmem:[#allocation2] sm:$0x3] %vm315, %v313
      %318 = vst [vmem:[#allocation1] ss:$4 sm:$0xff] %v302
      %v319 = vld.sshfl [vmem:[#allocation1] sm:$0xff pattern:$0x73625140]
      %320 = vrot.lane.b32.xlu0 %v319, 96
      %v321 = vpop.permute.xlu0 %320
      %323 = vst.msk [vmem:[#allocation3] sm:$0x3] %vm315, %v321
      %s324 = scalar_lea.vmem [#allocation2], 2
      %v325 = vld [vmem:[%s324] sm:$0x3]
      %s326 = scalar_lea.vmem [#allocation3], 2
      %v327 = vld [vmem:[%s326] sm:$0x3]
      %328 = vst [vmem:[#allocation1] ss:$4 sm:$0xff] %v308
      %v329 = vld.sshfl [vmem:[#allocation1] sm:$0xff pattern:$0x73625140]
      %330 = vrot.lane.b32.xlu0 %v329, 32
      %v331 = vpop.permute.xlu0 %330
      %334 = vrot.lane.b32.xlu0 %v325, 32
      %v335 = vpop.permute.xlu0 %334
      %v337 = vsel %vm250, %v331, %v335
      %v338 = vpack.c.bf16 %v337, %v337
      %v339 = vld [vmem:[%s2] sm:$0xf]
      %v340 = vld [vmem:[%s2 + $0x4] sm:$0xf]
      %v341 = vld [vmem:[%s2 + $0x8] sm:$0xf]
      %v342 = vld [vmem:[%s2 + $0xc] sm:$0xf]
      %v343 = vld [vmem:[%s2 + $0x10] sm:$0xf]
      %v344 = vld [vmem:[%s2 + $0x14] sm:$0xf]
      %v345 = vld [vmem:[%s2 + $0x18] sm:$0xf]
      %v346 = vld [vmem:[%s2 + $0x1c] sm:$0xf]
      %v347 = vld [vmem:[%s3] sm:$0x1]
      %v349 = vperm.slane %v347, 0
      %v359 = vunpack.c.l.b16 %v339
      %v360 = vunpack.c.l.b16 %v340
      %v361 = vunpack.c.l.b16 %v341
      %v362 = vunpack.c.l.b16 %v342
      %v363 = vunpack.c.l.b16 %v343
      %v364 = vunpack.c.l.b16 %v344
      %v365 = vunpack.c.l.b16 %v345
      %v366 = vunpack.c.l.b16 %v346
      %v367 = vpack.c.b16 %v360, %v359
      %v368 = vpack.c.b16 %v362, %v361
      %v369 = vpack.c.b16 %v364, %v363
      %v370 = vpack.c.b16 %v366, %v365
      %vm375 = vcmask 523264
      %v377 = vsel %vm375, %v338, 0
      %379 = vmatpush.bf16.msra.mxu0 0
      %380 = vmatpush.bf16.msra.mxu0 0
      %381 = vmatpush.bf16.msra.mxu0 0
      %382 = vmatpush.bf16.msra.mxu0 0
      %383 = vmatpush.bf16.msra.mxu0 %v370
      %384 = vmatpush.bf16.msra.mxu0 %v369
      %385 = vmatpush.bf16.msra.mxu0 %v368
      %386 = vmatpush.bf16.msra.mxu0 %v367
      %387 = vmatmul.bf16.gmra.mxu0 %v377
      %v388 = vpop.f32.mrf.mxu0
      %v389 = vadd.f32 %v349, %v388
      %v390 = vpop.f32.mrf.mxu0
      %391 = vdwg.mxu0
      %v392 = vxor.u32 %v389, 2147483648
      %v393 = vmul.f32 %v392, 1.442695
      %v394 = vpow.pop %v393
      %v395 = vadd.f32 %v394, 1.0
      %v396 = vrcp.pop %v395
      %v397 = vmul.f32 %v395, %v396
      %v398 = vsub.f32 1.0, %v397
      %v399 = vmul.f32 %v396, %v398
      %v400 = vadd.f32 %v396, %v399
      %vm401 = vweird.f32 %v395
      %vm402 = vweird.f32 %v396
      %vm403 = vmor %vm401, %vm402
      %v404 = vsel %vm403, %v396, %v400
      %v405 = vand.u32 2147483647, %v395
      %vm406 = vcmp.eq.f32.partialorder %v405, 8.507059e+37
      %v407 = vand.u32 %v395, 2147483648
      %v408 = vor.u32 1.1754944e-38, %v407
      %v409 = vsel %vm406, %v408, %v404
      %v410 = vmul.f32 1.0, %v409
      %v411 = vtanh.pop %v389
      %413 = vrot.lane.b32.xlu0 %v327, 32
      %v414 = vpop.permute.xlu0 %413
      %v416 = vmul.f32 %v410, %v414
      %418 = vrot.lane.b32.xlu0 %v411, 64
      %v419 = vpop.permute.xlu0 %418
      %v421 = vmul.f32 %v410, %v419
      %423 = vrot.lane.b32.xlu0 %v421, 32
      %v424 = vpop.permute.xlu0 %423
      %v426 = vadd.f32 %v416, %v424
      %v427 = vtanh.pop %v426
      %429 = vrot.lane.b32.xlu0 %v427, 64
      %v430 = vpop.permute.xlu0 %429
      %v432 = vmul.f32 %v410, %v430
      %434 = vrot.lane.b32.xlu0 %v432, 32
      %v435 = vpop.permute.xlu0 %434
      %437 = vst.msk [vmem:[%s324] sm:$0x3] %vm315, %v435
      %439 = vrot.lane.b32.xlu0 %v426, 96
      %v440 = vpop.permute.xlu0 %439
      %442 = vst.msk [vmem:[%s326] sm:$0x3] %vm315, %v440
      %v443 = vpack.c.bf16 %v432, %v432
      %v445 = vrot.slane %v443, 3
      %vm446 = vcmask 1040384
      %v449 = vsel %vm446, %v443, %v445
      %451 = vrot.lane.b32.xlu0 %v449, 32
      %v452 = vpop.permute.xlu0 %451
      %vm454 = vcmask 253952
      %455 = vst.msk [vmem:[%s218] sm:$0x1] %vm454, %v452
      %p456 = scmp.lt.s32.totalorder %s20, 7
      %s457 = scalar_select %p456, %s20, 7
      %p458 = scmp.lt.s32.totalorder %s19, 0
      %s459 = scalar_select %p458, %s19, 0
      %s460 = sadd.s32 %s459, %s457
      %s461 = scalar_lea.vmem %s4, %s460
      // Predicated region
      $region41: #{ar_step_forward.14} parent=35 // pred_check
        %p462 = pneg %p138
      $region42: #{ar_step_forward.14} parent=35 // pred_check_branch
        %464 = sbr.rel (%p462) target = $region44
      $region43: #{ar_step_forward.14} parent=35 // pred_region
        _
      $region44: #{ar_step_forward.14} parent=35 // pred_fallthru
        _
    $region36: #{ar_step_forward.14} parent=5 // pred_fallthru
      _
    %p465 = scmp.le.s32.totalorder 2, %s10
    // Predicated region
    $region45: #{ar_step_forward.14} parent=5 // pred_check
      %p466 = pneg %p465
    $region46: #{ar_step_forward.14} parent=5 // pred_check_branch
      %468 = sbr.rel (%p466) target = $region48
    $region47: #{ar_step_forward.14} parent=5 // pred_region
      %s469 = ssub.s32 %s10, 2
      // Predicated region
      $region49: #{ar_step_forward.14} parent=47 // pred_check
        %p470 = pneg %p144
      $region50: #{ar_step_forward.14} parent=47 // pred_check_branch
        %472 = sbr.rel (%p470) target = $region52
      $region51: #{ar_step_forward.14} parent=47 // pred_region
        %p473 = scmp.lt.s32.totalorder %s22, 7
        %s474 = scalar_select %p473, %s22, 7
        %p475 = scmp.lt.s32.totalorder %s21, 0
        %s476 = scalar_select %p475, %s21, 0
        %s477 = sadd.s32 %s476, %s474
        %s478 = scalar_lea.vmem %s4, %s477
      $region52: #{ar_step_forward.14} parent=47 // pred_fallthru
        _
    $region48: #{ar_step_forward.14} parent=5 // pred_fallthru
      _
  $region6: #{ar_step_forward.14} parent=0 // loop_footer
    %s14 = sadd.s32 1, %s10
  $region7: #{ar_step_forward.14} parent=0 // loop_footer_branch
    %9 = sbr.rel target = $region3
  $region8: #{ar_step_forward.14} parent=0 // loop_exit
    _

// kernel: ar_step_forward.12
$region0: #{ar_step_forward.12}
  #allocation0 [shape = 'u32[]', space=smem, size = 0x4, offset = 0x4, fixed_abs, tag = 'smem constant byte address 0x4 - core index']
  #allocation1 [shape = 'u32[72,128]{1,0:T(1,128)}', space=vmem, size = 0x9000, scoped, tag = 'internal scratch']
  %s0 = inlined_call_operand.vmem [shape: bf16[2,8,16], index: 0, kind: input, shape index: {}]
  %s1 = inlined_call_operand.vmem [shape: bf16[2,6,32], index: 1, kind: input, shape index: {}]
  %s2 = inlined_call_operand.vmem [shape: f32[2,1,6], index: 2, kind: input, shape index: {}]
  %s3 = inlined_call_operand.vmem [shape: bf16[16,1], index: 3, kind: input, shape index: {}]
  %s4 = inlined_call_operand.vmem [shape: bf16[2,8,16], index: 4, kind: output, shape index: {0}]
  %s5 = inlined_call_operand.vmem [shape: f32[2,8,6], index: 5, kind: output, shape index: {1}]
  %6 = xla_tuple %s4, %s5
  %s7 = sld [smem:[#allocation0]]
  $region57: #{ar_step_forward.12} parent=0
    _
  %s9 = ssub.s32 1, %s7
  %s10 = scalar_select 0, %s9, %s7
  loop: start=0, step=1, limit=4
  $region2: #{ar_step_forward.12} parent=0 // loop_pre_header
    _
  $region3: #{ar_step_forward.12} parent=0 // loop_header
    %s12 = sphi 0, %s16
    %p13 = scmp.ge.s32.totalorder %s12, 4
    %s19 = sphi 0, %s31
    %s20 = sphi 0, %s27
    %s21 = sphi 0, %s19
    %s22 = sphi 0, %s20
    %s23 = sphi 0, %s21
    %s24 = sphi 0, %s22
    %s36 = sphi 0, %s38
    %s39 = sphi 0, %s36
    %s40 = sphi 0, %s39
    %s56 = sphi 0, %s40
    %s62 = sphi 0, %s64
    %s65 = sphi 0, %s62
    %s66 = sphi 0, %s65
    %s82 = sphi 0, %s66
    %s88 = sphi 0, %s90
    %s91 = sphi 0, %s88
    %s92 = sphi 0, %s91
    %s108 = sphi 0, %s92
    %s112 = sphi 0, %s112
    %s114 = sphi 0, %s112
    %s115 = sphi 0, %s114
    %s129 = sphi 0, %s115
    %s137 = sphi 0, %s139
    %s140 = sphi 0, %s137
    %s141 = sphi 0, %s140
    %s157 = sphi 0, %s141
    %s165 = sphi 0, %s167
    %s168 = sphi 0, %s165
    %s169 = sphi 0, %s168
    %s185 = sphi 0, %s169
  $region4: #{ar_step_forward.12} parent=0 // loop_header_branch
    %15 = sbr.rel (%p13) target = $region8
  $region5: #{ar_step_forward.12} parent=0 // loop_body
    %s17 = ssub.s32 %s12, 1
    %s18 = ssub.s32 %s12, 2
    %s25 = sadd.s32 1, %s20
    %p26 = scmp.ge.s32.totalorder %s25, 1
    %s27 = scalar_select %p26, 0, %s25
    %s28 = sadd.s32 1, %s19
    %s29 = scalar_select %p26, %s28, %s19
    %p30 = scmp.ge.s32.totalorder %s29, 2
    %s31 = scalar_select %p30, 0, %s29
    %s32 = ssub.s32 %s19, %s31
    %s33 = ssub.s32 %s20, %s27
    %s34 = sor.u32 %s32, %s33
    %p35 = scmp.eq.s32.totalorder %s34, 0
    %s37 = sadd.s32 %s36, 1
    %s38 = scalar_select %p35, %s36, %s37
    %p41 = pneg %p35
    %p42 = scmp.eq.s32.totalorder %s12, 1
    %p43 = por %p41, %p42
    %p44 = scmp.ne.s32.totalorder %s36, %s39
    %p45 = scmp.eq.s32.totalorder %s12, 0
    %p46 = por %p44, %p45
    %p47 = scmp.ne.s32.totalorder %s36, %s39
    %p48 = scmp.eq.s32.totalorder %s17, 1
    %p49 = por %p47, %p48
    %p50 = scmp.ne.s32.totalorder %s39, %s40
    %p51 = scmp.eq.s32.totalorder %s17, 0
    %p52 = por %p50, %p51
    %p53 = scmp.ne.s32.totalorder %s39, %s40
    %p54 = scmp.eq.s32.totalorder %s18, 1
    %p55 = por %p53, %p54
    %p57 = scmp.ne.s32.totalorder %s40, %s56
    %p58 = scmp.eq.s32.totalorder %s18, 0
    %p59 = por %p57, %p58
    %s60 = ssub.s32 %s19, %s31
    %p61 = scmp.eq.s32.totalorder %s60, 0
    %s63 = sadd.s32 %s62, 1
    %s64 = scalar_select %p61, %s62, %s63
    %p67 = pneg %p61
    %p68 = scmp.eq.s32.totalorder %s12, 1
    %p69 = por %p67, %p68
    %p70 = scmp.ne.s32.totalorder %s62, %s65
    %p71 = scmp.eq.s32.totalorder %s12, 0
    %p72 = por %p70, %p71
    %p73 = scmp.ne.s32.totalorder %s62, %s65
    %p74 = scmp.eq.s32.totalorder %s17, 1
    %p75 = por %p73, %p74
    %p76 = scmp.ne.s32.totalorder %s65, %s66
    %p77 = scmp.eq.s32.totalorder %s17, 0
    %p78 = por %p76, %p77
    %p79 = scmp.ne.s32.totalorder %s65, %s66
    %p80 = scmp.eq.s32.totalorder %s18, 1
    %p81 = por %p79, %p80
    %p83 = scmp.ne.s32.totalorder %s66, %s82
    %p84 = scmp.eq.s32.totalorder %s18, 0
    %p85 = por %p83, %p84
    %s86 = ssub.s32 %s19, %s31
    %p87 = scmp.eq.s32.totalorder %s86, 0
    %s89 = sadd.s32 %s88, 1
    %s90 = scalar_select %p87, %s88, %s89
    %p93 = pneg %p87
    %p94 = scmp.eq.s32.totalorder %s12, 1
    %p95 = por %p93, %p94
    %p96 = scmp.ne.s32.totalorder %s88, %s91
    %p97 = scmp.eq.s32.totalorder %s12, 0
    %p98 = por %p96, %p97
    %p99 = scmp.ne.s32.totalorder %s88, %s91
    %p100 = scmp.eq.s32.totalorder %s17, 1
    %p101 = por %p99, %p100
    %p102 = scmp.ne.s32.totalorder %s91, %s92
    %p103 = scmp.eq.s32.totalorder %s17, 0
    %p104 = por %p102, %p103
    %p105 = scmp.ne.s32.totalorder %s91, %s92
    %p106 = scmp.eq.s32.totalorder %s18, 1
    %p107 = por %p105, %p106
    %p109 = scmp.ne.s32.totalorder %s92, %s108
    %p110 = scmp.eq.s32.totalorder %s18, 0
    %p111 = por %p109, %p110
    %s113 = sadd.s32 %s112, 1
    %p116 = scmp.eq.s32.totalorder %s12, 1
    %p117 = scmp.ne.s32.totalorder %s112, %s114
    %p118 = scmp.eq.s32.totalorder %s12, 0
    %p119 = por %p117, %p118
    %p120 = scmp.ne.s32.totalorder %s112, %s114
    %p121 = scmp.eq.s32.totalorder %s17, 1
    %p122 = por %p120, %p121
    %p123 = scmp.ne.s32.totalorder %s114, %s115
    %p124 = scmp.eq.s32.totalorder %s17, 0
    %p125 = por %p123, %p124
    %p126 = scmp.ne.s32.totalorder %s114, %s115
    %p127 = scmp.eq.s32.totalorder %s18, 1
    %p128 = por %p126, %p127
    %p130 = scmp.ne.s32.totalorder %s115, %s129
    %p131 = scmp.eq.s32.totalorder %s18, 0
    %p132 = por %p130, %p131
    %s133 = ssub.s32 %s19, %s31
    %s134 = ssub.s32 %s20, %s27
    %s135 = sor.u32 %s133, %s134
    %p136 = scmp.eq.s32.totalorder %s135, 0
    %s138 = sadd.s32 %s137, 1
    %s139 = scalar_select %p136, %s137, %s138
    %p142 = pneg %p136
    %p143 = scmp.eq.s32.totalorder %s12, 1
    %p144 = por %p142, %p143
    %p145 = scmp.ne.s32.totalorder %s137, %s140
    %p146 = scmp.eq.s32.totalorder %s12, 0
    %p147 = por %p145, %p146
    %p148 = scmp.ne.s32.totalorder %s137, %s140
    %p149 = scmp.eq.s32.totalorder %s17, 1
    %p150 = por %p148, %p149
    %p151 = scmp.ne.s32.totalorder %s140, %s141
    %p152 = scmp.eq.s32.totalorder %s17, 0
    %p153 = por %p151, %p152
    %p154 = scmp.ne.s32.totalorder %s140, %s141
    %p155 = scmp.eq.s32.totalorder %s18, 1
    %p156 = por %p154, %p155
    %p158 = scmp.ne.s32.totalorder %s141, %s157
    %p159 = scmp.eq.s32.totalorder %s18, 0
    %p160 = por %p158, %p159
    %s161 = ssub.s32 %s19, %s31
    %s162 = ssub.s32 %s20, %s27
    %s163 = sor.u32 %s161, %s162
    %p164 = scmp.eq.s32.totalorder %s163, 0
    %s166 = sadd.s32 %s165, 1
    %s167 = scalar_select %p164, %s165, %s166
    %p170 = pneg %p164
    %p171 = scmp.eq.s32.totalorder %s12, 1
    %p172 = por %p170, %p171
    %p173 = scmp.ne.s32.totalorder %s165, %s168
    %p174 = scmp.eq.s32.totalorder %s12, 0
    %p175 = por %p173, %p174
    %p176 = scmp.ne.s32.totalorder %s165, %s168
    %p177 = scmp.eq.s32.totalorder %s17, 1
    %p178 = por %p176, %p177
    %p179 = scmp.ne.s32.totalorder %s168, %s169
    %p180 = scmp.eq.s32.totalorder %s17, 0
    %p181 = por %p179, %p180
    %p182 = scmp.ne.s32.totalorder %s168, %s169
    %p183 = scmp.eq.s32.totalorder %s18, 1
    %p184 = por %p182, %p183
    %p186 = scmp.ne.s32.totalorder %s169, %s185
    %p187 = scmp.eq.s32.totalorder %s18, 0
    %p188 = por %p186, %p187
    %p189 = scmp.le.s32.totalorder 1, %s12
    %p190 = scmp.lt.s32.totalorder %s12, 3
    %p191 = pnand %p189, %p190
    %p192 = pneg %p191
    // Predicated region
    $region9: #{ar_step_forward.12} parent=5 // pred_check
      _
    $region10: #{ar_step_forward.12} parent=5 // pred_check_branch
      %194 = sbr.rel (%p191) target = $region12
    $region11: #{ar_step_forward.12} parent=5 // pred_region
      %s195 = ssub.s32 %s12, 1
      // Predicated region
      $region13: #{ar_step_forward.12} parent=11 // pred_check
        %p196 = pneg %p125
      $region14: #{ar_step_forward.12} parent=11 // pred_check_branch
        %198 = sbr.rel (%p196) target = $region16
      $region15: #{ar_step_forward.12} parent=11 // pred_region
        _
      $region16: #{ar_step_forward.12} parent=11 // pred_fallthru
        _
    $region12: #{ar_step_forward.12} parent=5 // pred_fallthru
      _
    %p199 = scmp.lt.s32.totalorder %s12, 2
    // Predicated region
    $region17: #{ar_step_forward.12} parent=5 // pred_check
      %p200 = pneg %p199
    $region18: #{ar_step_forward.12} parent=5 // pred_check_branch
      %202 = sbr.rel (%p200) target = $region20
    $region19: #{ar_step_forward.12} parent=5 // pred_region
      // Predicated region
      $region21: #{ar_step_forward.12} parent=19 // pred_check
        %p203 = pneg %p46
      $region22: #{ar_step_forward.12} parent=19 // pred_check_branch
        %205 = sbr.rel (%p203) target = $region24
      $region23: #{ar_step_forward.12} parent=19 // pred_region
        %p206 = scmp.lt.s32.totalorder %s19, 1
        %s207 = scalar_select %p206, %s19, 1
        %p208 = scmp.lt.s32.totalorder %s20, 0
        %s209 = scalar_select %p208, %s20, 0
        %s210 = sadd.s32 %s209, %s207
        %s211 = smul.addr %s210, 4
        %s212 = scalar_lea.vmem %s0, %s211
      $region24: #{ar_step_forward.12} parent=19 // pred_fallthru
        _
      // Predicated region
      $region25: #{ar_step_forward.12} parent=19 // pred_check
        %p213 = pneg %p72
      $region26: #{ar_step_forward.12} parent=19 // pred_check_branch
        %215 = sbr.rel (%p213) target = $region28
      $region27: #{ar_step_forward.12} parent=19 // pred_region
        %p216 = scmp.lt.s32.totalorder %s19, 1
        %s217 = scalar_select %p216, %s19, 1
        %s218 = smul.addr %s217, 4
        %s219 = scalar_lea.vmem %s1, %s218
      $region28: #{ar_step_forward.12} parent=19 // pred_fallthru
        _
      // Predicated region
      $region29: #{ar_step_forward.12} parent=19 // pred_check
        %p220 = pneg %p98
      $region30: #{ar_step_forward.12} parent=19 // pred_check_branch
        %222 = sbr.rel (%p220) target = $region32
      $region31: #{ar_step_forward.12} parent=19 // pred_region
        %p223 = scmp.lt.s32.totalorder %s19, 1
        %s224 = scalar_select %p223, %s19, 1
        %s225 = scalar_lea.vmem %s2, %s224
      $region32: #{ar_step_forward.12} parent=19 // pred_fallthru
        _
    $region20: #{ar_step_forward.12} parent=5 // pred_fallthru
      _
    %p226 = scmp.le.s32.totalorder 1, %s12
    %p227 = scmp.lt.s32.totalorder %s12, 3
    %p228 = pnand %p226, %p227
    %p229 = pneg %p228
    // Predicated region
    $region33: #{ar_step_forward.12} parent=5 // pred_check
      _
    $region34: #{ar_step_forward.12} parent=5 // pred_check_branch
      %231 = sbr.rel (%p228) target = $region36
    $region35: #{ar_step_forward.12} parent=5 // pred_region
      %s232 = ssub.s32 %s12, 1
      %p233 = scmp.lt.s32.totalorder %s21, 1
      %s234 = scalar_select %p233, %s21, 1
      %p235 = scmp.lt.s32.totalorder %s22, 0
      %s236 = scalar_select %p235, %s22, 0
      %s237 = sadd.s32 %s236, %s234
      %s238 = smul.addr %s237, 4
      %s239 = scalar_lea.vmem %s0, %s238
      %p240 = pneg %p52
      %p241 = pneg %p49
      %p242 = scmp.lt.s32.totalorder %s21, 1
      %s243 = scalar_select %p242, %s21, 1
      %s244 = smul.addr %s243, 4
      %s245 = scalar_lea.vmem %s1, %s244
      %p246 = pneg %p78
      %p247 = pneg %p75
      %p248 = scmp.lt.s32.totalorder %s21, 1
      %s249 = scalar_select %p248, %s21, 1
      %s250 = scalar_lea.vmem %s2, %s249
      %p251 = pneg %p104
      %p252 = pneg %p101
      %p253 = pneg %p125
      %p254 = pneg %p122
      %p255 = pneg %p153
      %p256 = pneg %p150
      %p257 = scmp.lt.s32.totalorder %s21, 1
      %s258 = scalar_select %p257, %s21, 1
      %p259 = scmp.lt.s32.totalorder %s22, 0
      %s260 = scalar_select %p259, %s22, 0
      %s261 = sadd.s32 %s260, %s258
      %s262 = smul.addr %s261, 4
      %s263 = scalar_lea.vmem %s4, %s262
      %p264 = pneg %p181
      %p265 = pneg %p178
      %p266 = scmp.lt.s32.totalorder %s21, 1
      %s267 = scalar_select %p266, %s21, 1
      %p268 = scmp.lt.s32.totalorder %s22, 0
      %s269 = scalar_select %p268, %s22, 0
      %s270 = sadd.s32 %s269, %s267
      %s271 = smul.addr %s270, 8
      %s272 = scalar_lea.vmem %s5, %s271
      %p273 = scmp.lt.s32.totalorder %s21, 1
      %s274 = scalar_select %p273, %s21, 1
      %p275 = scmp.lt.s32.totalorder %s22, 0
      %s276 = scalar_select %p275, %s22, 0
      %s277 = sadd.s32 %s276, %s274
      %s278 = smul.addr %s277, 4
      %s279 = scalar_lea.vmem %s0, %s278
      %p280 = scmp.lt.s32.totalorder %s21, 1
      %s281 = scalar_select %p280, %s21, 1
      %s282 = smul.addr %s281, 4
      %s283 = scalar_lea.vmem %s1, %s282
      %p284 = scmp.lt.s32.totalorder %s21, 1
      %s285 = scalar_select %p284, %s21, 1
      %s286 = scalar_lea.vmem %s2, %s285
      %p287 = scmp.lt.s32.totalorder %s21, 1
      %s288 = scalar_select %p287, %s21, 1
      %p289 = scmp.lt.s32.totalorder %s22, 0
      %s290 = scalar_select %p289, %s22, 0
      %s291 = sadd.s32 %s290, %s288
      %s292 = smul.addr %s291, 4
      %s293 = scalar_lea.vmem %s4, %s292
      %p294 = scmp.lt.s32.totalorder %s21, 1
      %s295 = scalar_select %p294, %s21, 1
      %p296 = scmp.lt.s32.totalorder %s22, 0
      %s297 = scalar_select %p296, %s22, 0
      %s298 = sadd.s32 %s297, %s295
      %s299 = smul.addr %s298, 8
      %s300 = scalar_lea.vmem %s5, %s299
      %v302 = vld [vmem:[%s279] sm:$0xf]
      %v303 = vld [vmem:[%s283] sm:$0x7]
      %v304 = vld [vmem:[%s3] sm:$0xf]
      %v305 = vld [vmem:[%s3 + $0x4] sm:$0xf]
      %v307 = vrot.slane %v302, 3
      %vm308 = vcmask 1040384
      %v311 = vsel %vm308, %v302, %v307
      %vm313 = vcmask 1041409
      %v314 = vsel %vm313, %v302, %v307
      %v316 = vrot.slane %v314, 1
      %vm317 = vcmask 1042434
      %v318 = vsel %vm317, %v302, %v307
      %v320 = vrot.slane %v318, 2
      %vm321 = vcmask 1043459
      %v322 = vsel %vm321, %v302, %v307
      %v324 = vrot.slane %v322, 3
      %v325 = vunpack.i.l.s16 %v311
      %v326 = vunpack.i.h.s16 %v311
      %v327 = vunpack.i.l.s16 %v316
      %v328 = vunpack.i.h.s16 %v316
      %v329 = vunpack.i.l.s16 %v320
      %v330 = vunpack.i.h.s16 %v320
      %v331 = vunpack.i.l.s16 %v324
      %v332 = vunpack.i.h.s16 %v324
      %v333 = vpack.i.b16 %v325, %v325
      %v334 = vpack.i.b16 %v326, %v326
      %v335 = vpack.i.b16 %v327, %v327
      %v336 = vpack.i.b16 %v328, %v328
      %v337 = vpack.i.b16 %v329, %v329
      %v338 = vpack.i.b16 %v330, %v330
      %v339 = vpack.i.b16 %v331, %v331
      %v340 = vpack.i.b16 %v332, %v332
      %v341 = vperm.slane %v333, 0
      %v342 = vperm.slane %v334, 0
      %v343 = vperm.slane %v335, 0
      %v344 = vperm.slane %v336, 0
      %v345 = vperm.slane %v337, 0
      %v346 = vperm.slane %v338, 0
      %v347 = vperm.slane %v339, 0
      %v348 = vperm.slane %v340, 0
      %v350 = vpack.i.b16 %v341, %v341
      %v352 = vperm.slane %v350, 0
      %v354 = vpack.i.b16 %v342, %v342
      %v356 = vperm.slane %v354, 0
      %v358 = vpack.i.b16 %v343, %v343
      %v360 = vperm.slane %v358, 0
      %v362 = vpack.i.b16 %v344, %v344
      %v364 = vperm.slane %v362, 0
      %v366 = vpack.i.b16 %v345, %v345
      %v368 = vperm.slane %v366, 0
      %v370 = vpack.i.b16 %v346, %v346
      %v372 = vperm.slane %v370, 0
      %v374 = vpack.i.b16 %v347, %v347
      %v376 = vperm.slane %v374, 0
      %v378 = vpack.i.b16 %v348, %v348
      %v380 = vperm.slane %v378, 0
      %v381 = vunpack.c.l.bf16 %v352
      %v382 = vunpack.c.l.bf16 %v356
      %v383 = vunpack.c.l.bf16 %v360
      %v384 = vunpack.c.l.bf16 %v364
      %v385 = vunpack.c.l.bf16 %v368
      %v386 = vunpack.c.l.bf16 %v372
      %v387 = vunpack.c.l.bf16 %v376
      %v388 = vunpack.c.l.bf16 %v380
      %v389 = vunpack.c.l.bf16 %v303
      %v390 = vadd.f32 %v381, %v389
      %v391 = vadd.f32 %v382, %v389
      %v392 = vadd.f32 %v383, %v389
      %v393 = vadd.f32 %v384, %v389
      %v394 = vadd.f32 %v385, %v389
      %v395 = vadd.f32 %v386, %v389
      %v396 = vadd.f32 %v387, %v389
      %v397 = vadd.f32 %v388, %v389
      %v398 = vpack.c.bf16 %v390, %v390
      %v399 = vpack.c.bf16 %v391, %v391
      %v400 = vpack.c.bf16 %v392, %v392
      %v401 = vpack.c.bf16 %v393, %v393
      %v402 = vpack.c.bf16 %v394, %v394
      %v403 = vpack.c.bf16 %v395, %v395
      %v404 = vpack.c.bf16 %v396, %v396
      %v405 = vpack.c.bf16 %v397, %v397
      %v406 = vunpack.c.l.bf16 %v398
      %v407 = vunpack.c.l.bf16 %v399
      %v408 = vunpack.c.l.bf16 %v400
      %v409 = vunpack.c.l.bf16 %v401
      %v410 = vunpack.c.l.bf16 %v402
      %v411 = vunpack.c.l.bf16 %v403
      %v412 = vunpack.c.l.bf16 %v404
      %v413 = vunpack.c.l.bf16 %v405
      %v414 = vtanh.pop %v406
      %v415 = vtanh.pop %v407
      %v416 = vtanh.pop %v408
      %v417 = vtanh.pop %v409
      %v418 = vtanh.pop %v410
      %v419 = vtanh.pop %v411
      %v420 = vtanh.pop %v412
      %v421 = vtanh.pop %v413
      %v422 = vpack.c.bf16 %v414, %v414
      %v423 = vpack.c.bf16 %v415, %v415
      %v424 = vpack.c.bf16 %v416, %v416
      %v425 = vpack.c.bf16 %v417, %v417
      %v426 = vpack.c.bf16 %v418, %v418
      %v427 = vpack.c.bf16 %v419, %v419
      %v428 = vpack.c.bf16 %v420, %v420
      %v429 = vpack.c.bf16 %v421, %v421
      %v438 = vrot.slane %v422, 3
      %v439 = vrot.slane %v423, 3
      %v440 = vrot.slane %v424, 3
      %v441 = vrot.slane %v425, 3
      %v442 = vrot.slane %v426, 3
      %v443 = vrot.slane %v427, 3
      %v444 = vrot.slane %v428, 3
      %v445 = vrot.slane %v429, 3
      %v448 = vsel %vm308, %v422, %v438
      %v449 = vsel %vm313, %v422, %v438
      %v451 = vrot.slane %v449, 1
      %v452 = vsel %vm317, %v422, %v438
      %v454 = vrot.slane %v452, 2
      %v457 = vsel %vm308, %v423, %v439
      %v458 = vsel %vm313, %v423, %v439
      %v460 = vrot.slane %v458, 1
      %v461 = vsel %vm317, %v423, %v439
      %v463 = vrot.slane %v461, 2
      %v466 = vsel %vm308, %v424, %v440
      %v467 = vsel %vm313, %v424, %v440
      %v469 = vrot.slane %v467, 1
      %v470 = vsel %vm317, %v424, %v440
      %v472 = vrot.slane %v470, 2
      %v475 = vsel %vm308, %v425, %v441
      %v476 = vsel %vm313, %v425, %v441
      %v478 = vrot.slane %v476, 1
      %v479 = vsel %vm317, %v425, %v441
      %v481 = vrot.slane %v479, 2
      %v484 = vsel %vm308, %v426, %v442
      %v485 = vsel %vm313, %v426, %v442
      %v487 = vrot.slane %v485, 1
      %v488 = vsel %vm317, %v426, %v442
      %v490 = vrot.slane %v488, 2
      %v493 = vsel %vm308, %v427, %v443
      %v494 = vsel %vm313, %v427, %v443
      %v496 = vrot.slane %v494, 1
      %v497 = vsel %vm317, %v427, %v443
      %v499 = vrot.slane %v497, 2
      %v502 = vsel %vm308, %v428, %v444
      %v503 = vsel %vm313, %v428, %v444
      %v505 = vrot.slane %v503, 1
      %v506 = vsel %vm317, %v428, %v444
      %v508 = vrot.slane %v506, 2
      %v511 = vsel %vm308, %v429, %v445
      %v512 = vsel %vm313, %v429, %v445
      %v514 = vrot.slane %v512, 1
      %v515 = vsel %vm317, %v429, %v445
      %v517 = vrot.slane %v515, 2
      %518 = vst [vmem:[#allocation1] ss:$9 sm:$0xff] %v448
      %s520 = scalar_lea.vmem [#allocation1], 1
      %521 = vst [vmem:[%s520] ss:$9 sm:$0xff] %v451
      %s523 = scalar_lea.vmem [#allocation1], 2
      %524 = vst [vmem:[%s523] ss:$9 sm:$0xff] %v454
      %s525 = scalar_lea.vmem [#allocation1], 3
      %526 = vst [vmem:[%s525] ss:$9 sm:$0xff] %v457
      %s528 = scalar_lea.vmem [#allocation1], 4
      %529 = vst [vmem:[%s528] ss:$9 sm:$0xff] %v460
      %s531 = scalar_lea.vmem [#allocation1], 5
      %532 = vst [vmem:[%s531] ss:$9 sm:$0xff] %v463
      %s533 = scalar_lea.vmem [#allocation1], 6
      %534 = vst [vmem:[%s533] ss:$9 sm:$0xff] %v466
      %s536 = scalar_lea.vmem [#allocation1], 7
      %537 = vst [vmem:[%s536] ss:$9 sm:$0xff] %v469
      %v538 = vld [vmem:[#allocation1] sm:$0xff]
      %540 = vst [vmem:[#allocation1] ss:$9 sm:$0xff] %v472
      %541 = vst [vmem:[%s520] ss:$9 sm:$0xff] %v475
      %543 = vst [vmem:[%s523] ss:$9 sm:$0xff] %v478
      %545 = vst [vmem:[%s525] ss:$9 sm:$0xff] %v481
      %546 = vst [vmem:[%s528] ss:$9 sm:$0xff] %v484
      %548 = vst [vmem:[%s531] ss:$9 sm:$0xff] %v487
      %550 = vst [vmem:[%s533] ss:$9 sm:$0xff] %v490
      %551 = vst [vmem:[%s536] ss:$9 sm:$0xff] %v493
      %v552 = vld [vmem:[#allocation1] sm:$0xff]
      %554 = vst [vmem:[#allocation1] ss:$9 sm:$0xff] %v496
      %556 = vst [vmem:[%s520] ss:$9 sm:$0xff] %v499
      %557 = vst [vmem:[%s523] ss:$9 sm:$0xff] %v502
      %559 = vst [vmem:[%s525] ss:$9 sm:$0xff] %v505
      %561 = vst [vmem:[%s528] ss:$9 sm:$0xff] %v508
      %562 = vst [vmem:[%s531] ss:$9 sm:$0xff] %v511
      %564 = vst [vmem:[%s533] ss:$9 sm:$0xff] %v514
      %566 = vst [vmem:[%s536] ss:$9 sm:$0xff] %v517
      %v567 = vld [vmem:[#allocation1] sm:$0xff]
      %v570 = vunpack.c.l.b16 %v304
      %v571 = vunpack.c.l.b16 %v305
      %v572 = vpack.c.b16 %v571, %v570
      %vm574 = vcmask 130048
      %v575 = vsel %vm574, %v538, 0
      %v577 = vsel %vm574, %v552, 0
      %v579 = vsel %vm574, %v567, 0
      %581 = vmatpush.bf16.msra.mxu0 0
      %582 = vmatpush.bf16.msra.mxu0 0
      %583 = vmatpush.bf16.msra.mxu0 0
      %584 = vmatpush.bf16.msra.mxu0 0
      %585 = vmatpush.bf16.msra.mxu0 0
      %586 = vmatpush.bf16.msra.mxu0 0
      %587 = vmatpush.bf16.msra.mxu0 0
      %588 = vmatpush.bf16.msra.mxu0 %v572
      %589 = vmatmul.bf16.gmra.mxu0 %v575
      %v590 = vpop.f32.mrf.mxu0
      %v591 = vadd.f32 0.0, %v590
      %v592 = vpop.f32.mrf.mxu0
      %v593 = vadd.f32 0.0, %v592
      %594 = vmatmul.bf16.gmra.mxu0 %v577
      %v595 = vpop.f32.mrf.mxu0
      %v596 = vadd.f32 0.0, %v595
      %v597 = vpop.f32.mrf.mxu0
      %v598 = vadd.f32 0.0, %v597
      %599 = vmatmul.bf16.gmra.mxu0 %v579
      %v600 = vpop.f32.mrf.mxu0
      %v601 = vadd.f32 0.0, %v600
      %v602 = vpop.f32.mrf.mxu0
      %v603 = vadd.f32 0.0, %v602
      %604 = vdwg.mxu0
      %v611 = vrot.slane %v591, 2
      %v612 = vrot.slane %v591, 4
      %v613 = vrot.slane %v591, 6
      %v614 = vrot.slane %v593, 2
      %v615 = vrot.slane %v593, 4
      %v616 = vrot.slane %v593, 6
      %v617 = vrot.slane %v596, 2
      %v618 = vrot.slane %v596, 4
      %v619 = vrot.slane %v596, 6
      %v620 = vrot.slane %v598, 2
      %v621 = vrot.slane %v598, 4
      %v622 = vrot.slane %v598, 6
      %v623 = vrot.slane %v601, 2
      %v624 = vrot.slane %v601, 4
      %v625 = vrot.slane %v601, 6
      %v626 = vrot.slane %v603, 2
      %v627 = vrot.slane %v603, 4
      %v628 = vrot.slane %v603, 6
      %v629 = vld [vmem:[%s286] sm:$0x1]
      %vm630 = vcmp.gt.f32.partialorder %v629, 0.0
      %v631 = vsel %vm630, 1, 0
      %v632 = vperm.slane %v631, 0
      %vm633 = vcmp.eq.s32.totalorder %v632, 1
      %634 = vst [vmem:[#allocation1] ss:$4 sm:$0xff] %v591
      %s635 = scalar_lea.vmem [#allocation1], 1
      %636 = vst [vmem:[%s635] ss:$4 sm:$0xff] %v611
      %s637 = scalar_lea.vmem [#allocation1], 2
      %638 = vst [vmem:[%s637] ss:$4 sm:$0xff] %v612
      %v639 = vld.sshfl [vmem:[#allocation1] sm:$0xff pattern:$0x73625140]
      %s640 = scalar_lea.vmem [#allocation1], 32
      %641 = vst [vmem:[%s640] ss:$4 sm:$0xff] %v613
      %s642 = scalar_lea.vmem [#allocation1], 33
      %643 = vst [vmem:[%s642] ss:$4 sm:$0xff] %v593
      %s644 = scalar_lea.vmem [#allocation1], 34
      %645 = vst [vmem:[%s644] ss:$4 sm:$0xff] %v614
      %v646 = vld.sshfl [vmem:[#allocation1 + $0x20] sm:$0xff pattern:$0x73625140]
      %647 = vst [vmem:[#allocation1] ss:$4 sm:$0xff] %v615
      %648 = vst [vmem:[%s635] ss:$4 sm:$0xff] %v616
      %649 = vst [vmem:[%s637] ss:$4 sm:$0xff] %v596
      %v650 = vld.sshfl [vmem:[#allocation1] sm:$0xff pattern:$0x73625140]
      %651 = vst [vmem:[%s640] ss:$4 sm:$0xff] %v617
      %652 = vst [vmem:[%s642] ss:$4 sm:$0xff] %v618
      %653 = vst [vmem:[%s644] ss:$4 sm:$0xff] %v619
      %v654 = vld.sshfl [vmem:[#allocation1 + $0x20] sm:$0xff pattern:$0x73625140]
      %655 = vst [vmem:[#allocation1] ss:$4 sm:$0xff] %v598
      %656 = vst [vmem:[%s635] ss:$4 sm:$0xff] %v620
      %657 = vst [vmem:[%s637] ss:$4 sm:$0xff] %v621
      %v658 = vld.sshfl [vmem:[#allocation1] sm:$0xff pattern:$0x73625140]
      %659 = vst [vmem:[%s640] ss:$4 sm:$0xff] %v622
      %660 = vst [vmem:[%s642] ss:$4 sm:$0xff] %v601
      %661 = vst [vmem:[%s644] ss:$4 sm:$0xff] %v623
      %v662 = vld.sshfl [vmem:[#allocation1 + $0x20] sm:$0xff pattern:$0x73625140]
      %663 = vst [vmem:[#allocation1] ss:$4 sm:$0xff] %v624
      %664 = vst [vmem:[%s635] ss:$4 sm:$0xff] %v625
      %665 = vst [vmem:[%s637] ss:$4 sm:$0xff] %v603
      %v666 = vld.sshfl [vmem:[#allocation1] sm:$0xff pattern:$0x73625140]
      %667 = vst [vmem:[%s640] ss:$4 sm:$0xff] %v626
      %668 = vst [vmem:[%s642] ss:$4 sm:$0xff] %v627
      %669 = vst [vmem:[%s644] ss:$4 sm:$0xff] %v628
      %v670 = vld.sshfl [vmem:[#allocation1 + $0x20] sm:$0xff pattern:$0x73625140]
      %671 = vset.pattern.permute.xlu0 0
      %672 = vperm.xlu0 %671, %v639
      %v673 = vpop.permute.xlu0 %672
      %674 = vset.pattern.permute.xlu0 0
      %675 = vperm.xlu0 %674, %v646
      %v676 = vpop.permute.xlu0 %675
      %677 = vset.pattern.permute.xlu0 0
      %678 = vperm.xlu0 %677, %v650
      %v679 = vpop.permute.xlu0 %678
      %680 = vset.pattern.permute.xlu0 0
      %681 = vperm.xlu0 %680, %v654
      %v682 = vpop.permute.xlu0 %681
      %683 = vset.pattern.permute.xlu0 0
      %684 = vperm.xlu0 %683, %v658
      %v685 = vpop.permute.xlu0 %684
      %686 = vset.pattern.permute.xlu0 0
      %687 = vperm.xlu0 %686, %v662
      %v688 = vpop.permute.xlu0 %687
      %689 = vset.pattern.permute.xlu0 0
      %690 = vperm.xlu0 %689, %v666
      %v691 = vpop.permute.xlu0 %690
      %692 = vset.pattern.permute.xlu0 0
      %693 = vperm.xlu0 %692, %v670
      %v694 = vpop.permute.xlu0 %693
      %v695 = vlaneseq
      %v696 = vand.u32 %v695, 127
      %v697 = vperm.slane %v673, %v696
      %v698 = vperm.slane %v676, %v696
      %v699 = vperm.slane %v679, %v696
      %v700 = vperm.slane %v682, %v696
      %v701 = vperm.slane %v685, %v696
      %v702 = vperm.slane %v688, %v696
      %v703 = vperm.slane %v691, %v696
      %v704 = vperm.slane %v694, %v696
      %v705 = vsel %vm313, %v698, %v697
      %v706 = vsel %vm317, %v699, %v705
      %v707 = vsel %vm321, %v700, %v706
      %vm708 = vcmask 1044484
      %v709 = vsel %vm708, %v701, %v707
      %vm710 = vcmask 1045509
      %v711 = vsel %vm710, %v702, %v709
      %vm712 = vcmask 1046534
      %v713 = vsel %vm712, %v703, %v711
      %vm714 = vcmask 1047559
      %v715 = vsel %vm714, %v704, %v713
      %v717 = vsel %vm633, -1e+30, %v715
      %vm718 = vcmask 48128
      %v719 = vsel %vm718, %v717, -inf
      %720 = vmax.xlane.f32.xlu0 %v719
      %v721 = vpop.xlane.xlu0 %720
      %v722 = vsub.f32 %v717, %v721
      %v723 = vmul.f32 %v722, 1.442695
      %v724 = vpow.pop %v723
      %v725 = vsel %vm718, %v724, 0.0
      %726 = vadd.xlane.f32.xlu0 %v725
      %v727 = vpop.xlane.xlu0 %726
      %v728 = vrcp.pop %v727
      %v729 = vmul.f32 %v724, %v728
      %v730 = vpack.c.bf16 %v729, %v729
      %v732 = vunpack.c.l.b16 %v303
      %v733 = vpack.c.b16 %v732, %v732
      %734 = vrot.lane.b32.xlu0 %v733, 112
      %v735 = vpop.permute.xlu0 %734
      %v737 = vsel %vm718, %v730, 0
      %vm739 = vcmask 1042432
      %v741 = vsel %vm739, %v735, 0
      %743 = vmatpush.bf16.msra.mxu0 0
      %744 = vmatpush.bf16.msra.mxu0 0
      %745 = vmatpush.bf16.msra.mxu0 0
      %746 = vmatpush.bf16.msra.mxu0 0
      %747 = vmatpush.bf16.msra.mxu0 0
      %748 = vmatpush.bf16.msra.mxu0 0
      %749 = vmatpush.bf16.msra.mxu0 0
      %750 = vmatpush.bf16.msra.mxu0 %v741
      %751 = vmatmul.bf16.gmra.mxu0 %v737
      %v752 = vpop.f32.mrf.mxu0
      %v753 = vadd.f32 0.0, %v752
      %v754 = vpop.f32.mrf.mxu0
      %755 = vdwg.mxu0
      %v756 = vpack.c.bf16 %v753, %v753
      %vm757 = vcmask 125952
      %758 = vst.msk [vmem:[%s293] sm:$0xf] %vm757, %v756
      %759 = vst.msk [vmem:[%s300] sm:$0xff] %vm718, %v729
      %p760 = scmp.lt.s32.totalorder %s21, 1
      %s761 = scalar_select %p760, %s21, 1
      %p762 = scmp.lt.s32.totalorder %s22, 0
      %s763 = scalar_select %p762, %s22, 0
      %s764 = sadd.s32 %s763, %s761
      %s765 = smul.addr %s764, 4
      %s766 = scalar_lea.vmem %s4, %s765
      %p767 = scmp.lt.s32.totalorder %s21, 1
      %s768 = scalar_select %p767, %s21, 1
      %p769 = scmp.lt.s32.totalorder %s22, 0
      %s770 = scalar_select %p769, %s22, 0
      %s771 = sadd.s32 %s770, %s768
      %s772 = smul.addr %s771, 8
      %s773 = scalar_lea.vmem %s5, %s772
      // Predicated region
      $region37: #{ar_step_forward.12} parent=35 // pred_check
        %p774 = pneg %p150
      $region38: #{ar_step_forward.12} parent=35 // pred_check_branch
        %776 = sbr.rel (%p774) target = $region40
      $region39: #{ar_step_forward.12} parent=35 // pred_region
        _
      $region40: #{ar_step_forward.12} parent=35 // pred_fallthru
        _
      // Predicated region
      $region41: #{ar_step_forward.12} parent=35 // pred_check
        %p777 = pneg %p178
      $region42: #{ar_step_forward.12} parent=35 // pred_check_branch
        %779 = sbr.rel (%p777) target = $region44
      $region43: #{ar_step_forward.12} parent=35 // pred_region
        _
      $region44: #{ar_step_forward.12} parent=35 // pred_fallthru
        _
    $region36: #{ar_step_forward.12} parent=5 // pred_fallthru
      _
    %p780 = scmp.le.s32.totalorder 2, %s12
    // Predicated region
    $region45: #{ar_step_forward.12} parent=5 // pred_check
      %p781 = pneg %p780
    $region46: #{ar_step_forward.12} parent=5 // pred_check_branch
      %783 = sbr.rel (%p781) target = $region48
    $region47: #{ar_step_forward.12} parent=5 // pred_region
      %s784 = ssub.s32 %s12, 2
      // Predicated region
      $region49: #{ar_step_forward.12} parent=47 // pred_check
        %p785 = pneg %p156
      $region50: #{ar_step_forward.12} parent=47 // pred_check_branch
        %787 = sbr.rel (%p785) target = $region52
      $region51: #{ar_step_forward.12} parent=47 // pred_region
        %p788 = scmp.lt.s32.totalorder %s23, 1
        %s789 = scalar_select %p788, %s23, 1
        %p790 = scmp.lt.s32.totalorder %s24, 0
        %s791 = scalar_select %p790, %s24, 0
        %s792 = sadd.s32 %s791, %s789
        %s793 = smul.addr %s792, 4
        %s794 = scalar_lea.vmem %s4, %s793
      $region52: #{ar_step_forward.12} parent=47 // pred_fallthru
        _
      // Predicated region
      $region53: #{ar_step_forward.12} parent=47 // pred_check
        %p795 = pneg %p184
      $region54: #{ar_step_forward.12} parent=47 // pred_check_branch
        %797 = sbr.rel (%p795) target = $region56
      $region55: #{ar_step_forward.12} parent=47 // pred_region
        %p798 = scmp.lt.s32.totalorder %s23, 1
        %s799 = scalar_select %p798, %s23, 1
        %p800 = scmp.lt.s32.totalorder %s24, 0
        %s801 = scalar_select %p800, %s24, 0
        %s802 = sadd.s32 %s801, %s799
        %s803 = smul.addr %s802, 8
        %s804 = scalar_lea.vmem %s5, %s803
      $region56: #{ar_step_forward.12} parent=47 // pred_fallthru
        _
    $region48: #{ar_step_forward.12} parent=5 // pred_fallthru
      _
  $region6: #{ar_step_forward.12} parent=0 // loop_footer
    %s16 = sadd.s32 1, %s12
  $region7: #{ar_step_forward.12} parent=0 // loop_footer_branch
    %11 = sbr.rel target = $region3
  $region8: #{ar_step_forward.12} parent=0 // loop_exit
    _

// kernel: ar_step_forward.15
$region0: #{ar_step_forward.15}
  #allocation0 [shape = 'u32[]', space=smem, size = 0x4, offset = 0x4, fixed_abs, tag = 'smem constant byte address 0x4 - core index']
  #allocation1 [shape = 'u32[72,128]{1,0:T(1,128)}', space=vmem, size = 0x9000, scoped, tag = 'internal scratch']
  %s0 = inlined_call_operand.vmem [shape: bf16[16,32], index: 0, kind: input, shape index: {}]
  %s1 = inlined_call_operand.vmem [shape: f32[16,8], index: 1, kind: input, shape index: {}]
  %s2 = inlined_call_operand.vmem [shape: bf16[32,32], index: 2, kind: input, shape index: {}]
  %s3 = inlined_call_operand.vmem [shape: f32[1,32], index: 3, kind: input, shape index: {}]
  %s4 = inlined_call_operand.vmem [shape: bf16[32,32], index: 4, kind: input, shape index: {}]
  %s5 = inlined_call_operand.vmem [shape: f32[1,32], index: 5, kind: input, shape index: {}]
  %s6 = inlined_call_operand.vmem [shape: bf16[32,16], index: 6, kind: input, shape index: {}]
  %s7 = inlined_call_operand.vmem [shape: f32[1,16], index: 7, kind: input, shape index: {}]
  %s8 = inlined_call_operand.vmem [shape: f32[16,16], index: 8, kind: output, shape index: {}]
  %s9 = sld [smem:[#allocation0]]
  $region42: #{ar_step_forward.15} parent=0
    _
  %s11 = ssub.s32 1, %s9
  %s12 = scalar_select 0, %s11, %s9
  // Predicated region
  $region2: #{ar_step_forward.15} parent=0 // pred_check
    _
  $region3: #{ar_step_forward.15} parent=0 // pred_check_branch
    %14 = sbr.rel (0) target = $region5
  $region4: #{ar_step_forward.15} parent=0 // pred_region
    _
  $region5: #{ar_step_forward.15} parent=0 // pred_fallthru
    _
  // Predicated region
  $region6: #{ar_step_forward.15} parent=0 // pred_check
    _
  $region7: #{ar_step_forward.15} parent=0 // pred_check_branch
    %16 = sbr.rel (0) target = $region9
  $region8: #{ar_step_forward.15} parent=0 // pred_region
    _
  $region9: #{ar_step_forward.15} parent=0 // pred_fallthru
    _
  // Predicated region
  $region10: #{ar_step_forward.15} parent=0 // pred_check
    _
  $region11: #{ar_step_forward.15} parent=0 // pred_check_branch
    %18 = sbr.rel (0) target = $region13
  $region12: #{ar_step_forward.15} parent=0 // pred_region
    _
  $region13: #{ar_step_forward.15} parent=0 // pred_fallthru
    _
  // Predicated region
  $region14: #{ar_step_forward.15} parent=0 // pred_check
    _
  $region15: #{ar_step_forward.15} parent=0 // pred_check_branch
    %20 = sbr.rel (0) target = $region17
  $region16: #{ar_step_forward.15} parent=0 // pred_region
    _
  $region17: #{ar_step_forward.15} parent=0 // pred_fallthru
    _
  // Predicated region
  $region18: #{ar_step_forward.15} parent=0 // pred_check
    _
  $region19: #{ar_step_forward.15} parent=0 // pred_check_branch
    %22 = sbr.rel (0) target = $region21
  $region20: #{ar_step_forward.15} parent=0 // pred_region
    _
  $region21: #{ar_step_forward.15} parent=0 // pred_fallthru
    _
  // Predicated region
  $region22: #{ar_step_forward.15} parent=0 // pred_check
    _
  $region23: #{ar_step_forward.15} parent=0 // pred_check_branch
    %24 = sbr.rel (0) target = $region25
  $region24: #{ar_step_forward.15} parent=0 // pred_region
    _
  $region25: #{ar_step_forward.15} parent=0 // pred_fallthru
    _
  // Predicated region
  $region26: #{ar_step_forward.15} parent=0 // pred_check
    _
  $region27: #{ar_step_forward.15} parent=0 // pred_check_branch
    %26 = sbr.rel (0) target = $region29
  $region28: #{ar_step_forward.15} parent=0 // pred_region
    _
  $region29: #{ar_step_forward.15} parent=0 // pred_fallthru
    _
  // Predicated region
  $region30: #{ar_step_forward.15} parent=0 // pred_check
    _
  $region31: #{ar_step_forward.15} parent=0 // pred_check_branch
    %28 = sbr.rel (0) target = $region33
  $region32: #{ar_step_forward.15} parent=0 // pred_region
    _
  $region33: #{ar_step_forward.15} parent=0 // pred_fallthru
    _
  %v30 = vld [vmem:[%s0] sm:$0xf]
  %v31 = vld [vmem:[%s0 + $0x4] sm:$0xf]
  %v32 = vld [vmem:[%s2] sm:$0xf]
  %v33 = vld [vmem:[%s2 + $0x4] sm:$0xf]
  %v34 = vld [vmem:[%s2 + $0x8] sm:$0xf]
  %v35 = vld [vmem:[%s2 + $0xc] sm:$0xf]
  %v36 = vld [vmem:[%s3] sm:$0x1]
  %v38 = vperm.slane %v36, 0
  %v42 = vunpack.c.l.b16 %v30
  %v43 = vunpack.c.l.b16 %v31
  %v44 = vpack.c.b16 %v43, %v42
  %v49 = vunpack.c.l.b16 %v32
  %v50 = vunpack.c.l.b16 %v33
  %v51 = vunpack.c.l.b16 %v34
  %v52 = vunpack.c.l.b16 %v35
  %v53 = vpack.c.b16 %v50, %v49
  %v54 = vpack.c.b16 %v52, %v51
  %vm57 = vcmask 261120
  %v59 = vsel %vm57, %v44, 0
  %61 = vmatpush.bf16.msra.mxu0 0
  %62 = vmatpush.bf16.msra.mxu0 0
  %63 = vmatpush.bf16.msra.mxu0 0
  %64 = vmatpush.bf16.msra.mxu0 0
  %65 = vmatpush.bf16.msra.mxu0 0
  %66 = vmatpush.bf16.msra.mxu0 0
  %67 = vmatpush.bf16.msra.mxu0 %v54
  %68 = vmatpush.bf16.msra.mxu0 %v53
  %69 = vmatmul.bf16.gmra.mxu0 %v59
  %v70 = vpop.f32.mrf.mxu0
  %v71 = vadd.f32 %v38, %v70
  %v72 = vpop.f32.mrf.mxu0
  %v73 = vadd.f32 %v38, %v72
  %74 = vdwg.mxu0
  %v75 = vtanh.pop %v71
  %v76 = vtanh.pop %v73
  %v77 = vpack.c.bf16 %v76, %v75
  %v78 = vld [vmem:[%s4] sm:$0xf]
  %v79 = vld [vmem:[%s4 + $0x4] sm:$0xf]
  %v80 = vld [vmem:[%s4 + $0x8] sm:$0xf]
  %v81 = vld [vmem:[%s4 + $0xc] sm:$0xf]
  %v82 = vld [vmem:[%s5] sm:$0x1]
  %v84 = vperm.slane %v82, 0
  %v90 = vunpack.c.l.b16 %v78
  %v91 = vunpack.c.l.b16 %v79
  %v92 = vunpack.c.l.b16 %v80
  %v93 = vunpack.c.l.b16 %v81
  %v94 = vpack.c.b16 %v91, %v90
  %v95 = vpack.c.b16 %v93, %v92
  %v99 = vsel %vm57, %v77, 0
  %101 = vmatpush.bf16.msra.mxu0 0
  %102 = vmatpush.bf16.msra.mxu0 0
  %103 = vmatpush.bf16.msra.mxu0 0
  %104 = vmatpush.bf16.msra.mxu0 0
  %105 = vmatpush.bf16.msra.mxu0 0
  %106 = vmatpush.bf16.msra.mxu0 0
  %107 = vmatpush.bf16.msra.mxu0 %v95
  %108 = vmatpush.bf16.msra.mxu0 %v94
  %109 = vmatmul.bf16.gmra.mxu0 %v99
  %v110 = vpop.f32.mrf.mxu0
  %v111 = vadd.f32 %v84, %v110
  %v112 = vpop.f32.mrf.mxu0
  %v113 = vadd.f32 %v84, %v112
  %114 = vdwg.mxu0
  %v115 = vtanh.pop %v111
  %v116 = vtanh.pop %v113
  %v117 = vpack.c.bf16 %v116, %v115
  %v118 = vld [vmem:[%s6] sm:$0xf]
  %v119 = vld [vmem:[%s6 + $0x4] sm:$0xf]
  %v120 = vld [vmem:[%s6 + $0x8] sm:$0xf]
  %v121 = vld [vmem:[%s6 + $0xc] sm:$0xf]
  %v122 = vld [vmem:[%s7] sm:$0x1]
  %v124 = vperm.slane %v122, 0
  %v130 = vunpack.c.l.b16 %v118
  %v131 = vunpack.c.l.b16 %v119
  %v132 = vunpack.c.l.b16 %v120
  %v133 = vunpack.c.l.b16 %v121
  %v134 = vpack.c.b16 %v131, %v130
  %v135 = vpack.c.b16 %v133, %v132
  %v139 = vsel %vm57, %v117, 0
  %141 = vmatpush.bf16.msra.mxu0 0
  %142 = vmatpush.bf16.msra.mxu0 0
  %143 = vmatpush.bf16.msra.mxu0 0
  %144 = vmatpush.bf16.msra.mxu0 0
  %145 = vmatpush.bf16.msra.mxu0 0
  %146 = vmatpush.bf16.msra.mxu0 0
  %147 = vmatpush.bf16.msra.mxu0 %v135
  %148 = vmatpush.bf16.msra.mxu0 %v134
  %149 = vmatmul.bf16.gmra.mxu0 %v139
  %v150 = vpop.f32.mrf.mxu0
  %v151 = vadd.f32 %v124, %v150
  %v152 = vpop.f32.mrf.mxu0
  %v153 = vadd.f32 %v124, %v152
  %154 = vdwg.mxu0
  %v155 = vmul.f32 %v151, 1.442695
  %v156 = vpow.pop %v155
  %v157 = vmul.f32 %v153, 1.442695
  %v158 = vpow.pop %v157
  %v159 = vld [vmem:[%s1] sm:$0xff]
  %v160 = vld [vmem:[%s1 + $0x8] sm:$0xff]
  %v161 = vmul.f32 %v156, %v159
  %v162 = vmul.f32 %v158, %v160
  %165 = vrot.lane.b32.xlu0 %v151, 120
  %v166 = vpop.permute.xlu0 %165
  %167 = vrot.lane.b32.xlu0 %v153, 120
  %v168 = vpop.permute.xlu0 %167
  %v171 = vadd.f32 %v161, %v166
  %v172 = vadd.f32 %v162, %v168
  %173 = vrot.lane.b32.xlu0 %v151, 8
  %v174 = vpop.permute.xlu0 %173
  %175 = vrot.lane.b32.xlu0 %v153, 8
  %v176 = vpop.permute.xlu0 %175
  %vm179 = vcmask 64512
  %v180 = vsel %vm179, %v171, %v174
  %v181 = vsel %vm179, %v172, %v176
  %vm182 = vcmask 130048
  %183 = vst.msk [vmem:[%s8] sm:$0xff] %vm182, %v180
  %184 = vst.msk [vmem:[%s8 + $0x8] sm:$0xff] %vm182, %v181
  // Predicated region
  $region34: #{ar_step_forward.15} parent=0 // pred_check
    _
  $region35: #{ar_step_forward.15} parent=0 // pred_check_branch
    %186 = sbr.rel (0) target = $region37
  $region36: #{ar_step_forward.15} parent=0 // pred_region
    _
  $region37: #{ar_step_forward.15} parent=0 // pred_fallthru
    _
  // Predicated region
  $region38: #{ar_step_forward.15} parent=0 // pred_check
    _
  $region39: #{ar_step_forward.15} parent=0 // pred_check_branch
    %188 = sbr.rel (0) target = $region41
  $region40: #{ar_step_forward.15} parent=0 // pred_region
    _
  $region41: #{ar_step_forward.15} parent=0 // pred_fallthru
    _

</llo_original>
